<compile_context>
chip_gen: v6e
topology: v6e:2x2x1
jax: 0.10.0
libtpu: 0.0.40
codegen_flags: <defaults>
</compile_context>

<pallas_src>
import functools

import jax
import jax.numpy as jnp
from jax.experimental import pallas as pl
from jax.experimental.pallas import tpu as pltpu


VMEM_LIMIT = 32 * 1024 * 1024  # well below physical VMEM on v5e / v6e / v7x


# ----------------------------- Pallas kernels -------------------------------


def conv_stack_kernel(a1_ref, w1_ref, t1_ref, w2_ref, t2_ref, sel_ref,
                      o_ref, s1_ref, s2_ref):
    """Fused layer1 + layer2 for one sample.

    a1_ref : (1, 4, 196, 9) bf16  conv1 pooled-phase im2col patches
    w1_ref : (9, 32)        bf16  conv1 weights (BN1 scale folded)
    t1_ref : (1, 32)        f32   folded BN1 shift (incl. conv bias)
    w2_ref : (9, 32, 64)    bf16  conv2 per-tap weights (BN2 scale folded)
    t2_ref : (1, 64)        f32   folded BN2 shift
    sel_ref: (36, 151)      f32   one-hot pooled-row selection matrix
    o_ref  : (1, 36, 64)    f32   layer2 output, rows = pooled (py*6+px)
    s1_ref : (200, 32)      f32   scratch: h1 (196 rows) + 4 zeroed guard rows
    s2_ref : (168, 64)      f32   scratch: widened (12x14) conv2 pre-pool result
    """
    # ---- layer1: conv(1->32, k3, pad1) + BN + ReLU + 2x2/2 maxpool ----------
    # 4 pool-phase GEMMs, max-reduced in-register; shift+ReLU hoisted after max.
    w1 = w1_ref[...]
    acc1 = None
    for p in range(4):  # static unroll over the 2x2 pool window phases
        y = jnp.dot(a1_ref[0, p, :, :], w1, preferred_element_type=jnp.float32)
        acc1 = y if acc1 is None else jnp.maximum(acc1, y)        # (196, 32)
    h1 = jnp.maximum(acc1 + t1_ref[...], 0.0)                     # BN shift + ReLU
    s1_ref[0:196, :] = h1
    # zero the guard rows touched by the widened conv2 slices (keeps acc2 finite)
    s1_ref[196:200, :] = jnp.zeros((4, 32), jnp.float32)

    # ---- layer2 conv(32->64, k3, valid), im2col done in-kernel ---------------
    # Widened output grid (12 rows x 14 cols): for tap (dy,dx) the needed h1 rows
    # are one contiguous 168-row slice starting at dy*14+dx.  Columns 12,13 of the
    # widened grid are junk and are never selected by the pooling below.
    acc2 = None
    for dy in range(3):
        for dx in range(3):
            base = dy * 14 + dx
            lhs = s1_ref[base:base + 168, :].astype(jnp.bfloat16)  # (168, 32)
            part = jnp.dot(lhs, w2_ref[dy * 3 + dx, :, :],
                           preferred_element_type=jnp.float32)     # (168, 64)
            acc2 = part if acc2 is None else acc2 + part
    s2_ref[...] = acc2

    # ---- 2x2/2 maxpool on the widened grid + BN shift + ReLU -----------------
    # m4[q] = max of the 2x2 window anchored at flat index q (q = y*14 + x).
    m4 = jnp.maximum(jnp.maximum(s2_ref[0:151, :], s2_ref[1:152, :]),
                     jnp.maximum(s2_ref[14:165, :], s2_ref[15:166, :]))
    # pooled[py*6+px] = m4[28*py + 2*px]  via a one-hot selection GEMM.
    pooled = jnp.dot(sel_ref[...], m4, preferred_element_type=jnp.float32)
    o_ref[0, :, :] = jnp.maximum(pooled + t2_ref[...], 0.0).astype(o_ref.dtype)


def fc_kernel(a_ref, w_ref, t_ref, o_ref):
    # a_ref: (tm, K) f32, w_ref: (K, N) bf16, t_ref: (1, N) f32, o_ref: (tm, N)
    acc = jnp.dot(a_ref[...].astype(jnp.bfloat16), w_ref[...],
                  preferred_element_type=jnp.float32)
    o_ref[...] = (acc + t_ref[...]).astype(o_ref.dtype)


# ----------------------------- kernel wrappers -------------------------------


def conv_stack(a1, w1, t1, w2, t2, sel):
    # a1: (N, 4, 196, 9) bf16 -> (N, 36, 64) f32 (layer2 output, pooled-row major)
    N = a1.shape[0]
    assert a1.shape[1:] == (4, 196, 9), a1.shape
    return pl.pallas_call(
        conv_stack_kernel,
        out_shape=jax.ShapeDtypeStruct((N, 36, 64), jnp.float32),
        grid=(N,),
        in_specs=[
            pl.BlockSpec((1, 4, 196, 9), lambda n: (n, 0, 0, 0)),
            pl.BlockSpec((9, 32), lambda n: (0, 0)),          # VMEM-resident weights
            pl.BlockSpec((1, 32), lambda n: (0, 0)),
            pl.BlockSpec((9, 32, 64), lambda n: (0, 0, 0)),
            pl.BlockSpec((1, 64), lambda n: (0, 0)),
            pl.BlockSpec((36, 151), lambda n: (0, 0)),
        ],
        out_specs=pl.BlockSpec((1, 36, 64), lambda n: (n, 0, 0)),
        scratch_shapes=[
            pltpu.VMEM((200, 32), jnp.float32),   # h1 + zero guard rows
            pltpu.VMEM((168, 64), jnp.float32),   # widened conv2 pre-pool result
        ],
        compiler_params=pltpu.CompilerParams(
            dimension_semantics=("parallel",),    # >=2 steps -> both v7x TCs busy
            vmem_limit_bytes=VMEM_LIMIT,
        ),
    )(a1, w1, t1, w2, t2, sel)


def fc(a, w, t):
    # a: (M, K) f32; w: (K, Nout) bf16, Nout multiple of 128; t: (1, Nout) f32
    M, K = a.shape
    Nout = w.shape[1]
    m_pad = ((M + 7) // 8) * 8
    if m_pad != M:
        a = jnp.pad(a, ((0, m_pad - M), (0, 0)))   # explicit zeros: no garbage rows
    tm = min(128, m_pad)                           # right-sized M tile (tm=8 at N=2)
    out = pl.pallas_call(
        fc_kernel,
        out_shape=jax.ShapeDtypeStruct((m_pad, Nout), jnp.float32),
        grid=(pl.cdiv(m_pad, tm),),
        in_specs=[
            pl.BlockSpec((tm, K), lambda i: (i, 0)),
            pl.BlockSpec((K, Nout), lambda i: (0, 0)),        # VMEM-resident weights
            pl.BlockSpec((1, Nout), lambda i: (0, 0)),
        ],
        out_specs=pl.BlockSpec((tm, Nout), lambda i: (i, 0)),
        compiler_params=pltpu.CompilerParams(
            dimension_semantics=("parallel",),
            vmem_limit_bytes=VMEM_LIMIT,
        ),
    )(a, w, t)
    return out[:M]


# ----------------------------- JAX glue (layout only) ------------------------


def pooled_im2col(x, k):
    """x: (N, Hp, Wp, Cin) already padded. 'valid' kxk conv followed by a 2x2/2
    maxpool -> (N, 4, PH*PW, k*k*Cin) patches, one slab per pool-window phase.
    Feature order is (dy, dx, cin), matching conv_weight_to_gemm."""
    N, Hp, Wp, Cin = x.shape
    OH, OW = Hp - k + 1, Wp - k + 1
    assert OH % 2 == 0 and OW % 2 == 0, "2x2/2 maxpool needs even conv output dims"
    PH, PW = OH // 2, OW // 2
    taps = [x[:, dy:dy + OH, dx:dx + OW, :] for dy in range(k) for dx in range(k)]
    t = jnp.concatenate(taps, axis=-1)                   # (N, OH, OW, k*k*Cin)
    t = t.reshape(N, PH, 2, PW, 2, k * k * Cin)
    t = jnp.transpose(t, (0, 2, 4, 1, 3, 5))             # (N, 2, 2, PH, PW, K)
    return t.reshape(N, 4, PH * PW, k * k * Cin)


def conv_weight_to_gemm(w):
    # (Cout, Cin, KH, KW) -> (KH*KW*Cin, Cout), row order (dy, dx, cin)
    cout, cin, kh, kw = w.shape
    return jnp.transpose(w, (2, 3, 1, 0)).reshape(kh * kw * cin, cout)


# ----------------------------- model ----------------------------------------


def init_params(key, out_dim=10):
    ks = jax.random.split(key, 14)
    eps = 1e-5
    p = {}

    def fold_conv(w_conv, b_conv, gamma, beta, mean, var):
        s = gamma / jnp.sqrt(var + eps)
        wg = conv_weight_to_gemm(w_conv) * s[None, :]      # BN scale folded into W
        t = ((b_conv - mean) * s + beta).reshape(1, -1)    # additive shift only
        return wg, t

    # layer1: Conv2d(1, 32, 3, padding=1) + BatchNorm2d(32)
    w1 = 0.1 * jax.random.normal(ks[0], (32, 1, 3, 3), jnp.float32)
    b1 = 0.05 * jax.random.normal(ks[1], (32,), jnp.float32)
    g1 = 1.0 + 0.1 * jax.random.normal(ks[2], (32,), jnp.float32)
    be1 = 0.1 * jax.random.normal(ks[3], (32,), jnp.float32)
    m1 = 0.1 * jax.random.normal(ks[4], (32,), jnp.float32)
    v1 = 1.0 + 0.1 * jnp.abs(jax.random.normal(ks[5], (32,), jnp.float32))
    wg1, t1 = fold_conv(w1, b1, g1, be1, m1, v1)
    p["w1"] = wg1.astype(jnp.bfloat16)                     # (9, 32)
    p["t1"] = t1                                           # (1, 32) f32

    # layer2: Conv2d(32, 64, 3) + BatchNorm2d(64)
    w2 = 0.05 * jax.random.normal(ks[6], (64, 32, 3, 3), jnp.float32)
    b2 = 0.05 * jax.random.normal(ks[7], (64,), jnp.float32)
    g2 = 1.0 + 0.1 * jax.random.normal(ks[8], (64,), jnp.float32)
    be2 = 0.1 * jax.random.normal(ks[9], (64,), jnp.float32)
    m2 = 0.1 * jax.random.normal(ks[10], (64,), jnp.float32)
    v2 = 1.0 + 0.1 * jnp.abs(jax.random.normal(ks[11], (64,), jnp.float32))
    wg2, t2 = fold_conv(w2, b2, g2, be2, m2, v2)           # (288, 64)
    p["w2"] = wg2.reshape(9, 32, 64).astype(jnp.bfloat16)  # per-tap (32, 64)
    p["t2"] = t2                                           # (1, 64) f32

    # pooled-row selection: pooled[py*6+px] picks widened row 28*py + 2*px
    rows = jnp.arange(36)
    q = 28 * (rows // 6) + 2 * (rows % 6)
    p["sel"] = (jnp.arange(151)[None, :] == q[:, None]).astype(jnp.float32)

    # fc1: Linear(64*6*6, out_dim). Rows re-permuted from PyTorch's (c, h, w)
    # flatten order to our (h*6+w, c) order, then zero-padded to 128 output lanes
    # so the kernel's store is lane-dense; extra columns are sliced off in JAX.
    wf = 0.02 * jax.random.normal(ks[12], (out_dim, 64 * 6 * 6), jnp.float32)
    bf = 0.05 * jax.random.normal(ks[13], (out_dim,), jnp.float32)
    wf_rows = wf.T.reshape(64, 36, out_dim).transpose(1, 0, 2).reshape(2304, out_dim)
    n_pad = 128
    p["wf"] = (jnp.zeros((2304, n_pad), jnp.float32)
               .at[:, :out_dim].set(wf_rows).astype(jnp.bfloat16))
    p["tf"] = jnp.zeros((1, n_pad), jnp.float32).at[0, :out_dim].set(bf)
    return p


def fashion_cnn_forward(x, params, out_dim=10):
    # x: (N, 1, 28, 28) NCHW float32
    N = x.shape[0]
    xh = jnp.transpose(x, (0, 2, 3, 1))                          # (N, 28, 28, 1)
    xp = jnp.pad(xh, ((0, 0), (1, 1), (1, 1), (0, 0))).astype(jnp.bfloat16)

    # conv1 taps (XLA layout prep only); conv1/conv2/pools run in ONE fused kernel.
    a1 = pooled_im2col(xp, 3)                                    # (N, 4, 196, 9)
    h2 = conv_stack(a1, params["w1"], params["t1"],
                    params["w2"], params["t2"], params["sel"])   # (N, 36, 64)

    # fc1: flatten order handled by the pre-permuted weight rows (matches
    # PyTorch's out.view(N, -1) on NCHW exactly); reshape below is a free collapse.
    flat = h2.reshape(N, 36 * 64)                                # (N, 2304)
    out = fc(flat, params["wf"], params["tf"])                   # (N, 128)
    return out[:, :out_dim]                                      # (N, out_dim)


# ----------------------------- main ------------------------------------------

if __name__ == "__main__":
    key = jax.random.PRNGKey(0)
    k_in, k_par = jax.random.split(key)

    # FashionMNIST-style input: spatial size must be 28 (fc1 expects 64*6*6).
    x = jax.random.normal(k_in, (2, 1, 28, 28), jnp.float32)
    params = init_params(k_par, out_dim=10)

    fwd = jax.jit(functools.partial(fashion_cnn_forward, out_dim=10))
    out = jax.block_until_ready(fwd(x, params))
    assert out.shape == (2, 10), out.shape
    print("KERNEL_OK")
</pallas_src>

<mosaic_0001>
module attributes {stable_mosaic.version = 11 : i64} {
  func.func @conv_stack_kernel(%arg0: i32, %arg1: memref<1x4x196x9xbf16, #tpu.memory_space<vmem>>, %arg2: memref<9x32xbf16, #tpu.memory_space<vmem>>, %arg3: memref<1x32xf32, #tpu.memory_space<vmem>>, %arg4: memref<9x32x64xbf16, #tpu.memory_space<vmem>>, %arg5: memref<1x64xf32, #tpu.memory_space<vmem>>, %arg6: memref<36x151xf32, #tpu.memory_space<vmem>>, %arg7: memref<1x36x64xf32, #tpu.memory_space<vmem>>, %arg8: memref<200x32xf32, #tpu.memory_space<vmem>>, %arg9: memref<168x64xf32, #tpu.memory_space<vmem>>) attributes {dimension_semantics = [#tpu.dimension_semantics<parallel>], iteration_bounds = array<i64: 2>, scalar_prefetch = 0 : i64, scratch_operands = 2 : i64, tpu.core_type = #tpu.core_type<tc>, window_params = [{transform_indices = @transform_0, window_bounds = array<i64: 1, 4, 196, 9>}, {pipeline_mode = #tpu.pipeline_mode<synchronous>, transform_indices = @transform_1, window_bounds = array<i64: 9, 32>}, {pipeline_mode = #tpu.pipeline_mode<synchronous>, transform_indices = @transform_2, window_bounds = array<i64: 1, 32>}, {pipeline_mode = #tpu.pipeline_mode<synchronous>, transform_indices = @transform_3, window_bounds = array<i64: 9, 32, 64>}, {pipeline_mode = #tpu.pipeline_mode<synchronous>, transform_indices = @transform_4, window_bounds = array<i64: 1, 64>}, {pipeline_mode = #tpu.pipeline_mode<synchronous>, transform_indices = @transform_5, window_bounds = array<i64: 36, 151>}, {transform_indices = @transform_6, window_bounds = array<i64: 1, 36, 64>}]} {
    %c0 = arith.constant 0 : index
    %c0_0 = arith.constant 0 : index
    %0 = vector.load %arg2[%c0, %c0_0] : memref<9x32xbf16, #tpu.memory_space<vmem>>, vector<9x32xbf16>
    %c0_1 = arith.constant 0 : index
    %c0_2 = arith.constant 0 : index
    %c0_3 = arith.constant 0 : index
    %c0_4 = arith.constant 0 : index
    %1 = vector.load %arg1[%c0_1, %c0_2, %c0_3, %c0_4] : memref<1x4x196x9xbf16, #tpu.memory_space<vmem>>, vector<1x1x196x9xbf16>
    %2 = vector.shape_cast %1 : vector<1x1x196x9xbf16> to vector<196x9xbf16>
    %cst = arith.constant dense<0.000000e+00> : vector<196x32xf32>
    %3 = tpu.matmul %2, %0, %cst {dimension_numbers = #tpu.dot_dimension_numbers<[1], [0], [0], [1], [0, 0, 1, 1], [], []>} : vector<196x9xbf16>, vector<9x32xbf16>, vector<196x32xf32> -> vector<196x32xf32>
    %c0_5 = arith.constant 0 : index
    %c1 = arith.constant 1 : index
    %c0_6 = arith.constant 0 : index
    %c0_7 = arith.constant 0 : index
    %4 = vector.load %arg1[%c0_5, %c1, %c0_6, %c0_7] : memref<1x4x196x9xbf16, #tpu.memory_space<vmem>>, vector<1x1x196x9xbf16>
    %5 = vector.shape_cast %4 : vector<1x1x196x9xbf16> to vector<196x9xbf16>
    %cst_8 = arith.constant dense<0.000000e+00> : vector<196x32xf32>
    %6 = tpu.matmul %5, %0, %cst_8 {dimension_numbers = #tpu.dot_dimension_numbers<[1], [0], [0], [1], [0, 0, 1, 1], [], []>} : vector<196x9xbf16>, vector<9x32xbf16>, vector<196x32xf32> -> vector<196x32xf32>
    %7 = arith.maximumf %3, %6 : vector<196x32xf32>
    %c0_9 = arith.constant 0 : index
    %c2 = arith.constant 2 : index
    %c0_10 = arith.constant 0 : index
    %c0_11 = arith.constant 0 : index
    %8 = vector.load %arg1[%c0_9, %c2, %c0_10, %c0_11] : memref<1x4x196x9xbf16, #tpu.memory_space<vmem>>, vector<1x1x196x9xbf16>
    %9 = vector.shape_cast %8 : vector<1x1x196x9xbf16> to vector<196x9xbf16>
    %cst_12 = arith.constant dense<0.000000e+00> : vector<196x32xf32>
    %10 = tpu.matmul %9, %0, %cst_12 {dimension_numbers = #tpu.dot_dimension_numbers<[1], [0], [0], [1], [0, 0, 1, 1], [], []>} : vector<196x9xbf16>, vector<9x32xbf16>, vector<196x32xf32> -> vector<196x32xf32>
    %11 = arith.maximumf %7, %10 : vector<196x32xf32>
    %c0_13 = arith.constant 0 : index
    %c3 = arith.constant 3 : index
    %c0_14 = arith.constant 0 : index
    %c0_15 = arith.constant 0 : index
    %12 = vector.load %arg1[%c0_13, %c3, %c0_14, %c0_15] : memref<1x4x196x9xbf16, #tpu.memory_space<vmem>>, vector<1x1x196x9xbf16>
    %13 = vector.shape_cast %12 : vector<1x1x196x9xbf16> to vector<196x9xbf16>
    %cst_16 = arith.constant dense<0.000000e+00> : vector<196x32xf32>
    %14 = tpu.matmul %13, %0, %cst_16 {dimension_numbers = #tpu.dot_dimension_numbers<[1], [0], [0], [1], [0, 0, 1, 1], [], []>} : vector<196x9xbf16>, vector<9x32xbf16>, vector<196x32xf32> -> vector<196x32xf32>
    %15 = arith.maximumf %11, %14 : vector<196x32xf32>
    %c0_17 = arith.constant 0 : index
    %c0_18 = arith.constant 0 : index
    %16 = vector.load %arg3[%c0_17, %c0_18] : memref<1x32xf32, #tpu.memory_space<vmem>>, vector<1x32xf32>
    %17 = vector.broadcast %16 : vector<1x32xf32> to vector<196x32xf32>
    %18 = arith.addf %15, %17 : vector<196x32xf32>
    %cst_19 = arith.constant 0.000000e+00 : f32
    %19 = vector.broadcast %cst_19 : f32 to vector<196x32xf32>
    %20 = arith.maximumf %18, %19 : vector<196x32xf32>
    %c0_20 = arith.constant 0 : index
    %c0_21 = arith.constant 0 : index
    %21 = vector.load %arg8[%c0_20, %c0_21] : memref<200x32xf32, #tpu.memory_space<vmem>>, vector<196x32xf32>
    tpu.vector_store %arg8[%c0_20, %c0_21], %20 {strides = array<i32>} : memref<200x32xf32, #tpu.memory_space<vmem>>, vector<196x32xf32>,
    %cst_22 = arith.constant 0.000000e+00 : f32
    %22 = vector.broadcast %cst_22 : f32 to vector<4x32xf32>
    %c196 = arith.constant 196 : index
    %c0_23 = arith.constant 0 : index
    %23 = vector.load %arg8[%c196, %c0_23] : memref<200x32xf32, #tpu.memory_space<vmem>>, vector<4x32xf32>
    tpu.vector_store %arg8[%c196, %c0_23], %22 {strides = array<i32>} : memref<200x32xf32, #tpu.memory_space<vmem>>, vector<4x32xf32>,
    %c0_24 = arith.constant 0 : index
    %c0_25 = arith.constant 0 : index
    %24 = vector.load %arg8[%c0_24, %c0_25] : memref<200x32xf32, #tpu.memory_space<vmem>>, vector<168x32xf32>
    %25 = arith.truncf %24 : vector<168x32xf32> to vector<168x32xbf16>
    %c0_26 = arith.constant 0 : index
    %c0_27 = arith.constant 0 : index
    %c0_28 = arith.constant 0 : index
    %26 = vector.load %arg4[%c0_26, %c0_27, %c0_28] : memref<9x32x64xbf16, #tpu.memory_space<vmem>>, vector<1x32x64xbf16>
    %27 = vector.shape_cast %26 : vector<1x32x64xbf16> to vector<32x64xbf16>
    %cst_29 = arith.constant dense<0.000000e+00> : vector<168x64xf32>
    %28 = tpu.matmul %25, %27, %cst_29 {dimension_numbers = #tpu.dot_dimension_numbers<[1], [0], [0], [1], [0, 0, 1, 1], [], []>} : vector<168x32xbf16>, vector<32x64xbf16>, vector<168x64xf32> -> vector<168x64xf32>
    %c1_30 = arith.constant 1 : index
    %c0_31 = arith.constant 0 : index
    %29 = vector.load %arg8[%c1_30, %c0_31] : memref<200x32xf32, #tpu.memory_space<vmem>>, vector<168x32xf32>
    %30 = arith.truncf %29 : vector<168x32xf32> to vector<168x32xbf16>
    %c1_32 = arith.constant 1 : index
    %c0_33 = arith.constant 0 : index
    %c0_34 = arith.constant 0 : index
    %31 = vector.load %arg4[%c1_32, %c0_33, %c0_34] : memref<9x32x64xbf16, #tpu.memory_space<vmem>>, vector<1x32x64xbf16>
    %32 = vector.shape_cast %31 : vector<1x32x64xbf16> to vector<32x64xbf16>
    %cst_35 = arith.constant dense<0.000000e+00> : vector<168x64xf32>
    %33 = tpu.matmul %30, %32, %cst_35 {dimension_numbers = #tpu.dot_dimension_numbers<[1], [0], [0], [1], [0, 0, 1, 1], [], []>} : vector<168x32xbf16>, vector<32x64xbf16>, vector<168x64xf32> -> vector<168x64xf32>
    %34 = arith.addf %28, %33 : vector<168x64xf32>
    %c2_36 = arith.constant 2 : index
    %c0_37 = arith.constant 0 : index
    %35 = vector.load %arg8[%c2_36, %c0_37] : memref<200x32xf32, #tpu.memory_space<vmem>>, vector<168x32xf32>
    %36 = arith.truncf %35 : vector<168x32xf32> to vector<168x32xbf16>
    %c2_38 = arith.constant 2 : index
    %c0_39 = arith.constant 0 : index
    %c0_40 = arith.constant 0 : index
    %37 = vector.load %arg4[%c2_38, %c0_39, %c0_40] : memref<9x32x64xbf16, #tpu.memory_space<vmem>>, vector<1x32x64xbf16>
    %38 = vector.shape_cast %37 : vector<1x32x64xbf16> to vector<32x64xbf16>
    %cst_41 = arith.constant dense<0.000000e+00> : vector<168x64xf32>
    %39 = tpu.matmul %36, %38, %cst_41 {dimension_numbers = #tpu.dot_dimension_numbers<[1], [0], [0], [1], [0, 0, 1, 1], [], []>} : vector<168x32xbf16>, vector<32x64xbf16>, vector<168x64xf32> -> vector<168x64xf32>
    %40 = arith.addf %34, %39 : vector<168x64xf32>
    %c14 = arith.constant 14 : index
    %c0_42 = arith.constant 0 : index
    %41 = vector.load %arg8[%c14, %c0_42] : memref<200x32xf32, #tpu.memory_space<vmem>>, vector<168x32xf32>
    %42 = arith.truncf %41 : vector<168x32xf32> to vector<168x32xbf16>
    %c3_43 = arith.constant 3 : index
    %c0_44 = arith.constant 0 : index
    %c0_45 = arith.constant 0 : index
    %43 = vector.load %arg4[%c3_43, %c0_44, %c0_45] : memref<9x32x64xbf16, #tpu.memory_space<vmem>>, vector<1x32x64xbf16>
    %44 = vector.shape_cast %43 : vector<1x32x64xbf16> to vector<32x64xbf16>
    %cst_46 = arith.constant dense<0.000000e+00> : vector<168x64xf32>
    %45 = tpu.matmul %42, %44, %cst_46 {dimension_numbers = #tpu.dot_dimension_numbers<[1], [0], [0], [1], [0, 0, 1, 1], [], []>} : vector<168x32xbf16>, vector<32x64xbf16>, vector<168x64xf32> -> vector<168x64xf32>
    %46 = arith.addf %40, %45 : vector<168x64xf32>
    %c15 = arith.constant 15 : index
    %c0_47 = arith.constant 0 : index
    %47 = vector.load %arg8[%c15, %c0_47] : memref<200x32xf32, #tpu.memory_space<vmem>>, vector<168x32xf32>
    %48 = arith.truncf %47 : vector<168x32xf32> to vector<168x32xbf16>
    %c4 = arith.constant 4 : index
    %c0_48 = arith.constant 0 : index
    %c0_49 = arith.constant 0 : index
    %49 = vector.load %arg4[%c4, %c0_48, %c0_49] : memref<9x32x64xbf16, #tpu.memory_space<vmem>>, vector<1x32x64xbf16>
    %50 = vector.shape_cast %49 : vector<1x32x64xbf16> to vector<32x64xbf16>
    %cst_50 = arith.constant dense<0.000000e+00> : vector<168x64xf32>
    %51 = tpu.matmul %48, %50, %cst_50 {dimension_numbers = #tpu.dot_dimension_numbers<[1], [0], [0], [1], [0, 0, 1, 1], [], []>} : vector<168x32xbf16>, vector<32x64xbf16>, vector<168x64xf32> -> vector<168x64xf32>
    %52 = arith.addf %46, %51 : vector<168x64xf32>
    %c16 = arith.constant 16 : index
    %c0_51 = arith.constant 0 : index
    %53 = vector.load %arg8[%c16, %c0_51] : memref<200x32xf32, #tpu.memory_space<vmem>>, vector<168x32xf32>
    %54 = arith.truncf %53 : vector<168x32xf32> to vector<168x32xbf16>
    %c5 = arith.constant 5 : index
    %c0_52 = arith.constant 0 : index
    %c0_53 = arith.constant 0 : index
    %55 = vector.load %arg4[%c5, %c0_52, %c0_53] : memref<9x32x64xbf16, #tpu.memory_space<vmem>>, vector<1x32x64xbf16>
    %56 = vector.shape_cast %55 : vector<1x32x64xbf16> to vector<32x64xbf16>
    %cst_54 = arith.constant dense<0.000000e+00> : vector<168x64xf32>
    %57 = tpu.matmul %54, %56, %cst_54 {dimension_numbers = #tpu.dot_dimension_numbers<[1], [0], [0], [1], [0, 0, 1, 1], [], []>} : vector<168x32xbf16>, vector<32x64xbf16>, vector<168x64xf32> -> vector<168x64xf32>
    %58 = arith.addf %52, %57 : vector<168x64xf32>
    %c28 = arith.constant 28 : index
    %c0_55 = arith.constant 0 : index
    %59 = vector.load %arg8[%c28, %c0_55] : memref<200x32xf32, #tpu.memory_space<vmem>>, vector<168x32xf32>
    %60 = arith.truncf %59 : vector<168x32xf32> to vector<168x32xbf16>
    %c6 = arith.constant 6 : index
    %c0_56 = arith.constant 0 : index
    %c0_57 = arith.constant 0 : index
    %61 = vector.load %arg4[%c6, %c0_56, %c0_57] : memref<9x32x64xbf16, #tpu.memory_space<vmem>>, vector<1x32x64xbf16>
    %62 = vector.shape_cast %61 : vector<1x32x64xbf16> to vector<32x64xbf16>
    %cst_58 = arith.constant dense<0.000000e+00> : vector<168x64xf32>
    %63 = tpu.matmul %60, %62, %cst_58 {dimension_numbers = #tpu.dot_dimension_numbers<[1], [0], [0], [1], [0, 0, 1, 1], [], []>} : vector<168x32xbf16>, vector<32x64xbf16>, vector<168x64xf32> -> vector<168x64xf32>
    %64 = arith.addf %58, %63 : vector<168x64xf32>
    %c29 = arith.constant 29 : index
    %c0_59 = arith.constant 0 : index
    %65 = vector.load %arg8[%c29, %c0_59] : memref<200x32xf32, #tpu.memory_space<vmem>>, vector<168x32xf32>
    %66 = arith.truncf %65 : vector<168x32xf32> to vector<168x32xbf16>
    %c7 = arith.constant 7 : index
    %c0_60 = arith.constant 0 : index
    %c0_61 = arith.constant 0 : index
    %67 = vector.load %arg4[%c7, %c0_60, %c0_61] : memref<9x32x64xbf16, #tpu.memory_space<vmem>>, vector<1x32x64xbf16>
    %68 = vector.shape_cast %67 : vector<1x32x64xbf16> to vector<32x64xbf16>
    %cst_62 = arith.constant dense<0.000000e+00> : vector<168x64xf32>
    %69 = tpu.matmul %66, %68, %cst_62 {dimension_numbers = #tpu.dot_dimension_numbers<[1], [0], [0], [1], [0, 0, 1, 1], [], []>} : vector<168x32xbf16>, vector<32x64xbf16>, vector<168x64xf32> -> vector<168x64xf32>
    %70 = arith.addf %64, %69 : vector<168x64xf32>
    %c30 = arith.constant 30 : index
    %c0_63 = arith.constant 0 : index
    %71 = vector.load %arg8[%c30, %c0_63] : memref<200x32xf32, #tpu.memory_space<vmem>>, vector<168x32xf32>
    %72 = arith.truncf %71 : vector<168x32xf32> to vector<168x32xbf16>
    %c8 = arith.constant 8 : index
    %c0_64 = arith.constant 0 : index
    %c0_65 = arith.constant 0 : index
    %73 = vector.load %arg4[%c8, %c0_64, %c0_65] : memref<9x32x64xbf16, #tpu.memory_space<vmem>>, vector<1x32x64xbf16>
    %74 = vector.shape_cast %73 : vector<1x32x64xbf16> to vector<32x64xbf16>
    %cst_66 = arith.constant dense<0.000000e+00> : vector<168x64xf32>
    %75 = tpu.matmul %72, %74, %cst_66 {dimension_numbers = #tpu.dot_dimension_numbers<[1], [0], [0], [1], [0, 0, 1, 1], [], []>} : vector<168x32xbf16>, vector<32x64xbf16>, vector<168x64xf32> -> vector<168x64xf32>
    %76 = arith.addf %70, %75 : vector<168x64xf32>
    %c0_67 = arith.constant 0 : index
    %c0_68 = arith.constant 0 : index
    %77 = vector.load %arg9[%c0_67, %c0_68] : memref<168x64xf32, #tpu.memory_space<vmem>>, vector<168x64xf32>
    tpu.vector_store %arg9[%c0_67, %c0_68], %76 {strides = array<i32>} : memref<168x64xf32, #tpu.memory_space<vmem>>, vector<168x64xf32>,
    %c0_69 = arith.constant 0 : index
    %c0_70 = arith.constant 0 : index
    %78 = vector.load %arg9[%c0_69, %c0_70] : memref<168x64xf32, #tpu.memory_space<vmem>>, vector<151x64xf32>
    %c1_71 = arith.constant 1 : index
    %c0_72 = arith.constant 0 : index
    %79 = vector.load %arg9[%c1_71, %c0_72] : memref<168x64xf32, #tpu.memory_space<vmem>>, vector<151x64xf32>
    %80 = arith.maximumf %78, %79 : vector<151x64xf32>
    %c14_73 = arith.constant 14 : index
    %c0_74 = arith.constant 0 : index
    %81 = vector.load %arg9[%c14_73, %c0_74] : memref<168x64xf32, #tpu.memory_space<vmem>>, vector<151x64xf32>
    %c15_75 = arith.constant 15 : index
    %c0_76 = arith.constant 0 : index
    %82 = vector.load %arg9[%c15_75, %c0_76] : memref<168x64xf32, #tpu.memory_space<vmem>>, vector<151x64xf32>
    %83 = arith.maximumf %81, %82 : vector<151x64xf32>
    %84 = arith.maximumf %80, %83 : vector<151x64xf32>
    %c0_77 = arith.constant 0 : index
    %c0_78 = arith.constant 0 : index
    %85 = vector.load %arg6[%c0_77, %c0_78] : memref<36x151xf32, #tpu.memory_space<vmem>>, vector<36x151xf32>
    %cst_79 = arith.constant dense<0.000000e+00> : vector<36x64xf32>
    %86 = tpu.matmul %85, %84, %cst_79 {dimension_numbers = #tpu.dot_dimension_numbers<[1], [0], [0], [1], [0, 0, 1, 1], [], []>} : vector<36x151xf32>, vector<151x64xf32>, vector<36x64xf32> -> vector<36x64xf32>
    %c0_80 = arith.constant 0 : index
    %c0_81 = arith.constant 0 : index
    %87 = vector.load %arg5[%c0_80, %c0_81] : memref<1x64xf32, #tpu.memory_space<vmem>>, vector<1x64xf32>
    %88 = vector.broadcast %87 : vector<1x64xf32> to vector<36x64xf32>
    %89 = arith.addf %86, %88 : vector<36x64xf32>
    %cst_82 = arith.constant 0.000000e+00 : f32
    %90 = vector.broadcast %cst_82 : f32 to vector<36x64xf32>
    %91 = arith.maximumf %89, %90 : vector<36x64xf32>
    %c0_83 = arith.constant 0 : index
    %c0_84 = arith.constant 0 : index
    %c0_85 = arith.constant 0 : index
    %92 = vector.load %arg7[%c0_83, %c0_84, %c0_85] : memref<1x36x64xf32, #tpu.memory_space<vmem>>, vector<1x36x64xf32>
    %93 = vector.shape_cast %92 : vector<1x36x64xf32> to vector<36x64xf32>
    %94 = vector.shape_cast %91 : vector<36x64xf32> to vector<1x36x64xf32>
    tpu.vector_store %arg7[%c0_83, %c0_84, %c0_85], %94 {strides = array<i32>} : memref<1x36x64xf32, #tpu.memory_space<vmem>>, vector<1x36x64xf32>,
    return
  }
  func.func @transform_0(%arg0: i32) -> (i32, i32, i32, i32) {
    %c0_i32 = arith.constant 0 : i32
    %c0_i32_0 = arith.constant 0 : i32
    %c0_i32_1 = arith.constant 0 : i32
    %c0_i32_2 = arith.constant 0 : i32
    return %arg0, %c0_i32, %c0_i32_0, %c0_i32_1 : i32, i32, i32, i32
  }
  func.func @transform_1(%arg0: i32) -> (i32, i32) {
    %c0_i32 = arith.constant 0 : i32
    %c0_i32_0 = arith.constant 0 : i32
    %c0_i32_1 = arith.constant 0 : i32
    return %c0_i32, %c0_i32_0 : i32, i32
  }
  func.func @transform_2(%arg0: i32) -> (i32, i32) {
    %c0_i32 = arith.constant 0 : i32
    %c0_i32_0 = arith.constant 0 : i32
    %c0_i32_1 = arith.constant 0 : i32
    return %c0_i32, %c0_i32_0 : i32, i32
  }
  func.func @transform_3(%arg0: i32) -> (i32, i32, i32) {
    %c0_i32 = arith.constant 0 : i32
    %c0_i32_0 = arith.constant 0 : i32
    %c0_i32_1 = arith.constant 0 : i32
    %c0_i32_2 = arith.constant 0 : i32
    return %c0_i32, %c0_i32_0, %c0_i32_1 : i32, i32, i32
  }
  func.func @transform_4(%arg0: i32) -> (i32, i32) {
    %c0_i32 = arith.constant 0 : i32
    %c0_i32_0 = arith.constant 0 : i32
    %c0_i32_1 = arith.constant 0 : i32
    return %c0_i32, %c0_i32_0 : i32, i32
  }
  func.func @transform_5(%arg0: i32) -> (i32, i32) {
    %c0_i32 = arith.constant 0 : i32
    %c0_i32_0 = arith.constant 0 : i32
    %c0_i32_1 = arith.constant 0 : i32
    return %c0_i32, %c0_i32_0 : i32, i32
  }
  func.func @transform_6(%arg0: i32) -> (i32, i32, i32) {
    %c0_i32 = arith.constant 0 : i32
    %c0_i32_0 = arith.constant 0 : i32
    %c0_i32_1 = arith.constant 0 : i32
    return %arg0, %c0_i32, %c0_i32_0 : i32, i32, i32
  }
}

module attributes {stable_mosaic.version = 11 : i64} {
  func.func @fc_kernel(%arg0: i32, %arg1: memref<8x2304xf32, #tpu.memory_space<vmem>>, %arg2: memref<2304x128xbf16, #tpu.memory_space<vmem>>, %arg3: memref<1x128xf32, #tpu.memory_space<vmem>>, %arg4: memref<8x128xf32, #tpu.memory_space<vmem>>) attributes {dimension_semantics = [#tpu.dimension_semantics<parallel>], iteration_bounds = array<i64: 1>, scalar_prefetch = 0 : i64, scratch_operands = 0 : i64, tpu.core_type = #tpu.core_type<tc>, window_params = [{transform_indices = @transform_0, window_bounds = array<i64: 8, 2304>}, {pipeline_mode = #tpu.pipeline_mode<synchronous>, transform_indices = @transform_1, window_bounds = array<i64: 2304, 128>}, {pipeline_mode = #tpu.pipeline_mode<synchronous>, transform_indices = @transform_2, window_bounds = array<i64: 1, 128>}, {transform_indices = @transform_3, window_bounds = array<i64: 8, 128>}]} {
    %c0 = arith.constant 0 : index
    %c0_0 = arith.constant 0 : index
    %0 = vector.load %arg1[%c0, %c0_0] : memref<8x2304xf32, #tpu.memory_space<vmem>>, vector<8x2304xf32>
    %1 = arith.truncf %0 : vector<8x2304xf32> to vector<8x2304xbf16>
    %c0_1 = arith.constant 0 : index
    %c0_2 = arith.constant 0 : index
    %2 = vector.load %arg2[%c0_1, %c0_2] : memref<2304x128xbf16, #tpu.memory_space<vmem>>, vector<2304x128xbf16>
    %cst = arith.constant dense<0.000000e+00> : vector<8x128xf32>
    %3 = tpu.matmul %1, %2, %cst {dimension_numbers = #tpu.dot_dimension_numbers<[1], [0], [0], [1], [0, 0, 1, 1], [], []>} : vector<8x2304xbf16>, vector<2304x128xbf16>, vector<8x128xf32> -> vector<8x128xf32>
    %c0_3 = arith.constant 0 : index
    %c0_4 = arith.constant 0 : index
    %4 = vector.load %arg3[%c0_3, %c0_4] : memref<1x128xf32, #tpu.memory_space<vmem>>, vector<1x128xf32>
    %5 = vector.broadcast %4 : vector<1x128xf32> to vector<8x128xf32>
    %6 = arith.addf %3, %5 : vector<8x128xf32>
    %c0_5 = arith.constant 0 : index
    %c0_6 = arith.constant 0 : index
    %7 = vector.load %arg4[%c0_5, %c0_6] : memref<8x128xf32, #tpu.memory_space<vmem>>, vector<8x128xf32>
    tpu.vector_store %arg4[%c0_5, %c0_6], %6 {strides = array<i32>} : memref<8x128xf32, #tpu.memory_space<vmem>>, vector<8x128xf32>,
    return
  }
  func.func @transform_0(%arg0: i32) -> (i32, i32) {
    %c0_i32 = arith.constant 0 : i32
    %c0_i32_0 = arith.constant 0 : i32
    return %arg0, %c0_i32 : i32, i32
  }
  func.func @transform_1(%arg0: i32) -> (i32, i32) {
    %c0_i32 = arith.constant 0 : i32
    %c0_i32_0 = arith.constant 0 : i32
    %c0_i32_1 = arith.constant 0 : i32
    return %c0_i32, %c0_i32_0 : i32, i32
  }
  func.func @transform_2(%arg0: i32) -> (i32, i32) {
    %c0_i32 = arith.constant 0 : i32
    %c0_i32_0 = arith.constant 0 : i32
    %c0_i32_1 = arith.constant 0 : i32
    return %c0_i32, %c0_i32_0 : i32, i32
  }
  func.func @transform_3(%arg0: i32) -> (i32, i32) {
    %c0_i32 = arith.constant 0 : i32
    %c0_i32_0 = arith.constant 0 : i32
    return %arg0, %c0_i32 : i32, i32
  }
}

</mosaic_0001>

<llo_original>
// kernel: fashion_cnn_forward.3
$region0: #{fashion_cnn_forward.3}
  #allocation0 [shape = 'u32[]', space=smem, size = 0x4, offset = 0x4, fixed_abs, tag = 'smem constant byte address 0x4 - core index']
  #allocation1 [shape = 'u32[144,128]{1,0:T(1,128)}', space=vmem, size = 0x12000, scoped, tag = 'internal scratch']
  %s0 = inlined_call_operand.vmem [shape: f32[8,2304], index: 0, kind: input, shape index: {}]
  %s1 = inlined_call_operand.vmem [shape: bf16[2304,128], index: 1, kind: input, shape index: {}]
  %s2 = inlined_call_operand.vmem [shape: f32[1,128], index: 2, kind: input, shape index: {}]
  %s3 = inlined_call_operand.vmem [shape: f32[8,128], index: 3, kind: output, shape index: {}]
  %s4 = sld [smem:[#allocation0]]
  $region22: #{fashion_cnn_forward.3} parent=0
    _
  %s6 = ssub.s32 1, %s4
  %s7 = scalar_select 0, %s6, %s4
  // Predicated region
  $region2: #{fashion_cnn_forward.3} parent=0 // pred_check
    _
  $region3: #{fashion_cnn_forward.3} parent=0 // pred_check_branch
    %9 = sbr.rel (0) target = $region5
  $region4: #{fashion_cnn_forward.3} parent=0 // pred_region
    _
  $region5: #{fashion_cnn_forward.3} parent=0 // pred_fallthru
    _
  // Predicated region
  $region6: #{fashion_cnn_forward.3} parent=0 // pred_check
    _
  $region7: #{fashion_cnn_forward.3} parent=0 // pred_check_branch
    %11 = sbr.rel (0) target = $region9
  $region8: #{fashion_cnn_forward.3} parent=0 // pred_region
    _
  $region9: #{fashion_cnn_forward.3} parent=0 // pred_fallthru
    _
  // Predicated region
  $region10: #{fashion_cnn_forward.3} parent=0 // pred_check
    _
  $region11: #{fashion_cnn_forward.3} parent=0 // pred_check_branch
    %13 = sbr.rel (0) target = $region13
  $region12: #{fashion_cnn_forward.3} parent=0 // pred_region
    _
  $region13: #{fashion_cnn_forward.3} parent=0 // pred_fallthru
    _
  %v15 = vld [vmem:[%s0] sm:$0xff]
  %v16 = vld [vmem:[%s0 + $0x8] sm:$0xff]
  %v17 = vld [vmem:[%s0 + $0x10] sm:$0xff]
  %v18 = vld [vmem:[%s0 + $0x18] sm:$0xff]
  %v19 = vld [vmem:[%s0 + $0x20] sm:$0xff]
  %v20 = vld [vmem:[%s0 + $0x28] sm:$0xff]
  %v21 = vld [vmem:[%s0 + $0x30] sm:$0xff]
  %v22 = vld [vmem:[%s0 + $0x38] sm:$0xff]
  %v23 = vld [vmem:[%s0 + $0x40] sm:$0xff]
  %v24 = vld [vmem:[%s0 + $0x48] sm:$0xff]
  %v25 = vld [vmem:[%s0 + $0x50] sm:$0xff]
  %v26 = vld [vmem:[%s0 + $0x58] sm:$0xff]
  %v27 = vld [vmem:[%s0 + $0x60] sm:$0xff]
  %v28 = vld [vmem:[%s0 + $0x68] sm:$0xff]
  %v29 = vld [vmem:[%s0 + $0x70] sm:$0xff]
  %v30 = vld [vmem:[%s0 + $0x78] sm:$0xff]
  %v31 = vld [vmem:[%s0 + $0x80] sm:$0xff]
  %v32 = vld [vmem:[%s0 + $0x88] sm:$0xff]
  %v33 = vpack.c.bf16 %v15, %v15
  %v34 = vpack.c.bf16 %v16, %v16
  %v35 = vpack.c.bf16 %v17, %v17
  %v36 = vpack.c.bf16 %v18, %v18
  %v37 = vpack.c.bf16 %v19, %v19
  %v38 = vpack.c.bf16 %v20, %v20
  %v39 = vpack.c.bf16 %v21, %v21
  %v40 = vpack.c.bf16 %v22, %v22
  %v41 = vpack.c.bf16 %v23, %v23
  %v42 = vpack.c.bf16 %v24, %v24
  %v43 = vpack.c.bf16 %v25, %v25
  %v44 = vpack.c.bf16 %v26, %v26
  %v45 = vpack.c.bf16 %v27, %v27
  %v46 = vpack.c.bf16 %v28, %v28
  %v47 = vpack.c.bf16 %v29, %v29
  %v48 = vpack.c.bf16 %v30, %v30
  %v49 = vpack.c.bf16 %v31, %v31
  %v50 = vpack.c.bf16 %v32, %v32
  %v51 = vld [vmem:[%s1] sm:$0xf]
  %v52 = vld [vmem:[%s1 + $0x4] sm:$0xf]
  %v53 = vld [vmem:[%s1 + $0x8] sm:$0xf]
  %v54 = vld [vmem:[%s1 + $0xc] sm:$0xf]
  %v55 = vld [vmem:[%s1 + $0x10] sm:$0xf]
  %v56 = vld [vmem:[%s1 + $0x14] sm:$0xf]
  %v57 = vld [vmem:[%s1 + $0x18] sm:$0xf]
  %v58 = vld [vmem:[%s1 + $0x1c] sm:$0xf]
  %v59 = vld [vmem:[%s1 + $0x20] sm:$0xf]
  %v60 = vld [vmem:[%s1 + $0x24] sm:$0xf]
  %v61 = vld [vmem:[%s1 + $0x28] sm:$0xf]
  %v62 = vld [vmem:[%s1 + $0x2c] sm:$0xf]
  %v63 = vld [vmem:[%s1 + $0x30] sm:$0xf]
  %v64 = vld [vmem:[%s1 + $0x34] sm:$0xf]
  %v65 = vld [vmem:[%s1 + $0x38] sm:$0xf]
  %v66 = vld [vmem:[%s1 + $0x3c] sm:$0xf]
  %v67 = vld [vmem:[%s1 + $0x40] sm:$0xf]
  %v68 = vld [vmem:[%s1 + $0x44] sm:$0xf]
  %v69 = vld [vmem:[%s1 + $0x48] sm:$0xf]
  %v70 = vld [vmem:[%s1 + $0x4c] sm:$0xf]
  %v71 = vld [vmem:[%s1 + $0x50] sm:$0xf]
  %v72 = vld [vmem:[%s1 + $0x54] sm:$0xf]
  %v73 = vld [vmem:[%s1 + $0x58] sm:$0xf]
  %v74 = vld [vmem:[%s1 + $0x5c] sm:$0xf]
  %v75 = vld [vmem:[%s1 + $0x60] sm:$0xf]
  %v76 = vld [vmem:[%s1 + $0x64] sm:$0xf]
  %v77 = vld [vmem:[%s1 + $0x68] sm:$0xf]
  %v78 = vld [vmem:[%s1 + $0x6c] sm:$0xf]
  %v79 = vld [vmem:[%s1 + $0x70] sm:$0xf]
  %v80 = vld [vmem:[%s1 + $0x74] sm:$0xf]
  %v81 = vld [vmem:[%s1 + $0x78] sm:$0xf]
  %v82 = vld [vmem:[%s1 + $0x7c] sm:$0xf]
  %v83 = vld [vmem:[%s1 + $0x80] sm:$0xf]
  %v84 = vld [vmem:[%s1 + $0x84] sm:$0xf]
  %v85 = vld [vmem:[%s1 + $0x88] sm:$0xf]
  %v86 = vld [vmem:[%s1 + $0x8c] sm:$0xf]
  %v87 = vld [vmem:[%s1 + $0x90] sm:$0xf]
  %v88 = vld [vmem:[%s1 + $0x94] sm:$0xf]
  %v89 = vld [vmem:[%s1 + $0x98] sm:$0xf]
  %v90 = vld [vmem:[%s1 + $0x9c] sm:$0xf]
  %v91 = vld [vmem:[%s1 + $0xa0] sm:$0xf]
  %v92 = vld [vmem:[%s1 + $0xa4] sm:$0xf]
  %v93 = vld [vmem:[%s1 + $0xa8] sm:$0xf]
  %v94 = vld [vmem:[%s1 + $0xac] sm:$0xf]
  %v95 = vld [vmem:[%s1 + $0xb0] sm:$0xf]
  %v96 = vld [vmem:[%s1 + $0xb4] sm:$0xf]
  %v97 = vld [vmem:[%s1 + $0xb8] sm:$0xf]
  %v98 = vld [vmem:[%s1 + $0xbc] sm:$0xf]
  %v99 = vld [vmem:[%s1 + $0xc0] sm:$0xf]
  %v100 = vld [vmem:[%s1 + $0xc4] sm:$0xf]
  %v101 = vld [vmem:[%s1 + $0xc8] sm:$0xf]
  %v102 = vld [vmem:[%s1 + $0xcc] sm:$0xf]
  %v103 = vld [vmem:[%s1 + $0xd0] sm:$0xf]
  %v104 = vld [vmem:[%s1 + $0xd4] sm:$0xf]
  %v105 = vld [vmem:[%s1 + $0xd8] sm:$0xf]
  %v106 = vld [vmem:[%s1 + $0xdc] sm:$0xf]
  %v107 = vld [vmem:[%s1 + $0xe0] sm:$0xf]
  %v108 = vld [vmem:[%s1 + $0xe4] sm:$0xf]
  %v109 = vld [vmem:[%s1 + $0xe8] sm:$0xf]
  %v110 = vld [vmem:[%s1 + $0xec] sm:$0xf]
  %v111 = vld [vmem:[%s1 + $0xf0] sm:$0xf]
  %v112 = vld [vmem:[%s1 + $0xf4] sm:$0xf]
  %v113 = vld [vmem:[%s1 + $0xf8] sm:$0xf]
  %v114 = vld [vmem:[%s1 + $0xfc] sm:$0xf]
  %v115 = vld [vmem:[%s1 + $0x100] sm:$0xf]
  %v116 = vld [vmem:[%s1 + $0x104] sm:$0xf]
  %v117 = vld [vmem:[%s1 + $0x108] sm:$0xf]
  %v118 = vld [vmem:[%s1 + $0x10c] sm:$0xf]
  %v119 = vld [vmem:[%s1 + $0x110] sm:$0xf]
  %v120 = vld [vmem:[%s1 + $0x114] sm:$0xf]
  %v121 = vld [vmem:[%s1 + $0x118] sm:$0xf]
  %v122 = vld [vmem:[%s1 + $0x11c] sm:$0xf]
  %v123 = vld [vmem:[%s1 + $0x120] sm:$0xf]
  %v124 = vld [vmem:[%s1 + $0x124] sm:$0xf]
  %v125 = vld [vmem:[%s1 + $0x128] sm:$0xf]
  %v126 = vld [vmem:[%s1 + $0x12c] sm:$0xf]
  %v127 = vld [vmem:[%s1 + $0x130] sm:$0xf]
  %v128 = vld [vmem:[%s1 + $0x134] sm:$0xf]
  %v129 = vld [vmem:[%s1 + $0x138] sm:$0xf]
  %v130 = vld [vmem:[%s1 + $0x13c] sm:$0xf]
  %v131 = vld [vmem:[%s1 + $0x140] sm:$0xf]
  %v132 = vld [vmem:[%s1 + $0x144] sm:$0xf]
  %v133 = vld [vmem:[%s1 + $0x148] sm:$0xf]
  %v134 = vld [vmem:[%s1 + $0x14c] sm:$0xf]
  %v135 = vld [vmem:[%s1 + $0x150] sm:$0xf]
  %v136 = vld [vmem:[%s1 + $0x154] sm:$0xf]
  %v137 = vld [vmem:[%s1 + $0x158] sm:$0xf]
  %v138 = vld [vmem:[%s1 + $0x15c] sm:$0xf]
  %v139 = vld [vmem:[%s1 + $0x160] sm:$0xf]
  %v140 = vld [vmem:[%s1 + $0x164] sm:$0xf]
  %v141 = vld [vmem:[%s1 + $0x168] sm:$0xf]
  %v142 = vld [vmem:[%s1 + $0x16c] sm:$0xf]
  %v143 = vld [vmem:[%s1 + $0x170] sm:$0xf]
  %v144 = vld [vmem:[%s1 + $0x174] sm:$0xf]
  %v145 = vld [vmem:[%s1 + $0x178] sm:$0xf]
  %v146 = vld [vmem:[%s1 + $0x17c] sm:$0xf]
  %v147 = vld [vmem:[%s1 + $0x180] sm:$0xf]
  %v148 = vld [vmem:[%s1 + $0x184] sm:$0xf]
  %v149 = vld [vmem:[%s1 + $0x188] sm:$0xf]
  %v150 = vld [vmem:[%s1 + $0x18c] sm:$0xf]
  %v151 = vld [vmem:[%s1 + $0x190] sm:$0xf]
  %v152 = vld [vmem:[%s1 + $0x194] sm:$0xf]
  %v153 = vld [vmem:[%s1 + $0x198] sm:$0xf]
  %v154 = vld [vmem:[%s1 + $0x19c] sm:$0xf]
  %v155 = vld [vmem:[%s1 + $0x1a0] sm:$0xf]
  %v156 = vld [vmem:[%s1 + $0x1a4] sm:$0xf]
  %v157 = vld [vmem:[%s1 + $0x1a8] sm:$0xf]
  %v158 = vld [vmem:[%s1 + $0x1ac] sm:$0xf]
  %v159 = vld [vmem:[%s1 + $0x1b0] sm:$0xf]
  %v160 = vld [vmem:[%s1 + $0x1b4] sm:$0xf]
  %v161 = vld [vmem:[%s1 + $0x1b8] sm:$0xf]
  %v162 = vld [vmem:[%s1 + $0x1bc] sm:$0xf]
  %v163 = vld [vmem:[%s1 + $0x1c0] sm:$0xf]
  %v164 = vld [vmem:[%s1 + $0x1c4] sm:$0xf]
  %v165 = vld [vmem:[%s1 + $0x1c8] sm:$0xf]
  %v166 = vld [vmem:[%s1 + $0x1cc] sm:$0xf]
  %v167 = vld [vmem:[%s1 + $0x1d0] sm:$0xf]
  %v168 = vld [vmem:[%s1 + $0x1d4] sm:$0xf]
  %v169 = vld [vmem:[%s1 + $0x1d8] sm:$0xf]
  %v170 = vld [vmem:[%s1 + $0x1dc] sm:$0xf]
  %v171 = vld [vmem:[%s1 + $0x1e0] sm:$0xf]
  %v172 = vld [vmem:[%s1 + $0x1e4] sm:$0xf]
  %v173 = vld [vmem:[%s1 + $0x1e8] sm:$0xf]
  %v174 = vld [vmem:[%s1 + $0x1ec] sm:$0xf]
  %v175 = vld [vmem:[%s1 + $0x1f0] sm:$0xf]
  %v176 = vld [vmem:[%s1 + $0x1f4] sm:$0xf]
  %v177 = vld [vmem:[%s1 + $0x1f8] sm:$0xf]
  %v178 = vld [vmem:[%s1 + $0x1fc] sm:$0xf]
  %v179 = vld [vmem:[%s1 + $0x200] sm:$0xf]
  %v180 = vld [vmem:[%s1 + $0x204] sm:$0xf]
  %v181 = vld [vmem:[%s1 + $0x208] sm:$0xf]
  %v182 = vld [vmem:[%s1 + $0x20c] sm:$0xf]
  %v183 = vld [vmem:[%s1 + $0x210] sm:$0xf]
  %v184 = vld [vmem:[%s1 + $0x214] sm:$0xf]
  %v185 = vld [vmem:[%s1 + $0x218] sm:$0xf]
  %v186 = vld [vmem:[%s1 + $0x21c] sm:$0xf]
  %v187 = vld [vmem:[%s1 + $0x220] sm:$0xf]
  %v188 = vld [vmem:[%s1 + $0x224] sm:$0xf]
  %v189 = vld [vmem:[%s1 + $0x228] sm:$0xf]
  %v190 = vld [vmem:[%s1 + $0x22c] sm:$0xf]
  %v191 = vld [vmem:[%s1 + $0x230] sm:$0xf]
  %v192 = vld [vmem:[%s1 + $0x234] sm:$0xf]
  %v193 = vld [vmem:[%s1 + $0x238] sm:$0xf]
  %v194 = vld [vmem:[%s1 + $0x23c] sm:$0xf]
  %v195 = vld [vmem:[%s1 + $0x240] sm:$0xf]
  %v196 = vld [vmem:[%s1 + $0x244] sm:$0xf]
  %v197 = vld [vmem:[%s1 + $0x248] sm:$0xf]
  %v198 = vld [vmem:[%s1 + $0x24c] sm:$0xf]
  %v199 = vld [vmem:[%s1 + $0x250] sm:$0xf]
  %v200 = vld [vmem:[%s1 + $0x254] sm:$0xf]
  %v201 = vld [vmem:[%s1 + $0x258] sm:$0xf]
  %v202 = vld [vmem:[%s1 + $0x25c] sm:$0xf]
  %v203 = vld [vmem:[%s1 + $0x260] sm:$0xf]
  %v204 = vld [vmem:[%s1 + $0x264] sm:$0xf]
  %v205 = vld [vmem:[%s1 + $0x268] sm:$0xf]
  %v206 = vld [vmem:[%s1 + $0x26c] sm:$0xf]
  %v207 = vld [vmem:[%s1 + $0x270] sm:$0xf]
  %v208 = vld [vmem:[%s1 + $0x274] sm:$0xf]
  %v209 = vld [vmem:[%s1 + $0x278] sm:$0xf]
  %v210 = vld [vmem:[%s1 + $0x27c] sm:$0xf]
  %v211 = vld [vmem:[%s1 + $0x280] sm:$0xf]
  %v212 = vld [vmem:[%s1 + $0x284] sm:$0xf]
  %v213 = vld [vmem:[%s1 + $0x288] sm:$0xf]
  %v214 = vld [vmem:[%s1 + $0x28c] sm:$0xf]
  %v215 = vld [vmem:[%s1 + $0x290] sm:$0xf]
  %v216 = vld [vmem:[%s1 + $0x294] sm:$0xf]
  %v217 = vld [vmem:[%s1 + $0x298] sm:$0xf]
  %v218 = vld [vmem:[%s1 + $0x29c] sm:$0xf]
  %v219 = vld [vmem:[%s1 + $0x2a0] sm:$0xf]
  %v220 = vld [vmem:[%s1 + $0x2a4] sm:$0xf]
  %v221 = vld [vmem:[%s1 + $0x2a8] sm:$0xf]
  %v222 = vld [vmem:[%s1 + $0x2ac] sm:$0xf]
  %v223 = vld [vmem:[%s1 + $0x2b0] sm:$0xf]
  %v224 = vld [vmem:[%s1 + $0x2b4] sm:$0xf]
  %v225 = vld [vmem:[%s1 + $0x2b8] sm:$0xf]
  %v226 = vld [vmem:[%s1 + $0x2bc] sm:$0xf]
  %v227 = vld [vmem:[%s1 + $0x2c0] sm:$0xf]
  %v228 = vld [vmem:[%s1 + $0x2c4] sm:$0xf]
  %v229 = vld [vmem:[%s1 + $0x2c8] sm:$0xf]
  %v230 = vld [vmem:[%s1 + $0x2cc] sm:$0xf]
  %v231 = vld [vmem:[%s1 + $0x2d0] sm:$0xf]
  %v232 = vld [vmem:[%s1 + $0x2d4] sm:$0xf]
  %v233 = vld [vmem:[%s1 + $0x2d8] sm:$0xf]
  %v234 = vld [vmem:[%s1 + $0x2dc] sm:$0xf]
  %v235 = vld [vmem:[%s1 + $0x2e0] sm:$0xf]
  %v236 = vld [vmem:[%s1 + $0x2e4] sm:$0xf]
  %v237 = vld [vmem:[%s1 + $0x2e8] sm:$0xf]
  %v238 = vld [vmem:[%s1 + $0x2ec] sm:$0xf]
  %v239 = vld [vmem:[%s1 + $0x2f0] sm:$0xf]
  %v240 = vld [vmem:[%s1 + $0x2f4] sm:$0xf]
  %v241 = vld [vmem:[%s1 + $0x2f8] sm:$0xf]
  %v242 = vld [vmem:[%s1 + $0x2fc] sm:$0xf]
  %v243 = vld [vmem:[%s1 + $0x300] sm:$0xf]
  %v244 = vld [vmem:[%s1 + $0x304] sm:$0xf]
  %v245 = vld [vmem:[%s1 + $0x308] sm:$0xf]
  %v246 = vld [vmem:[%s1 + $0x30c] sm:$0xf]
  %v247 = vld [vmem:[%s1 + $0x310] sm:$0xf]
  %v248 = vld [vmem:[%s1 + $0x314] sm:$0xf]
  %v249 = vld [vmem:[%s1 + $0x318] sm:$0xf]
  %v250 = vld [vmem:[%s1 + $0x31c] sm:$0xf]
  %v251 = vld [vmem:[%s1 + $0x320] sm:$0xf]
  %v252 = vld [vmem:[%s1 + $0x324] sm:$0xf]
  %v253 = vld [vmem:[%s1 + $0x328] sm:$0xf]
  %v254 = vld [vmem:[%s1 + $0x32c] sm:$0xf]
  %v255 = vld [vmem:[%s1 + $0x330] sm:$0xf]
  %v256 = vld [vmem:[%s1 + $0x334] sm:$0xf]
  %v257 = vld [vmem:[%s1 + $0x338] sm:$0xf]
  %v258 = vld [vmem:[%s1 + $0x33c] sm:$0xf]
  %v259 = vld [vmem:[%s1 + $0x340] sm:$0xf]
  %v260 = vld [vmem:[%s1 + $0x344] sm:$0xf]
  %v261 = vld [vmem:[%s1 + $0x348] sm:$0xf]
  %v262 = vld [vmem:[%s1 + $0x34c] sm:$0xf]
  %v263 = vld [vmem:[%s1 + $0x350] sm:$0xf]
  %v264 = vld [vmem:[%s1 + $0x354] sm:$0xf]
  %v265 = vld [vmem:[%s1 + $0x358] sm:$0xf]
  %v266 = vld [vmem:[%s1 + $0x35c] sm:$0xf]
  %v267 = vld [vmem:[%s1 + $0x360] sm:$0xf]
  %v268 = vld [vmem:[%s1 + $0x364] sm:$0xf]
  %v269 = vld [vmem:[%s1 + $0x368] sm:$0xf]
  %v270 = vld [vmem:[%s1 + $0x36c] sm:$0xf]
  %v271 = vld [vmem:[%s1 + $0x370] sm:$0xf]
  %v272 = vld [vmem:[%s1 + $0x374] sm:$0xf]
  %v273 = vld [vmem:[%s1 + $0x378] sm:$0xf]
  %v274 = vld [vmem:[%s1 + $0x37c] sm:$0xf]
  %v275 = vld [vmem:[%s1 + $0x380] sm:$0xf]
  %v276 = vld [vmem:[%s1 + $0x384] sm:$0xf]
  %v277 = vld [vmem:[%s1 + $0x388] sm:$0xf]
  %v278 = vld [vmem:[%s1 + $0x38c] sm:$0xf]
  %v279 = vld [vmem:[%s1 + $0x390] sm:$0xf]
  %v280 = vld [vmem:[%s1 + $0x394] sm:$0xf]
  %v281 = vld [vmem:[%s1 + $0x398] sm:$0xf]
  %v282 = vld [vmem:[%s1 + $0x39c] sm:$0xf]
  %v283 = vld [vmem:[%s1 + $0x3a0] sm:$0xf]
  %v284 = vld [vmem:[%s1 + $0x3a4] sm:$0xf]
  %v285 = vld [vmem:[%s1 + $0x3a8] sm:$0xf]
  %v286 = vld [vmem:[%s1 + $0x3ac] sm:$0xf]
  %v287 = vld [vmem:[%s1 + $0x3b0] sm:$0xf]
  %v288 = vld [vmem:[%s1 + $0x3b4] sm:$0xf]
  %v289 = vld [vmem:[%s1 + $0x3b8] sm:$0xf]
  %v290 = vld [vmem:[%s1 + $0x3bc] sm:$0xf]
  %v291 = vld [vmem:[%s1 + $0x3c0] sm:$0xf]
  %v292 = vld [vmem:[%s1 + $0x3c4] sm:$0xf]
  %v293 = vld [vmem:[%s1 + $0x3c8] sm:$0xf]
  %v294 = vld [vmem:[%s1 + $0x3cc] sm:$0xf]
  %v295 = vld [vmem:[%s1 + $0x3d0] sm:$0xf]
  %v296 = vld [vmem:[%s1 + $0x3d4] sm:$0xf]
  %v297 = vld [vmem:[%s1 + $0x3d8] sm:$0xf]
  %v298 = vld [vmem:[%s1 + $0x3dc] sm:$0xf]
  %v299 = vld [vmem:[%s1 + $0x3e0] sm:$0xf]
  %v300 = vld [vmem:[%s1 + $0x3e4] sm:$0xf]
  %v301 = vld [vmem:[%s1 + $0x3e8] sm:$0xf]
  %v302 = vld [vmem:[%s1 + $0x3ec] sm:$0xf]
  %v303 = vld [vmem:[%s1 + $0x3f0] sm:$0xf]
  %v304 = vld [vmem:[%s1 + $0x3f4] sm:$0xf]
  %v305 = vld [vmem:[%s1 + $0x3f8] sm:$0xf]
  %v306 = vld [vmem:[%s1 + $0x3fc] sm:$0xf]
  %v307 = vld [vmem:[%s1 + $0x400] sm:$0xf]
  %v308 = vld [vmem:[%s1 + $0x404] sm:$0xf]
  %v309 = vld [vmem:[%s1 + $0x408] sm:$0xf]
  %v310 = vld [vmem:[%s1 + $0x40c] sm:$0xf]
  %v311 = vld [vmem:[%s1 + $0x410] sm:$0xf]
  %v312 = vld [vmem:[%s1 + $0x414] sm:$0xf]
  %v313 = vld [vmem:[%s1 + $0x418] sm:$0xf]
  %v314 = vld [vmem:[%s1 + $0x41c] sm:$0xf]
  %v315 = vld [vmem:[%s1 + $0x420] sm:$0xf]
  %v316 = vld [vmem:[%s1 + $0x424] sm:$0xf]
  %v317 = vld [vmem:[%s1 + $0x428] sm:$0xf]
  %v318 = vld [vmem:[%s1 + $0x42c] sm:$0xf]
  %v319 = vld [vmem:[%s1 + $0x430] sm:$0xf]
  %v320 = vld [vmem:[%s1 + $0x434] sm:$0xf]
  %v321 = vld [vmem:[%s1 + $0x438] sm:$0xf]
  %v322 = vld [vmem:[%s1 + $0x43c] sm:$0xf]
  %v323 = vld [vmem:[%s1 + $0x440] sm:$0xf]
  %v324 = vld [vmem:[%s1 + $0x444] sm:$0xf]
  %v325 = vld [vmem:[%s1 + $0x448] sm:$0xf]
  %v326 = vld [vmem:[%s1 + $0x44c] sm:$0xf]
  %v327 = vld [vmem:[%s1 + $0x450] sm:$0xf]
  %v328 = vld [vmem:[%s1 + $0x454] sm:$0xf]
  %v329 = vld [vmem:[%s1 + $0x458] sm:$0xf]
  %v330 = vld [vmem:[%s1 + $0x45c] sm:$0xf]
  %v331 = vld [vmem:[%s1 + $0x460] sm:$0xf]
  %v332 = vld [vmem:[%s1 + $0x464] sm:$0xf]
  %v333 = vld [vmem:[%s1 + $0x468] sm:$0xf]
  %v334 = vld [vmem:[%s1 + $0x46c] sm:$0xf]
  %v335 = vld [vmem:[%s1 + $0x470] sm:$0xf]
  %v336 = vld [vmem:[%s1 + $0x474] sm:$0xf]
  %v337 = vld [vmem:[%s1 + $0x478] sm:$0xf]
  %v338 = vld [vmem:[%s1 + $0x47c] sm:$0xf]
  %v339 = vld [vmem:[%s2] sm:$0x1]
  %v341 = vlaneseq
  %v342 = vshrl.u32 %v341, 7
  %v343 = vsub.s32 0, %v342
  %v344 = vrot.slane %v339, %v343
  %v634 = vunpack.c.l.b16 %v51
  %v635 = vunpack.c.l.b16 %v52
  %v636 = vunpack.c.l.b16 %v53
  %v637 = vunpack.c.l.b16 %v54
  %v638 = vunpack.c.l.b16 %v55
  %v639 = vunpack.c.l.b16 %v56
  %v640 = vunpack.c.l.b16 %v57
  %v641 = vunpack.c.l.b16 %v58
  %v642 = vunpack.c.l.b16 %v59
  %v643 = vunpack.c.l.b16 %v60
  %v644 = vunpack.c.l.b16 %v61
  %v645 = vunpack.c.l.b16 %v62
  %v646 = vunpack.c.l.b16 %v63
  %v647 = vunpack.c.l.b16 %v64
  %v648 = vunpack.c.l.b16 %v65
  %v649 = vunpack.c.l.b16 %v66
  %v650 = vunpack.c.l.b16 %v67
  %v651 = vunpack.c.l.b16 %v68
  %v652 = vunpack.c.l.b16 %v69
  %v653 = vunpack.c.l.b16 %v70
  %v654 = vunpack.c.l.b16 %v71
  %v655 = vunpack.c.l.b16 %v72
  %v656 = vunpack.c.l.b16 %v73
  %v657 = vunpack.c.l.b16 %v74
  %v658 = vunpack.c.l.b16 %v75
  %v659 = vunpack.c.l.b16 %v76
  %v660 = vunpack.c.l.b16 %v77
  %v661 = vunpack.c.l.b16 %v78
  %v662 = vunpack.c.l.b16 %v79
  %v663 = vunpack.c.l.b16 %v80
  %v664 = vunpack.c.l.b16 %v81
  %v665 = vunpack.c.l.b16 %v82
  %v666 = vunpack.c.l.b16 %v83
  %v667 = vunpack.c.l.b16 %v84
  %v668 = vunpack.c.l.b16 %v85
  %v669 = vunpack.c.l.b16 %v86
  %v670 = vunpack.c.l.b16 %v87
  %v671 = vunpack.c.l.b16 %v88
  %v672 = vunpack.c.l.b16 %v89
  %v673 = vunpack.c.l.b16 %v90
  %v674 = vunpack.c.l.b16 %v91
  %v675 = vunpack.c.l.b16 %v92
  %v676 = vunpack.c.l.b16 %v93
  %v677 = vunpack.c.l.b16 %v94
  %v678 = vunpack.c.l.b16 %v95
  %v679 = vunpack.c.l.b16 %v96
  %v680 = vunpack.c.l.b16 %v97
  %v681 = vunpack.c.l.b16 %v98
  %v682 = vunpack.c.l.b16 %v99
  %v683 = vunpack.c.l.b16 %v100
  %v684 = vunpack.c.l.b16 %v101
  %v685 = vunpack.c.l.b16 %v102
  %v686 = vunpack.c.l.b16 %v103
  %v687 = vunpack.c.l.b16 %v104
  %v688 = vunpack.c.l.b16 %v105
  %v689 = vunpack.c.l.b16 %v106
  %v690 = vunpack.c.l.b16 %v107
  %v691 = vunpack.c.l.b16 %v108
  %v692 = vunpack.c.l.b16 %v109
  %v693 = vunpack.c.l.b16 %v110
  %v694 = vunpack.c.l.b16 %v111
  %v695 = vunpack.c.l.b16 %v112
  %v696 = vunpack.c.l.b16 %v113
  %v697 = vunpack.c.l.b16 %v114
  %v698 = vunpack.c.l.b16 %v115
  %v699 = vunpack.c.l.b16 %v116
  %v700 = vunpack.c.l.b16 %v117
  %v701 = vunpack.c.l.b16 %v118
  %v702 = vunpack.c.l.b16 %v119
  %v703 = vunpack.c.l.b16 %v120
  %v704 = vunpack.c.l.b16 %v121
  %v705 = vunpack.c.l.b16 %v122
  %v706 = vunpack.c.l.b16 %v123
  %v707 = vunpack.c.l.b16 %v124
  %v708 = vunpack.c.l.b16 %v125
  %v709 = vunpack.c.l.b16 %v126
  %v710 = vunpack.c.l.b16 %v127
  %v711 = vunpack.c.l.b16 %v128
  %v712 = vunpack.c.l.b16 %v129
  %v713 = vunpack.c.l.b16 %v130
  %v714 = vunpack.c.l.b16 %v131
  %v715 = vunpack.c.l.b16 %v132
  %v716 = vunpack.c.l.b16 %v133
  %v717 = vunpack.c.l.b16 %v134
  %v718 = vunpack.c.l.b16 %v135
  %v719 = vunpack.c.l.b16 %v136
  %v720 = vunpack.c.l.b16 %v137
  %v721 = vunpack.c.l.b16 %v138
  %v722 = vunpack.c.l.b16 %v139
  %v723 = vunpack.c.l.b16 %v140
  %v724 = vunpack.c.l.b16 %v141
  %v725 = vunpack.c.l.b16 %v142
  %v726 = vunpack.c.l.b16 %v143
  %v727 = vunpack.c.l.b16 %v144
  %v728 = vunpack.c.l.b16 %v145
  %v729 = vunpack.c.l.b16 %v146
  %v730 = vunpack.c.l.b16 %v147
  %v731 = vunpack.c.l.b16 %v148
  %v732 = vunpack.c.l.b16 %v149
  %v733 = vunpack.c.l.b16 %v150
  %v734 = vunpack.c.l.b16 %v151
  %v735 = vunpack.c.l.b16 %v152
  %v736 = vunpack.c.l.b16 %v153
  %v737 = vunpack.c.l.b16 %v154
  %v738 = vunpack.c.l.b16 %v155
  %v739 = vunpack.c.l.b16 %v156
  %v740 = vunpack.c.l.b16 %v157
  %v741 = vunpack.c.l.b16 %v158
  %v742 = vunpack.c.l.b16 %v159
  %v743 = vunpack.c.l.b16 %v160
  %v744 = vunpack.c.l.b16 %v161
  %v745 = vunpack.c.l.b16 %v162
  %v746 = vunpack.c.l.b16 %v163
  %v747 = vunpack.c.l.b16 %v164
  %v748 = vunpack.c.l.b16 %v165
  %v749 = vunpack.c.l.b16 %v166
  %v750 = vunpack.c.l.b16 %v167
  %v751 = vunpack.c.l.b16 %v168
  %v752 = vunpack.c.l.b16 %v169
  %v753 = vunpack.c.l.b16 %v170
  %v754 = vunpack.c.l.b16 %v171
  %v755 = vunpack.c.l.b16 %v172
  %v756 = vunpack.c.l.b16 %v173
  %v757 = vunpack.c.l.b16 %v174
  %v758 = vunpack.c.l.b16 %v175
  %v759 = vunpack.c.l.b16 %v176
  %v760 = vunpack.c.l.b16 %v177
  %v761 = vunpack.c.l.b16 %v178
  %v762 = vunpack.c.l.b16 %v179
  %v763 = vunpack.c.l.b16 %v180
  %v764 = vunpack.c.l.b16 %v181
  %v765 = vunpack.c.l.b16 %v182
  %v766 = vunpack.c.l.b16 %v183
  %v767 = vunpack.c.l.b16 %v184
  %v768 = vunpack.c.l.b16 %v185
  %v769 = vunpack.c.l.b16 %v186
  %v770 = vunpack.c.l.b16 %v187
  %v771 = vunpack.c.l.b16 %v188
  %v772 = vunpack.c.l.b16 %v189
  %v773 = vunpack.c.l.b16 %v190
  %v774 = vunpack.c.l.b16 %v191
  %v775 = vunpack.c.l.b16 %v192
  %v776 = vunpack.c.l.b16 %v193
  %v777 = vunpack.c.l.b16 %v194
  %v778 = vunpack.c.l.b16 %v195
  %v779 = vunpack.c.l.b16 %v196
  %v780 = vunpack.c.l.b16 %v197
  %v781 = vunpack.c.l.b16 %v198
  %v782 = vunpack.c.l.b16 %v199
  %v783 = vunpack.c.l.b16 %v200
  %v784 = vunpack.c.l.b16 %v201
  %v785 = vunpack.c.l.b16 %v202
  %v786 = vunpack.c.l.b16 %v203
  %v787 = vunpack.c.l.b16 %v204
  %v788 = vunpack.c.l.b16 %v205
  %v789 = vunpack.c.l.b16 %v206
  %v790 = vunpack.c.l.b16 %v207
  %v791 = vunpack.c.l.b16 %v208
  %v792 = vunpack.c.l.b16 %v209
  %v793 = vunpack.c.l.b16 %v210
  %v794 = vunpack.c.l.b16 %v211
  %v795 = vunpack.c.l.b16 %v212
  %v796 = vunpack.c.l.b16 %v213
  %v797 = vunpack.c.l.b16 %v214
  %v798 = vunpack.c.l.b16 %v215
  %v799 = vunpack.c.l.b16 %v216
  %v800 = vunpack.c.l.b16 %v217
  %v801 = vunpack.c.l.b16 %v218
  %v802 = vunpack.c.l.b16 %v219
  %v803 = vunpack.c.l.b16 %v220
  %v804 = vunpack.c.l.b16 %v221
  %v805 = vunpack.c.l.b16 %v222
  %v806 = vunpack.c.l.b16 %v223
  %v807 = vunpack.c.l.b16 %v224
  %v808 = vunpack.c.l.b16 %v225
  %v809 = vunpack.c.l.b16 %v226
  %v810 = vunpack.c.l.b16 %v227
  %v811 = vunpack.c.l.b16 %v228
  %v812 = vunpack.c.l.b16 %v229
  %v813 = vunpack.c.l.b16 %v230
  %v814 = vunpack.c.l.b16 %v231
  %v815 = vunpack.c.l.b16 %v232
  %v816 = vunpack.c.l.b16 %v233
  %v817 = vunpack.c.l.b16 %v234
  %v818 = vunpack.c.l.b16 %v235
  %v819 = vunpack.c.l.b16 %v236
  %v820 = vunpack.c.l.b16 %v237
  %v821 = vunpack.c.l.b16 %v238
  %v822 = vunpack.c.l.b16 %v239
  %v823 = vunpack.c.l.b16 %v240
  %v824 = vunpack.c.l.b16 %v241
  %v825 = vunpack.c.l.b16 %v242
  %v826 = vunpack.c.l.b16 %v243
  %v827 = vunpack.c.l.b16 %v244
  %v828 = vunpack.c.l.b16 %v245
  %v829 = vunpack.c.l.b16 %v246
  %v830 = vunpack.c.l.b16 %v247
  %v831 = vunpack.c.l.b16 %v248
  %v832 = vunpack.c.l.b16 %v249
  %v833 = vunpack.c.l.b16 %v250
  %v834 = vunpack.c.l.b16 %v251
  %v835 = vunpack.c.l.b16 %v252
  %v836 = vunpack.c.l.b16 %v253
  %v837 = vunpack.c.l.b16 %v254
  %v838 = vunpack.c.l.b16 %v255
  %v839 = vunpack.c.l.b16 %v256
  %v840 = vunpack.c.l.b16 %v257
  %v841 = vunpack.c.l.b16 %v258
  %v842 = vunpack.c.l.b16 %v259
  %v843 = vunpack.c.l.b16 %v260
  %v844 = vunpack.c.l.b16 %v261
  %v845 = vunpack.c.l.b16 %v262
  %v846 = vunpack.c.l.b16 %v263
  %v847 = vunpack.c.l.b16 %v264
  %v848 = vunpack.c.l.b16 %v265
  %v849 = vunpack.c.l.b16 %v266
  %v850 = vunpack.c.l.b16 %v267
  %v851 = vunpack.c.l.b16 %v268
  %v852 = vunpack.c.l.b16 %v269
  %v853 = vunpack.c.l.b16 %v270
  %v854 = vunpack.c.l.b16 %v271
  %v855 = vunpack.c.l.b16 %v272
  %v856 = vunpack.c.l.b16 %v273
  %v857 = vunpack.c.l.b16 %v274
  %v858 = vunpack.c.l.b16 %v275
  %v859 = vunpack.c.l.b16 %v276
  %v860 = vunpack.c.l.b16 %v277
  %v861 = vunpack.c.l.b16 %v278
  %v862 = vunpack.c.l.b16 %v279
  %v863 = vunpack.c.l.b16 %v280
  %v864 = vunpack.c.l.b16 %v281
  %v865 = vunpack.c.l.b16 %v282
  %v866 = vunpack.c.l.b16 %v283
  %v867 = vunpack.c.l.b16 %v284
  %v868 = vunpack.c.l.b16 %v285
  %v869 = vunpack.c.l.b16 %v286
  %v870 = vunpack.c.l.b16 %v287
  %v871 = vunpack.c.l.b16 %v288
  %v872 = vunpack.c.l.b16 %v289
  %v873 = vunpack.c.l.b16 %v290
  %v874 = vunpack.c.l.b16 %v291
  %v875 = vunpack.c.l.b16 %v292
  %v876 = vunpack.c.l.b16 %v293
  %v877 = vunpack.c.l.b16 %v294
  %v878 = vunpack.c.l.b16 %v295
  %v879 = vunpack.c.l.b16 %v296
  %v880 = vunpack.c.l.b16 %v297
  %v881 = vunpack.c.l.b16 %v298
  %v882 = vunpack.c.l.b16 %v299
  %v883 = vunpack.c.l.b16 %v300
  %v884 = vunpack.c.l.b16 %v301
  %v885 = vunpack.c.l.b16 %v302
  %v886 = vunpack.c.l.b16 %v303
  %v887 = vunpack.c.l.b16 %v304
  %v888 = vunpack.c.l.b16 %v305
  %v889 = vunpack.c.l.b16 %v306
  %v890 = vunpack.c.l.b16 %v307
  %v891 = vunpack.c.l.b16 %v308
  %v892 = vunpack.c.l.b16 %v309
  %v893 = vunpack.c.l.b16 %v310
  %v894 = vunpack.c.l.b16 %v311
  %v895 = vunpack.c.l.b16 %v312
  %v896 = vunpack.c.l.b16 %v313
  %v897 = vunpack.c.l.b16 %v314
  %v898 = vunpack.c.l.b16 %v315
  %v899 = vunpack.c.l.b16 %v316
  %v900 = vunpack.c.l.b16 %v317
  %v901 = vunpack.c.l.b16 %v318
  %v902 = vunpack.c.l.b16 %v319
  %v903 = vunpack.c.l.b16 %v320
  %v904 = vunpack.c.l.b16 %v321
  %v905 = vunpack.c.l.b16 %v322
  %v906 = vunpack.c.l.b16 %v323
  %v907 = vunpack.c.l.b16 %v324
  %v908 = vunpack.c.l.b16 %v325
  %v909 = vunpack.c.l.b16 %v326
  %v910 = vunpack.c.l.b16 %v327
  %v911 = vunpack.c.l.b16 %v328
  %v912 = vunpack.c.l.b16 %v329
  %v913 = vunpack.c.l.b16 %v330
  %v914 = vunpack.c.l.b16 %v331
  %v915 = vunpack.c.l.b16 %v332
  %v916 = vunpack.c.l.b16 %v333
  %v917 = vunpack.c.l.b16 %v334
  %v918 = vunpack.c.l.b16 %v335
  %v919 = vunpack.c.l.b16 %v336
  %v920 = vunpack.c.l.b16 %v337
  %v921 = vunpack.c.l.b16 %v338
  %v922 = vpack.c.b16 %v635, %v634
  %v923 = vpack.c.b16 %v637, %v636
  %v924 = vpack.c.b16 %v639, %v638
  %v925 = vpack.c.b16 %v641, %v640
  %v926 = vpack.c.b16 %v643, %v642
  %v927 = vpack.c.b16 %v645, %v644
  %v928 = vpack.c.b16 %v647, %v646
  %v929 = vpack.c.b16 %v649, %v648
  %v930 = vpack.c.b16 %v651, %v650
  %v931 = vpack.c.b16 %v653, %v652
  %v932 = vpack.c.b16 %v655, %v654
  %v933 = vpack.c.b16 %v657, %v656
  %v934 = vpack.c.b16 %v659, %v658
  %v935 = vpack.c.b16 %v661, %v660
  %v936 = vpack.c.b16 %v663, %v662
  %v937 = vpack.c.b16 %v665, %v664
  %v938 = vpack.c.b16 %v667, %v666
  %v939 = vpack.c.b16 %v669, %v668
  %v940 = vpack.c.b16 %v671, %v670
  %v941 = vpack.c.b16 %v673, %v672
  %v942 = vpack.c.b16 %v675, %v674
  %v943 = vpack.c.b16 %v677, %v676
  %v944 = vpack.c.b16 %v679, %v678
  %v945 = vpack.c.b16 %v681, %v680
  %v946 = vpack.c.b16 %v683, %v682
  %v947 = vpack.c.b16 %v685, %v684
  %v948 = vpack.c.b16 %v687, %v686
  %v949 = vpack.c.b16 %v689, %v688
  %v950 = vpack.c.b16 %v691, %v690
  %v951 = vpack.c.b16 %v693, %v692
  %v952 = vpack.c.b16 %v695, %v694
  %v953 = vpack.c.b16 %v697, %v696
  %v954 = vpack.c.b16 %v699, %v698
  %v955 = vpack.c.b16 %v701, %v700
  %v956 = vpack.c.b16 %v703, %v702
  %v957 = vpack.c.b16 %v705, %v704
  %v958 = vpack.c.b16 %v707, %v706
  %v959 = vpack.c.b16 %v709, %v708
  %v960 = vpack.c.b16 %v711, %v710
  %v961 = vpack.c.b16 %v713, %v712
  %v962 = vpack.c.b16 %v715, %v714
  %v963 = vpack.c.b16 %v717, %v716
  %v964 = vpack.c.b16 %v719, %v718
  %v965 = vpack.c.b16 %v721, %v720
  %v966 = vpack.c.b16 %v723, %v722
  %v967 = vpack.c.b16 %v725, %v724
  %v968 = vpack.c.b16 %v727, %v726
  %v969 = vpack.c.b16 %v729, %v728
  %v970 = vpack.c.b16 %v731, %v730
  %v971 = vpack.c.b16 %v733, %v732
  %v972 = vpack.c.b16 %v735, %v734
  %v973 = vpack.c.b16 %v737, %v736
  %v974 = vpack.c.b16 %v739, %v738
  %v975 = vpack.c.b16 %v741, %v740
  %v976 = vpack.c.b16 %v743, %v742
  %v977 = vpack.c.b16 %v745, %v744
  %v978 = vpack.c.b16 %v747, %v746
  %v979 = vpack.c.b16 %v749, %v748
  %v980 = vpack.c.b16 %v751, %v750
  %v981 = vpack.c.b16 %v753, %v752
  %v982 = vpack.c.b16 %v755, %v754
  %v983 = vpack.c.b16 %v757, %v756
  %v984 = vpack.c.b16 %v759, %v758
  %v985 = vpack.c.b16 %v761, %v760
  %v986 = vpack.c.b16 %v763, %v762
  %v987 = vpack.c.b16 %v765, %v764
  %v988 = vpack.c.b16 %v767, %v766
  %v989 = vpack.c.b16 %v769, %v768
  %v990 = vpack.c.b16 %v771, %v770
  %v991 = vpack.c.b16 %v773, %v772
  %v992 = vpack.c.b16 %v775, %v774
  %v993 = vpack.c.b16 %v777, %v776
  %v994 = vpack.c.b16 %v779, %v778
  %v995 = vpack.c.b16 %v781, %v780
  %v996 = vpack.c.b16 %v783, %v782
  %v997 = vpack.c.b16 %v785, %v784
  %v998 = vpack.c.b16 %v787, %v786
  %v999 = vpack.c.b16 %v789, %v788
  %v1000 = vpack.c.b16 %v791, %v790
  %v1001 = vpack.c.b16 %v793, %v792
  %v1002 = vpack.c.b16 %v795, %v794
  %v1003 = vpack.c.b16 %v797, %v796
  %v1004 = vpack.c.b16 %v799, %v798
  %v1005 = vpack.c.b16 %v801, %v800
  %v1006 = vpack.c.b16 %v803, %v802
  %v1007 = vpack.c.b16 %v805, %v804
  %v1008 = vpack.c.b16 %v807, %v806
  %v1009 = vpack.c.b16 %v809, %v808
  %v1010 = vpack.c.b16 %v811, %v810
  %v1011 = vpack.c.b16 %v813, %v812
  %v1012 = vpack.c.b16 %v815, %v814
  %v1013 = vpack.c.b16 %v817, %v816
  %v1014 = vpack.c.b16 %v819, %v818
  %v1015 = vpack.c.b16 %v821, %v820
  %v1016 = vpack.c.b16 %v823, %v822
  %v1017 = vpack.c.b16 %v825, %v824
  %v1018 = vpack.c.b16 %v827, %v826
  %v1019 = vpack.c.b16 %v829, %v828
  %v1020 = vpack.c.b16 %v831, %v830
  %v1021 = vpack.c.b16 %v833, %v832
  %v1022 = vpack.c.b16 %v835, %v834
  %v1023 = vpack.c.b16 %v837, %v836
  %v1024 = vpack.c.b16 %v839, %v838
  %v1025 = vpack.c.b16 %v841, %v840
  %v1026 = vpack.c.b16 %v843, %v842
  %v1027 = vpack.c.b16 %v845, %v844
  %v1028 = vpack.c.b16 %v847, %v846
  %v1029 = vpack.c.b16 %v849, %v848
  %v1030 = vpack.c.b16 %v851, %v850
  %v1031 = vpack.c.b16 %v853, %v852
  %v1032 = vpack.c.b16 %v855, %v854
  %v1033 = vpack.c.b16 %v857, %v856
  %v1034 = vpack.c.b16 %v859, %v858
  %v1035 = vpack.c.b16 %v861, %v860
  %v1036 = vpack.c.b16 %v863, %v862
  %v1037 = vpack.c.b16 %v865, %v864
  %v1038 = vpack.c.b16 %v867, %v866
  %v1039 = vpack.c.b16 %v869, %v868
  %v1040 = vpack.c.b16 %v871, %v870
  %v1041 = vpack.c.b16 %v873, %v872
  %v1042 = vpack.c.b16 %v875, %v874
  %v1043 = vpack.c.b16 %v877, %v876
  %v1044 = vpack.c.b16 %v879, %v878
  %v1045 = vpack.c.b16 %v881, %v880
  %v1046 = vpack.c.b16 %v883, %v882
  %v1047 = vpack.c.b16 %v885, %v884
  %v1048 = vpack.c.b16 %v887, %v886
  %v1049 = vpack.c.b16 %v889, %v888
  %v1050 = vpack.c.b16 %v891, %v890
  %v1051 = vpack.c.b16 %v893, %v892
  %v1052 = vpack.c.b16 %v895, %v894
  %v1053 = vpack.c.b16 %v897, %v896
  %v1054 = vpack.c.b16 %v899, %v898
  %v1055 = vpack.c.b16 %v901, %v900
  %v1056 = vpack.c.b16 %v903, %v902
  %v1057 = vpack.c.b16 %v905, %v904
  %v1058 = vpack.c.b16 %v907, %v906
  %v1059 = vpack.c.b16 %v909, %v908
  %v1060 = vpack.c.b16 %v911, %v910
  %v1061 = vpack.c.b16 %v913, %v912
  %v1062 = vpack.c.b16 %v915, %v914
  %v1063 = vpack.c.b16 %v917, %v916
  %v1064 = vpack.c.b16 %v919, %v918
  %v1065 = vpack.c.b16 %v921, %v920
  %1210 = vmatprep.subr.bf16.mxu0 0
  %1211 = vmatpush1.bf16.msra.mxu0 %v929
  %1212 = vmatprep.subr.bf16.mxu0 0
  %1213 = vmatpush1.bf16.msra.mxu0 %v928
  %1214 = vmatprep.subr.bf16.mxu0 0
  %1215 = vmatpush1.bf16.msra.mxu0 %v927
  %1216 = vmatprep.subr.bf16.mxu0 0
  %1217 = vmatpush1.bf16.msra.mxu0 %v926
  %1218 = vmatprep.subr.bf16.mxu0 0
  %1219 = vmatpush1.bf16.msra.mxu0 %v925
  %1220 = vmatprep.subr.bf16.mxu0 0
  %1221 = vmatpush1.bf16.msra.mxu0 %v924
  %1222 = vmatprep.subr.bf16.mxu0 0
  %1223 = vmatpush1.bf16.msra.mxu0 %v923
  %1224 = vmatprep.subr.bf16.mxu0 0
  %1225 = vmatpush1.bf16.msra.mxu0 %v922
  %1226 = vmatprep.subr.bf16.mxu0 0
  %1227 = vmatpush2.bf16.msra.mxu0 %v937
  %1228 = vmatprep.subr.bf16.mxu0 0
  %1229 = vmatpush2.bf16.msra.mxu0 %v936
  %1230 = vmatprep.subr.bf16.mxu0 0
  %1231 = vmatpush2.bf16.msra.mxu0 %v935
  %1232 = vmatprep.subr.bf16.mxu0 0
  %1233 = vmatpush2.bf16.msra.mxu0 %v934
  %1234 = vmatprep.subr.bf16.mxu0 0
  %1235 = vmatpush2.bf16.msra.mxu0 %v933
  %1236 = vmatprep.subr.bf16.mxu0 0
  %1237 = vmatpush2.bf16.msra.mxu0 %v932
  %1238 = vmatprep.subr.bf16.mxu0 0
  %1239 = vmatpush2.bf16.msra.mxu0 %v931
  %1240 = vmatprep.subr.bf16.mxu0 0
  %1241 = vmatpush2.bf16.msra.mxu0 %v930
  %1242 = vmatprep.mubr.bf16.mxu0 %v34
  %1243 = vmatmul.mubr.bf16.gmra.mxu0 %v33
  %v1244 = vpop.f32.mrf.mxu0
  %v1245 = vadd.f32 %v344, %v1244
  %v1246 = vpop.f32.mrf.mxu0
  %v1247 = vpop.f32.mrf.mxu0
  %v1248 = vpop.f32.mrf.mxu0
  %1249 = vdwg.mxu0
  %1250 = vmatprep.subr.bf16.mxu0 0
  %1251 = vmatpush1.bf16.msra.mxu0 %v945
  %1252 = vmatprep.subr.bf16.mxu0 0
  %1253 = vmatpush1.bf16.msra.mxu0 %v944
  %1254 = vmatprep.subr.bf16.mxu0 0
  %1255 = vmatpush1.bf16.msra.mxu0 %v943
  %1256 = vmatprep.subr.bf16.mxu0 0
  %1257 = vmatpush1.bf16.msra.mxu0 %v942
  %1258 = vmatprep.subr.bf16.mxu0 0
  %1259 = vmatpush1.bf16.msra.mxu0 %v941
  %1260 = vmatprep.subr.bf16.mxu0 0
  %1261 = vmatpush1.bf16.msra.mxu0 %v940
  %1262 = vmatprep.subr.bf16.mxu0 0
  %1263 = vmatpush1.bf16.msra.mxu0 %v939
  %1264 = vmatprep.subr.bf16.mxu0 0
  %1265 = vmatpush1.bf16.msra.mxu0 %v938
  %1266 = vmatprep.subr.bf16.mxu0 0
  %1267 = vmatpush2.bf16.msra.mxu0 %v953
  %1268 = vmatprep.subr.bf16.mxu0 0
  %1269 = vmatpush2.bf16.msra.mxu0 %v952
  %1270 = vmatprep.subr.bf16.mxu0 0
  %1271 = vmatpush2.bf16.msra.mxu0 %v951
  %1272 = vmatprep.subr.bf16.mxu0 0
  %1273 = vmatpush2.bf16.msra.mxu0 %v950
  %1274 = vmatprep.subr.bf16.mxu0 0
  %1275 = vmatpush2.bf16.msra.mxu0 %v949
  %1276 = vmatprep.subr.bf16.mxu0 0
  %1277 = vmatpush2.bf16.msra.mxu0 %v948
  %1278 = vmatprep.subr.bf16.mxu0 0
  %1279 = vmatpush2.bf16.msra.mxu0 %v947
  %1280 = vmatprep.subr.bf16.mxu0 0
  %1281 = vmatpush2.bf16.msra.mxu0 %v946
  %1282 = vmatprep.mubr.bf16.mxu0 %v36
  %1283 = vmatmul.mubr.bf16.gmra.mxu0 %v35
  %v1284 = vpop.f32.mrf.mxu0
  %v1285 = vadd.f32 %v1245, %v1284
  %v1286 = vpop.f32.mrf.mxu0
  %v1287 = vpop.f32.mrf.mxu0
  %v1288 = vpop.f32.mrf.mxu0
  %1289 = vdwg.mxu0
  %1290 = vmatprep.subr.bf16.mxu0 0
  %1291 = vmatpush1.bf16.msra.mxu0 %v961
  %1292 = vmatprep.subr.bf16.mxu0 0
  %1293 = vmatpush1.bf16.msra.mxu0 %v960
  %1294 = vmatprep.subr.bf16.mxu0 0
  %1295 = vmatpush1.bf16.msra.mxu0 %v959
  %1296 = vmatprep.subr.bf16.mxu0 0
  %1297 = vmatpush1.bf16.msra.mxu0 %v958
  %1298 = vmatprep.subr.bf16.mxu0 0
  %1299 = vmatpush1.bf16.msra.mxu0 %v957
  %1300 = vmatprep.subr.bf16.mxu0 0
  %1301 = vmatpush1.bf16.msra.mxu0 %v956
  %1302 = vmatprep.subr.bf16.mxu0 0
  %1303 = vmatpush1.bf16.msra.mxu0 %v955
  %1304 = vmatprep.subr.bf16.mxu0 0
  %1305 = vmatpush1.bf16.msra.mxu0 %v954
  %1306 = vmatprep.subr.bf16.mxu0 0
  %1307 = vmatpush2.bf16.msra.mxu0 %v969
  %1308 = vmatprep.subr.bf16.mxu0 0
  %1309 = vmatpush2.bf16.msra.mxu0 %v968
  %1310 = vmatprep.subr.bf16.mxu0 0
  %1311 = vmatpush2.bf16.msra.mxu0 %v967
  %1312 = vmatprep.subr.bf16.mxu0 0
  %1313 = vmatpush2.bf16.msra.mxu0 %v966
  %1314 = vmatprep.subr.bf16.mxu0 0
  %1315 = vmatpush2.bf16.msra.mxu0 %v965
  %1316 = vmatprep.subr.bf16.mxu0 0
  %1317 = vmatpush2.bf16.msra.mxu0 %v964
  %1318 = vmatprep.subr.bf16.mxu0 0
  %1319 = vmatpush2.bf16.msra.mxu0 %v963
  %1320 = vmatprep.subr.bf16.mxu0 0
  %1321 = vmatpush2.bf16.msra.mxu0 %v962
  %1322 = vmatprep.mubr.bf16.mxu0 %v38
  %1323 = vmatmul.mubr.bf16.gmra.mxu0 %v37
  %v1324 = vpop.f32.mrf.mxu0
  %v1325 = vadd.f32 %v1285, %v1324
  %v1326 = vpop.f32.mrf.mxu0
  %v1327 = vpop.f32.mrf.mxu0
  %v1328 = vpop.f32.mrf.mxu0
  %1329 = vdwg.mxu0
  %1330 = vmatprep.subr.bf16.mxu0 0
  %1331 = vmatpush1.bf16.msra.mxu0 %v977
  %1332 = vmatprep.subr.bf16.mxu0 0
  %1333 = vmatpush1.bf16.msra.mxu0 %v976
  %1334 = vmatprep.subr.bf16.mxu0 0
  %1335 = vmatpush1.bf16.msra.mxu0 %v975
  %1336 = vmatprep.subr.bf16.mxu0 0
  %1337 = vmatpush1.bf16.msra.mxu0 %v974
  %1338 = vmatprep.subr.bf16.mxu0 0
  %1339 = vmatpush1.bf16.msra.mxu0 %v973
  %1340 = vmatprep.subr.bf16.mxu0 0
  %1341 = vmatpush1.bf16.msra.mxu0 %v972
  %1342 = vmatprep.subr.bf16.mxu0 0
  %1343 = vmatpush1.bf16.msra.mxu0 %v971
  %1344 = vmatprep.subr.bf16.mxu0 0
  %1345 = vmatpush1.bf16.msra.mxu0 %v970
  %1346 = vmatprep.subr.bf16.mxu0 0
  %1347 = vmatpush2.bf16.msra.mxu0 %v985
  %1348 = vmatprep.subr.bf16.mxu0 0
  %1349 = vmatpush2.bf16.msra.mxu0 %v984
  %1350 = vmatprep.subr.bf16.mxu0 0
  %1351 = vmatpush2.bf16.msra.mxu0 %v983
  %1352 = vmatprep.subr.bf16.mxu0 0
  %1353 = vmatpush2.bf16.msra.mxu0 %v982
  %1354 = vmatprep.subr.bf16.mxu0 0
  %1355 = vmatpush2.bf16.msra.mxu0 %v981
  %1356 = vmatprep.subr.bf16.mxu0 0
  %1357 = vmatpush2.bf16.msra.mxu0 %v980
  %1358 = vmatprep.subr.bf16.mxu0 0
  %1359 = vmatpush2.bf16.msra.mxu0 %v979
  %1360 = vmatprep.subr.bf16.mxu0 0
  %1361 = vmatpush2.bf16.msra.mxu0 %v978
  %1362 = vmatprep.mubr.bf16.mxu0 %v40
  %1363 = vmatmul.mubr.bf16.gmra.mxu0 %v39
  %v1364 = vpop.f32.mrf.mxu0
  %v1365 = vadd.f32 %v1325, %v1364
  %v1366 = vpop.f32.mrf.mxu0
  %v1367 = vpop.f32.mrf.mxu0
  %v1368 = vpop.f32.mrf.mxu0
  %1369 = vdwg.mxu0
  %1370 = vmatprep.subr.bf16.mxu0 0
  %1371 = vmatpush1.bf16.msra.mxu0 %v993
  %1372 = vmatprep.subr.bf16.mxu0 0
  %1373 = vmatpush1.bf16.msra.mxu0 %v992
  %1374 = vmatprep.subr.bf16.mxu0 0
  %1375 = vmatpush1.bf16.msra.mxu0 %v991
  %1376 = vmatprep.subr.bf16.mxu0 0
  %1377 = vmatpush1.bf16.msra.mxu0 %v990
  %1378 = vmatprep.subr.bf16.mxu0 0
  %1379 = vmatpush1.bf16.msra.mxu0 %v989
  %1380 = vmatprep.subr.bf16.mxu0 0
  %1381 = vmatpush1.bf16.msra.mxu0 %v988
  %1382 = vmatprep.subr.bf16.mxu0 0
  %1383 = vmatpush1.bf16.msra.mxu0 %v987
  %1384 = vmatprep.subr.bf16.mxu0 0
  %1385 = vmatpush1.bf16.msra.mxu0 %v986
  %1386 = vmatprep.subr.bf16.mxu0 0
  %1387 = vmatpush2.bf16.msra.mxu0 %v1001
  %1388 = vmatprep.subr.bf16.mxu0 0
  %1389 = vmatpush2.bf16.msra.mxu0 %v1000
  %1390 = vmatprep.subr.bf16.mxu0 0
  %1391 = vmatpush2.bf16.msra.mxu0 %v999
  %1392 = vmatprep.subr.bf16.mxu0 0
  %1393 = vmatpush2.bf16.msra.mxu0 %v998
  %1394 = vmatprep.subr.bf16.mxu0 0
  %1395 = vmatpush2.bf16.msra.mxu0 %v997
  %1396 = vmatprep.subr.bf16.mxu0 0
  %1397 = vmatpush2.bf16.msra.mxu0 %v996
  %1398 = vmatprep.subr.bf16.mxu0 0
  %1399 = vmatpush2.bf16.msra.mxu0 %v995
  %1400 = vmatprep.subr.bf16.mxu0 0
  %1401 = vmatpush2.bf16.msra.mxu0 %v994
  %1402 = vmatprep.mubr.bf16.mxu0 %v42
  %1403 = vmatmul.mubr.bf16.gmra.mxu0 %v41
  %v1404 = vpop.f32.mrf.mxu0
  %v1405 = vadd.f32 %v1365, %v1404
  %v1406 = vpop.f32.mrf.mxu0
  %v1407 = vpop.f32.mrf.mxu0
  %v1408 = vpop.f32.mrf.mxu0
  %1409 = vdwg.mxu0
  %1410 = vmatprep.subr.bf16.mxu0 0
  %1411 = vmatpush1.bf16.msra.mxu0 %v1009
  %1412 = vmatprep.subr.bf16.mxu0 0
  %1413 = vmatpush1.bf16.msra.mxu0 %v1008
  %1414 = vmatprep.subr.bf16.mxu0 0
  %1415 = vmatpush1.bf16.msra.mxu0 %v1007
  %1416 = vmatprep.subr.bf16.mxu0 0
  %1417 = vmatpush1.bf16.msra.mxu0 %v1006
  %1418 = vmatprep.subr.bf16.mxu0 0
  %1419 = vmatpush1.bf16.msra.mxu0 %v1005
  %1420 = vmatprep.subr.bf16.mxu0 0
  %1421 = vmatpush1.bf16.msra.mxu0 %v1004
  %1422 = vmatprep.subr.bf16.mxu0 0
  %1423 = vmatpush1.bf16.msra.mxu0 %v1003
  %1424 = vmatprep.subr.bf16.mxu0 0
  %1425 = vmatpush1.bf16.msra.mxu0 %v1002
  %1426 = vmatprep.subr.bf16.mxu0 0
  %1427 = vmatpush2.bf16.msra.mxu0 %v1017
  %1428 = vmatprep.subr.bf16.mxu0 0
  %1429 = vmatpush2.bf16.msra.mxu0 %v1016
  %1430 = vmatprep.subr.bf16.mxu0 0
  %1431 = vmatpush2.bf16.msra.mxu0 %v1015
  %1432 = vmatprep.subr.bf16.mxu0 0
  %1433 = vmatpush2.bf16.msra.mxu0 %v1014
  %1434 = vmatprep.subr.bf16.mxu0 0
  %1435 = vmatpush2.bf16.msra.mxu0 %v1013
  %1436 = vmatprep.subr.bf16.mxu0 0
  %1437 = vmatpush2.bf16.msra.mxu0 %v1012
  %1438 = vmatprep.subr.bf16.mxu0 0
  %1439 = vmatpush2.bf16.msra.mxu0 %v1011
  %1440 = vmatprep.subr.bf16.mxu0 0
  %1441 = vmatpush2.bf16.msra.mxu0 %v1010
  %1442 = vmatprep.mubr.bf16.mxu0 %v44
  %1443 = vmatmul.mubr.bf16.gmra.mxu0 %v43
  %v1444 = vpop.f32.mrf.mxu0
  %v1445 = vadd.f32 %v1405, %v1444
  %v1446 = vpop.f32.mrf.mxu0
  %v1447 = vpop.f32.mrf.mxu0
  %v1448 = vpop.f32.mrf.mxu0
  %1449 = vdwg.mxu0
  %1450 = vmatprep.subr.bf16.mxu0 0
  %1451 = vmatpush1.bf16.msra.mxu0 %v1025
  %1452 = vmatprep.subr.bf16.mxu0 0
  %1453 = vmatpush1.bf16.msra.mxu0 %v1024
  %1454 = vmatprep.subr.bf16.mxu0 0
  %1455 = vmatpush1.bf16.msra.mxu0 %v1023
  %1456 = vmatprep.subr.bf16.mxu0 0
  %1457 = vmatpush1.bf16.msra.mxu0 %v1022
  %1458 = vmatprep.subr.bf16.mxu0 0
  %1459 = vmatpush1.bf16.msra.mxu0 %v1021
  %1460 = vmatprep.subr.bf16.mxu0 0
  %1461 = vmatpush1.bf16.msra.mxu0 %v1020
  %1462 = vmatprep.subr.bf16.mxu0 0
  %1463 = vmatpush1.bf16.msra.mxu0 %v1019
  %1464 = vmatprep.subr.bf16.mxu0 0
  %1465 = vmatpush1.bf16.msra.mxu0 %v1018
  %1466 = vmatprep.subr.bf16.mxu0 0
  %1467 = vmatpush2.bf16.msra.mxu0 %v1033
  %1468 = vmatprep.subr.bf16.mxu0 0
  %1469 = vmatpush2.bf16.msra.mxu0 %v1032
  %1470 = vmatprep.subr.bf16.mxu0 0
  %1471 = vmatpush2.bf16.msra.mxu0 %v1031
  %1472 = vmatprep.subr.bf16.mxu0 0
  %1473 = vmatpush2.bf16.msra.mxu0 %v1030
  %1474 = vmatprep.subr.bf16.mxu0 0
  %1475 = vmatpush2.bf16.msra.mxu0 %v1029
  %1476 = vmatprep.subr.bf16.mxu0 0
  %1477 = vmatpush2.bf16.msra.mxu0 %v1028
  %1478 = vmatprep.subr.bf16.mxu0 0
  %1479 = vmatpush2.bf16.msra.mxu0 %v1027
  %1480 = vmatprep.subr.bf16.mxu0 0
  %1481 = vmatpush2.bf16.msra.mxu0 %v1026
  %1482 = vmatprep.mubr.bf16.mxu0 %v46
  %1483 = vmatmul.mubr.bf16.gmra.mxu0 %v45
  %v1484 = vpop.f32.mrf.mxu0
  %v1485 = vadd.f32 %v1445, %v1484
  %v1486 = vpop.f32.mrf.mxu0
  %v1487 = vpop.f32.mrf.mxu0
  %v1488 = vpop.f32.mrf.mxu0
  %1489 = vdwg.mxu0
  %1490 = vmatprep.subr.bf16.mxu0 0
  %1491 = vmatpush1.bf16.msra.mxu0 %v1041
  %1492 = vmatprep.subr.bf16.mxu0 0
  %1493 = vmatpush1.bf16.msra.mxu0 %v1040
  %1494 = vmatprep.subr.bf16.mxu0 0
  %1495 = vmatpush1.bf16.msra.mxu0 %v1039
  %1496 = vmatprep.subr.bf16.mxu0 0
  %1497 = vmatpush1.bf16.msra.mxu0 %v1038
  %1498 = vmatprep.subr.bf16.mxu0 0
  %1499 = vmatpush1.bf16.msra.mxu0 %v1037
  %1500 = vmatprep.subr.bf16.mxu0 0
  %1501 = vmatpush1.bf16.msra.mxu0 %v1036
  %1502 = vmatprep.subr.bf16.mxu0 0
  %1503 = vmatpush1.bf16.msra.mxu0 %v1035
  %1504 = vmatprep.subr.bf16.mxu0 0
  %1505 = vmatpush1.bf16.msra.mxu0 %v1034
  %1506 = vmatprep.subr.bf16.mxu0 0
  %1507 = vmatpush2.bf16.msra.mxu0 %v1049
  %1508 = vmatprep.subr.bf16.mxu0 0
  %1509 = vmatpush2.bf16.msra.mxu0 %v1048
  %1510 = vmatprep.subr.bf16.mxu0 0
  %1511 = vmatpush2.bf16.msra.mxu0 %v1047
  %1512 = vmatprep.subr.bf16.mxu0 0
  %1513 = vmatpush2.bf16.msra.mxu0 %v1046
  %1514 = vmatprep.subr.bf16.mxu0 0
  %1515 = vmatpush2.bf16.msra.mxu0 %v1045
  %1516 = vmatprep.subr.bf16.mxu0 0
  %1517 = vmatpush2.bf16.msra.mxu0 %v1044
  %1518 = vmatprep.subr.bf16.mxu0 0
  %1519 = vmatpush2.bf16.msra.mxu0 %v1043
  %1520 = vmatprep.subr.bf16.mxu0 0
  %1521 = vmatpush2.bf16.msra.mxu0 %v1042
  %1522 = vmatprep.mubr.bf16.mxu0 %v48
  %1523 = vmatmul.mubr.bf16.gmra.mxu0 %v47
  %v1524 = vpop.f32.mrf.mxu0
  %v1525 = vadd.f32 %v1485, %v1524
  %v1526 = vpop.f32.mrf.mxu0
  %v1527 = vpop.f32.mrf.mxu0
  %v1528 = vpop.f32.mrf.mxu0
  %1529 = vdwg.mxu0
  %1530 = vmatprep.subr.bf16.mxu0 0
  %1531 = vmatpush1.bf16.msra.mxu0 %v1057
  %1532 = vmatprep.subr.bf16.mxu0 0
  %1533 = vmatpush1.bf16.msra.mxu0 %v1056
  %1534 = vmatprep.subr.bf16.mxu0 0
  %1535 = vmatpush1.bf16.msra.mxu0 %v1055
  %1536 = vmatprep.subr.bf16.mxu0 0
  %1537 = vmatpush1.bf16.msra.mxu0 %v1054
  %1538 = vmatprep.subr.bf16.mxu0 0
  %1539 = vmatpush1.bf16.msra.mxu0 %v1053
  %1540 = vmatprep.subr.bf16.mxu0 0
  %1541 = vmatpush1.bf16.msra.mxu0 %v1052
  %1542 = vmatprep.subr.bf16.mxu0 0
  %1543 = vmatpush1.bf16.msra.mxu0 %v1051
  %1544 = vmatprep.subr.bf16.mxu0 0
  %1545 = vmatpush1.bf16.msra.mxu0 %v1050
  %1546 = vmatprep.subr.bf16.mxu0 0
  %1547 = vmatpush2.bf16.msra.mxu0 %v1065
  %1548 = vmatprep.subr.bf16.mxu0 0
  %1549 = vmatpush2.bf16.msra.mxu0 %v1064
  %1550 = vmatprep.subr.bf16.mxu0 0
  %1551 = vmatpush2.bf16.msra.mxu0 %v1063
  %1552 = vmatprep.subr.bf16.mxu0 0
  %1553 = vmatpush2.bf16.msra.mxu0 %v1062
  %1554 = vmatprep.subr.bf16.mxu0 0
  %1555 = vmatpush2.bf16.msra.mxu0 %v1061
  %1556 = vmatprep.subr.bf16.mxu0 0
  %1557 = vmatpush2.bf16.msra.mxu0 %v1060
  %1558 = vmatprep.subr.bf16.mxu0 0
  %1559 = vmatpush2.bf16.msra.mxu0 %v1059
  %1560 = vmatprep.subr.bf16.mxu0 0
  %1561 = vmatpush2.bf16.msra.mxu0 %v1058
  %1562 = vmatprep.mubr.bf16.mxu0 %v50
  %1563 = vmatmul.mubr.bf16.gmra.mxu0 %v49
  %v1564 = vpop.f32.mrf.mxu0
  %v1565 = vadd.f32 %v1525, %v1564
  %v1566 = vpop.f32.mrf.mxu0
  %v1567 = vpop.f32.mrf.mxu0
  %v1568 = vpop.f32.mrf.mxu0
  %1569 = vdwg.mxu0
  %1570 = vst [vmem:[%s3] sm:$0xff] %v1565
  // Predicated region
  $region14: #{fashion_cnn_forward.3} parent=0 // pred_check
    _
  $region15: #{fashion_cnn_forward.3} parent=0 // pred_check_branch
    %1572 = sbr.rel (0) target = $region17
  $region16: #{fashion_cnn_forward.3} parent=0 // pred_region
    _
  $region17: #{fashion_cnn_forward.3} parent=0 // pred_fallthru
    _
  // Predicated region
  $region18: #{fashion_cnn_forward.3} parent=0 // pred_check
    _
  $region19: #{fashion_cnn_forward.3} parent=0 // pred_check_branch
    %1574 = sbr.rel (0) target = $region21
  $region20: #{fashion_cnn_forward.3} parent=0 // pred_region
    _
  $region21: #{fashion_cnn_forward.3} parent=0 // pred_fallthru
    _

// kernel: fashion_cnn_forward.2
$region0: #{fashion_cnn_forward.2}
  #allocation0 [shape = 'u32[]', space=smem, size = 0x4, offset = 0x4, fixed_abs, tag = 'smem constant byte address 0x4 - core index']
  #allocation1 [shape = 'u32[144,128]{1,0:T(1,128)}', space=vmem, size = 0x12000, scoped, tag = 'internal scratch']
  #allocation2 [shape = 'f32[200,32]{1,0:T(8,128)}', space=vmem, size = 0x19000, scoped, tag = 'scratch operand']
  #allocation3 [shape = 'f32[168,64]{1,0:T(8,128)}', space=vmem, size = 0x15000, scoped, tag = 'scratch operand']
  %s0 = inlined_call_operand.vmem [shape: bf16[2,4,196,9], index: 0, kind: input, shape index: {}]
  %s1 = inlined_call_operand.vmem [shape: bf16[9,32], index: 1, kind: input, shape index: {}]
  %s2 = inlined_call_operand.vmem [shape: f32[1,32], index: 2, kind: input, shape index: {}]
  %s3 = inlined_call_operand.vmem [shape: bf16[9,32,64], index: 3, kind: input, shape index: {}]
  %s4 = inlined_call_operand.vmem [shape: f32[1,64], index: 4, kind: input, shape index: {}]
  %s5 = inlined_call_operand.vmem [shape: f32[36,151], index: 5, kind: input, shape index: {}]
  %s6 = inlined_call_operand.vmem [shape: f32[2,36,64], index: 6, kind: output, shape index: {}]
  %s7 = sld [smem:[#allocation0]]
  $region57: #{fashion_cnn_forward.2} parent=0
    _
  %s9 = ssub.s32 1, %s7
  %s10 = scalar_select 0, %s9, %s7
  loop: start=0, step=1, limit=4
  $region2: #{fashion_cnn_forward.2} parent=0 // loop_pre_header
    _
  $region3: #{fashion_cnn_forward.2} parent=0 // loop_header
    %s12 = sphi 0, %s16
    %p13 = scmp.ge.s32.totalorder %s12, 4
    %s22 = sphi 0, %s24
    %s25 = sphi 0, %s22
    %s26 = sphi 0, %s25
    %s42 = sphi 0, %s26
    %s46 = sphi 0, %s46
    %s48 = sphi 0, %s46
    %s49 = sphi 0, %s48
    %s63 = sphi 0, %s49
    %s67 = sphi 0, %s67
    %s69 = sphi 0, %s67
    %s70 = sphi 0, %s69
    %s84 = sphi 0, %s70
    %s88 = sphi 0, %s88
    %s90 = sphi 0, %s88
    %s91 = sphi 0, %s90
    %s105 = sphi 0, %s91
    %s109 = sphi 0, %s109
    %s111 = sphi 0, %s109
    %s112 = sphi 0, %s111
    %s126 = sphi 0, %s112
    %s130 = sphi 0, %s130
    %s132 = sphi 0, %s130
    %s133 = sphi 0, %s132
    %s147 = sphi 0, %s133
    %s153 = sphi 0, %s155
    %s156 = sphi 0, %s153
    %s157 = sphi 0, %s156
    %s173 = sphi 0, %s157
  $region4: #{fashion_cnn_forward.2} parent=0 // loop_header_branch
    %15 = sbr.rel (%p13) target = $region8
  $region5: #{fashion_cnn_forward.2} parent=0 // loop_body
    %s17 = ssub.s32 %s12, 1
    %s18 = ssub.s32 %s12, 2
    %s19 = sadd.s32 %s12, 1
    %s20 = ssub.s32 %s12, %s19
    %p21 = scmp.eq.s32.totalorder %s20, 0
    %s23 = sadd.s32 %s22, 1
    %s24 = scalar_select %p21, %s22, %s23
    %p27 = pneg %p21
    %p28 = scmp.eq.s32.totalorder %s12, 1
    %p29 = por %p27, %p28
    %p30 = scmp.ne.s32.totalorder %s22, %s25
    %p31 = scmp.eq.s32.totalorder %s12, 0
    %p32 = por %p30, %p31
    %p33 = scmp.ne.s32.totalorder %s22, %s25
    %p34 = scmp.eq.s32.totalorder %s17, 1
    %p35 = por %p33, %p34
    %p36 = scmp.ne.s32.totalorder %s25, %s26
    %p37 = scmp.eq.s32.totalorder %s17, 0
    %p38 = por %p36, %p37
    %p39 = scmp.ne.s32.totalorder %s25, %s26
    %p40 = scmp.eq.s32.totalorder %s18, 1
    %p41 = por %p39, %p40
    %p43 = scmp.ne.s32.totalorder %s26, %s42
    %p44 = scmp.eq.s32.totalorder %s18, 0
    %p45 = por %p43, %p44
    %s47 = sadd.s32 %s46, 1
    %p50 = scmp.eq.s32.totalorder %s12, 1
    %p51 = scmp.ne.s32.totalorder %s46, %s48
    %p52 = scmp.eq.s32.totalorder %s12, 0
    %p53 = por %p51, %p52
    %p54 = scmp.ne.s32.totalorder %s46, %s48
    %p55 = scmp.eq.s32.totalorder %s17, 1
    %p56 = por %p54, %p55
    %p57 = scmp.ne.s32.totalorder %s48, %s49
    %p58 = scmp.eq.s32.totalorder %s17, 0
    %p59 = por %p57, %p58
    %p60 = scmp.ne.s32.totalorder %s48, %s49
    %p61 = scmp.eq.s32.totalorder %s18, 1
    %p62 = por %p60, %p61
    %p64 = scmp.ne.s32.totalorder %s49, %s63
    %p65 = scmp.eq.s32.totalorder %s18, 0
    %p66 = por %p64, %p65
    %s68 = sadd.s32 %s67, 1
    %p71 = scmp.eq.s32.totalorder %s12, 1
    %p72 = scmp.ne.s32.totalorder %s67, %s69
    %p73 = scmp.eq.s32.totalorder %s12, 0
    %p74 = por %p72, %p73
    %p75 = scmp.ne.s32.totalorder %s67, %s69
    %p76 = scmp.eq.s32.totalorder %s17, 1
    %p77 = por %p75, %p76
    %p78 = scmp.ne.s32.totalorder %s69, %s70
    %p79 = scmp.eq.s32.totalorder %s17, 0
    %p80 = por %p78, %p79
    %p81 = scmp.ne.s32.totalorder %s69, %s70
    %p82 = scmp.eq.s32.totalorder %s18, 1
    %p83 = por %p81, %p82
    %p85 = scmp.ne.s32.totalorder %s70, %s84
    %p86 = scmp.eq.s32.totalorder %s18, 0
    %p87 = por %p85, %p86
    %s89 = sadd.s32 %s88, 1
    %p92 = scmp.eq.s32.totalorder %s12, 1
    %p93 = scmp.ne.s32.totalorder %s88, %s90
    %p94 = scmp.eq.s32.totalorder %s12, 0
    %p95 = por %p93, %p94
    %p96 = scmp.ne.s32.totalorder %s88, %s90
    %p97 = scmp.eq.s32.totalorder %s17, 1
    %p98 = por %p96, %p97
    %p99 = scmp.ne.s32.totalorder %s90, %s91
    %p100 = scmp.eq.s32.totalorder %s17, 0
    %p101 = por %p99, %p100
    %p102 = scmp.ne.s32.totalorder %s90, %s91
    %p103 = scmp.eq.s32.totalorder %s18, 1
    %p104 = por %p102, %p103
    %p106 = scmp.ne.s32.totalorder %s91, %s105
    %p107 = scmp.eq.s32.totalorder %s18, 0
    %p108 = por %p106, %p107
    %s110 = sadd.s32 %s109, 1
    %p113 = scmp.eq.s32.totalorder %s12, 1
    %p114 = scmp.ne.s32.totalorder %s109, %s111
    %p115 = scmp.eq.s32.totalorder %s12, 0
    %p116 = por %p114, %p115
    %p117 = scmp.ne.s32.totalorder %s109, %s111
    %p118 = scmp.eq.s32.totalorder %s17, 1
    %p119 = por %p117, %p118
    %p120 = scmp.ne.s32.totalorder %s111, %s112
    %p121 = scmp.eq.s32.totalorder %s17, 0
    %p122 = por %p120, %p121
    %p123 = scmp.ne.s32.totalorder %s111, %s112
    %p124 = scmp.eq.s32.totalorder %s18, 1
    %p125 = por %p123, %p124
    %p127 = scmp.ne.s32.totalorder %s112, %s126
    %p128 = scmp.eq.s32.totalorder %s18, 0
    %p129 = por %p127, %p128
    %s131 = sadd.s32 %s130, 1
    %p134 = scmp.eq.s32.totalorder %s12, 1
    %p135 = scmp.ne.s32.totalorder %s130, %s132
    %p136 = scmp.eq.s32.totalorder %s12, 0
    %p137 = por %p135, %p136
    %p138 = scmp.ne.s32.totalorder %s130, %s132
    %p139 = scmp.eq.s32.totalorder %s17, 1
    %p140 = por %p138, %p139
    %p141 = scmp.ne.s32.totalorder %s132, %s133
    %p142 = scmp.eq.s32.totalorder %s17, 0
    %p143 = por %p141, %p142
    %p144 = scmp.ne.s32.totalorder %s132, %s133
    %p145 = scmp.eq.s32.totalorder %s18, 1
    %p146 = por %p144, %p145
    %p148 = scmp.ne.s32.totalorder %s133, %s147
    %p149 = scmp.eq.s32.totalorder %s18, 0
    %p150 = por %p148, %p149
    %s151 = ssub.s32 %s12, %s19
    %p152 = scmp.eq.s32.totalorder %s151, 0
    %s154 = sadd.s32 %s153, 1
    %s155 = scalar_select %p152, %s153, %s154
    %p158 = pneg %p152
    %p159 = scmp.eq.s32.totalorder %s12, 1
    %p160 = por %p158, %p159
    %p161 = scmp.ne.s32.totalorder %s153, %s156
    %p162 = scmp.eq.s32.totalorder %s12, 0
    %p163 = por %p161, %p162
    %p164 = scmp.ne.s32.totalorder %s153, %s156
    %p165 = scmp.eq.s32.totalorder %s17, 1
    %p166 = por %p164, %p165
    %p167 = scmp.ne.s32.totalorder %s156, %s157
    %p168 = scmp.eq.s32.totalorder %s17, 0
    %p169 = por %p167, %p168
    %p170 = scmp.ne.s32.totalorder %s156, %s157
    %p171 = scmp.eq.s32.totalorder %s18, 1
    %p172 = por %p170, %p171
    %p174 = scmp.ne.s32.totalorder %s157, %s173
    %p175 = scmp.eq.s32.totalorder %s18, 0
    %p176 = por %p174, %p175
    %p177 = scmp.le.s32.totalorder 1, %s12
    %p178 = scmp.lt.s32.totalorder %s12, 3
    %p179 = pnand %p177, %p178
    %p180 = pneg %p179
    // Predicated region
    $region9: #{fashion_cnn_forward.2} parent=5 // pred_check
      _
    $region10: #{fashion_cnn_forward.2} parent=5 // pred_check_branch
      %182 = sbr.rel (%p179) target = $region12
    $region11: #{fashion_cnn_forward.2} parent=5 // pred_region
      %s183 = ssub.s32 %s12, 1
      // Predicated region
      $region13: #{fashion_cnn_forward.2} parent=11 // pred_check
        %p184 = pneg %p59
      $region14: #{fashion_cnn_forward.2} parent=11 // pred_check_branch
        %186 = sbr.rel (%p184) target = $region16
      $region15: #{fashion_cnn_forward.2} parent=11 // pred_region
        _
      $region16: #{fashion_cnn_forward.2} parent=11 // pred_fallthru
        _
      // Predicated region
      $region17: #{fashion_cnn_forward.2} parent=11 // pred_check
        %p187 = pneg %p80
      $region18: #{fashion_cnn_forward.2} parent=11 // pred_check_branch
        %189 = sbr.rel (%p187) target = $region20
      $region19: #{fashion_cnn_forward.2} parent=11 // pred_region
        _
      $region20: #{fashion_cnn_forward.2} parent=11 // pred_fallthru
        _
      // Predicated region
      $region21: #{fashion_cnn_forward.2} parent=11 // pred_check
        %p190 = pneg %p101
      $region22: #{fashion_cnn_forward.2} parent=11 // pred_check_branch
        %192 = sbr.rel (%p190) target = $region24
      $region23: #{fashion_cnn_forward.2} parent=11 // pred_region
        _
      $region24: #{fashion_cnn_forward.2} parent=11 // pred_fallthru
        _
      // Predicated region
      $region25: #{fashion_cnn_forward.2} parent=11 // pred_check
        %p193 = pneg %p122
      $region26: #{fashion_cnn_forward.2} parent=11 // pred_check_branch
        %195 = sbr.rel (%p193) target = $region28
      $region27: #{fashion_cnn_forward.2} parent=11 // pred_region
        _
      $region28: #{fashion_cnn_forward.2} parent=11 // pred_fallthru
        _
      // Predicated region
      $region29: #{fashion_cnn_forward.2} parent=11 // pred_check
        %p196 = pneg %p143
      $region30: #{fashion_cnn_forward.2} parent=11 // pred_check_branch
        %198 = sbr.rel (%p196) target = $region32
      $region31: #{fashion_cnn_forward.2} parent=11 // pred_region
        _
      $region32: #{fashion_cnn_forward.2} parent=11 // pred_fallthru
        _
    $region12: #{fashion_cnn_forward.2} parent=5 // pred_fallthru
      _
    %p199 = scmp.lt.s32.totalorder %s12, 2
    // Predicated region
    $region33: #{fashion_cnn_forward.2} parent=5 // pred_check
      %p200 = pneg %p199
    $region34: #{fashion_cnn_forward.2} parent=5 // pred_check_branch
      %202 = sbr.rel (%p200) target = $region36
    $region35: #{fashion_cnn_forward.2} parent=5 // pred_region
      // Predicated region
      $region37: #{fashion_cnn_forward.2} parent=35 // pred_check
        %p203 = pneg %p32
      $region38: #{fashion_cnn_forward.2} parent=35 // pred_check_branch
        %205 = sbr.rel (%p203) target = $region40
      $region39: #{fashion_cnn_forward.2} parent=35 // pred_region
        %p206 = scmp.lt.s32.totalorder %s12, 1
        %s207 = scalar_select %p206, %s12, 1
        %s208 = smul.addr %s207, 100
        %s209 = smul.addr %s208, 4
        %s210 = scalar_lea.vmem %s0, %s209
      $region40: #{fashion_cnn_forward.2} parent=35 // pred_fallthru
        _
    $region36: #{fashion_cnn_forward.2} parent=5 // pred_fallthru
      _
    %p211 = scmp.le.s32.totalorder 1, %s12
    %p212 = scmp.lt.s32.totalorder %s12, 3
    %p213 = pnand %p211, %p212
    %p214 = pneg %p213
    // Predicated region
    $region41: #{fashion_cnn_forward.2} parent=5 // pred_check
      _
    $region42: #{fashion_cnn_forward.2} parent=5 // pred_check_branch
      %216 = sbr.rel (%p213) target = $region44
    $region43: #{fashion_cnn_forward.2} parent=5 // pred_region
      %s217 = ssub.s32 %s12, 1
      %p218 = scmp.lt.s32.totalorder %s17, 1
      %s219 = scalar_select %p218, %s17, 1
      %s220 = smul.addr %s219, 100
      %s221 = smul.addr %s220, 4
      %s222 = scalar_lea.vmem %s0, %s221
      %p223 = pneg %p38
      %p224 = pneg %p35
      %p225 = pneg %p59
      %p226 = pneg %p56
      %p227 = pneg %p80
      %p228 = pneg %p77
      %p229 = pneg %p101
      %p230 = pneg %p98
      %p231 = pneg %p122
      %p232 = pneg %p119
      %p233 = pneg %p143
      %p234 = pneg %p140
      %p235 = pneg %p169
      %p236 = pneg %p166
      %p237 = scmp.lt.s32.totalorder %s17, 1
      %s238 = scalar_select %p237, %s17, 1
      %s239 = smul.addr %s238, 5
      %s240 = smul.addr %s239, 8
      %s241 = scalar_lea.vmem %s6, %s240
      %p242 = scmp.lt.s32.totalorder %s17, 1
      %s243 = scalar_select %p242, %s17, 1
      %s244 = smul.addr %s243, 100
      %s245 = smul.addr %s244, 4
      %s246 = scalar_lea.vmem %s0, %s245
      %p247 = scmp.lt.s32.totalorder %s17, 1
      %s248 = scalar_select %p247, %s17, 1
      %s249 = smul.addr %s248, 5
      %s250 = smul.addr %s249, 8
      %s251 = scalar_lea.vmem %s6, %s250
      %v253 = vld [vmem:[%s1] sm:$0xf]
      %v254 = vld [vmem:[%s1 + $0x4] sm:$0x1]
      %v255 = vld [vmem:[%s246] sm:$0xf]
      %v256 = vld [vmem:[%s246 + $0x4] sm:$0xf]
      %v257 = vld [vmem:[%s246 + $0x8] sm:$0xf]
      %v258 = vld [vmem:[%s246 + $0xc] sm:$0xf]
      %v259 = vld [vmem:[%s246 + $0x10] sm:$0xf]
      %v260 = vld [vmem:[%s246 + $0x14] sm:$0xf]
      %v261 = vld [vmem:[%s246 + $0x18] sm:$0xf]
      %v262 = vld [vmem:[%s246 + $0x1c] sm:$0xf]
      %v263 = vld [vmem:[%s246 + $0x20] sm:$0xf]
      %v264 = vld [vmem:[%s246 + $0x24] sm:$0xf]
      %v265 = vld [vmem:[%s246 + $0x28] sm:$0xf]
      %v266 = vld [vmem:[%s246 + $0x2c] sm:$0xf]
      %v267 = vld [vmem:[%s246 + $0x30] sm:$0xf]
      %v268 = vld [vmem:[%s246 + $0x34] sm:$0xf]
      %v269 = vld [vmem:[%s246 + $0x38] sm:$0xf]
      %v270 = vld [vmem:[%s246 + $0x3c] sm:$0xf]
      %v271 = vld [vmem:[%s246 + $0x40] sm:$0xf]
      %v272 = vld [vmem:[%s246 + $0x44] sm:$0xf]
      %v273 = vld [vmem:[%s246 + $0x48] sm:$0xf]
      %v274 = vld [vmem:[%s246 + $0x4c] sm:$0xf]
      %v275 = vld [vmem:[%s246 + $0x50] sm:$0xf]
      %v276 = vld [vmem:[%s246 + $0x54] sm:$0xf]
      %v277 = vld [vmem:[%s246 + $0x58] sm:$0xf]
      %v278 = vld [vmem:[%s246 + $0x5c] sm:$0xf]
      %v279 = vld [vmem:[%s246 + $0x60] sm:$0x3]
      %v305 = vunpack.c.l.b16 %v255
      %v306 = vunpack.c.l.b16 %v256
      %v307 = vunpack.c.l.b16 %v257
      %v308 = vunpack.c.l.b16 %v258
      %v309 = vunpack.c.l.b16 %v259
      %v310 = vunpack.c.l.b16 %v260
      %v311 = vunpack.c.l.b16 %v261
      %v312 = vunpack.c.l.b16 %v262
      %v313 = vunpack.c.l.b16 %v263
      %v314 = vunpack.c.l.b16 %v264
      %v315 = vunpack.c.l.b16 %v265
      %v316 = vunpack.c.l.b16 %v266
      %v317 = vunpack.c.l.b16 %v267
      %v318 = vunpack.c.l.b16 %v268
      %v319 = vunpack.c.l.b16 %v269
      %v320 = vunpack.c.l.b16 %v270
      %v321 = vunpack.c.l.b16 %v271
      %v322 = vunpack.c.l.b16 %v272
      %v323 = vunpack.c.l.b16 %v273
      %v324 = vunpack.c.l.b16 %v274
      %v325 = vunpack.c.l.b16 %v275
      %v326 = vunpack.c.l.b16 %v276
      %v327 = vunpack.c.l.b16 %v277
      %v328 = vunpack.c.l.b16 %v278
      %v329 = vunpack.c.l.b16 %v279
      %v330 = vpack.c.b16 %v306, %v305
      %v331 = vpack.c.b16 %v308, %v307
      %v332 = vpack.c.b16 %v310, %v309
      %v333 = vpack.c.b16 %v312, %v311
      %v334 = vpack.c.b16 %v314, %v313
      %v335 = vpack.c.b16 %v316, %v315
      %v336 = vpack.c.b16 %v318, %v317
      %v337 = vpack.c.b16 %v320, %v319
      %v338 = vpack.c.b16 %v322, %v321
      %v339 = vpack.c.b16 %v324, %v323
      %v340 = vpack.c.b16 %v326, %v325
      %v341 = vpack.c.b16 %v328, %v327
      %v342 = vpack.c.b16 %v329, %v329
      %v345 = vunpack.c.l.b16 %v253
      %v346 = vunpack.c.l.b16 %v254
      %v347 = vpack.c.b16 %v346, %v345
      %vm348 = vcmask 72704
      %v350 = vsel %vm348, %v330, 0
      %v353 = vsel %vm348, %v331, 0
      %v356 = vsel %vm348, %v332, 0
      %v359 = vsel %vm348, %v333, 0
      %v362 = vsel %vm348, %v334, 0
      %v365 = vsel %vm348, %v335, 0
      %v368 = vsel %vm348, %v336, 0
      %v371 = vsel %vm348, %v337, 0
      %v374 = vsel %vm348, %v338, 0
      %v377 = vsel %vm348, %v339, 0
      %v380 = vsel %vm348, %v340, 0
      %v383 = vsel %vm348, %v341, 0
      %v386 = vsel %vm348, %v342, 0
      %vm388 = vcmask 1043456
      %vm389 = vcmask 1044480
      %v390 = vsel %vm388, 4294967295, 65535
      %v391 = vsel %vm389, %v390, 0
      %v393 = vand.u32 %v347, %v391
      %395 = vmatprep.subr.bf16.mxu0 0
      %396 = vmatpush1.bf16.msra.mxu0 0
      %397 = vmatprep.subr.bf16.mxu0 0
      %398 = vmatpush1.bf16.msra.mxu0 0
      %399 = vmatprep.subr.bf16.mxu0 0
      %400 = vmatpush1.bf16.msra.mxu0 0
      %401 = vmatprep.subr.bf16.mxu0 0
      %402 = vmatpush1.bf16.msra.mxu0 0
      %403 = vmatprep.subr.bf16.mxu0 0
      %404 = vmatpush1.bf16.msra.mxu0 0
      %405 = vmatprep.subr.bf16.mxu0 0
      %406 = vmatpush1.bf16.msra.mxu0 0
      %407 = vmatprep.subr.bf16.mxu0 0
      %408 = vmatpush1.bf16.msra.mxu0 0
      %409 = vmatprep.subr.bf16.mxu0 0
      %410 = vmatpush1.bf16.msra.mxu0 %v393
      %411 = vmatprep.subr.bf16.mxu0 0
      %412 = vmatpush2.bf16.msra.mxu0 0
      %413 = vmatprep.subr.bf16.mxu0 0
      %414 = vmatpush2.bf16.msra.mxu0 0
      %415 = vmatprep.subr.bf16.mxu0 0
      %416 = vmatpush2.bf16.msra.mxu0 0
      %417 = vmatprep.subr.bf16.mxu0 0
      %418 = vmatpush2.bf16.msra.mxu0 0
      %419 = vmatprep.subr.bf16.mxu0 0
      %420 = vmatpush2.bf16.msra.mxu0 0
      %421 = vmatprep.subr.bf16.mxu0 0
      %422 = vmatpush2.bf16.msra.mxu0 0
      %423 = vmatprep.subr.bf16.mxu0 0
      %424 = vmatpush2.bf16.msra.mxu0 0
      %425 = vmatprep.subr.bf16.mxu0 0
      %426 = vmatpush2.bf16.msra.mxu0 0
      %427 = vmatprep.mubr.bf16.mxu0 0
      %428 = vmatmul.mubr.bf16.gmra.mxu0 %v350
      %v429 = vpop.f32.mrf.mxu0
      %v430 = vadd.f32 0.0, %v429
      %v431 = vpop.f32.mrf.mxu0
      %v432 = vpop.f32.mrf.mxu0
      %v433 = vadd.f32 0.0, %v432
      %v434 = vpop.f32.mrf.mxu0
      %435 = vmatprep.mubr.bf16.mxu0 0
      %436 = vmatmul.mubr.bf16.gmra.mxu0 %v353
      %v437 = vpop.f32.mrf.mxu0
      %v438 = vadd.f32 0.0, %v437
      %v439 = vpop.f32.mrf.mxu0
      %v440 = vpop.f32.mrf.mxu0
      %v441 = vadd.f32 0.0, %v440
      %v442 = vpop.f32.mrf.mxu0
      %443 = vmatprep.mubr.bf16.mxu0 0
      %444 = vmatmul.mubr.bf16.gmra.mxu0 %v356
      %v445 = vpop.f32.mrf.mxu0
      %v446 = vadd.f32 0.0, %v445
      %v447 = vpop.f32.mrf.mxu0
      %v448 = vpop.f32.mrf.mxu0
      %v449 = vadd.f32 0.0, %v448
      %v450 = vpop.f32.mrf.mxu0
      %451 = vmatprep.mubr.bf16.mxu0 0
      %452 = vmatmul.mubr.bf16.gmra.mxu0 %v359
      %v453 = vpop.f32.mrf.mxu0
      %v454 = vadd.f32 0.0, %v453
      %v455 = vpop.f32.mrf.mxu0
      %v456 = vpop.f32.mrf.mxu0
      %v457 = vadd.f32 0.0, %v456
      %v458 = vpop.f32.mrf.mxu0
      %459 = vmatprep.mubr.bf16.mxu0 0
      %460 = vmatmul.mubr.bf16.gmra.mxu0 %v362
      %v461 = vpop.f32.mrf.mxu0
      %v462 = vadd.f32 0.0, %v461
      %v463 = vpop.f32.mrf.mxu0
      %v464 = vpop.f32.mrf.mxu0
      %v465 = vadd.f32 0.0, %v464
      %v466 = vpop.f32.mrf.mxu0
      %467 = vmatprep.mubr.bf16.mxu0 0
      %468 = vmatmul.mubr.bf16.gmra.mxu0 %v365
      %v469 = vpop.f32.mrf.mxu0
      %v470 = vadd.f32 0.0, %v469
      %v471 = vpop.f32.mrf.mxu0
      %v472 = vpop.f32.mrf.mxu0
      %v473 = vadd.f32 0.0, %v472
      %v474 = vpop.f32.mrf.mxu0
      %475 = vmatprep.mubr.bf16.mxu0 0
      %476 = vmatmul.mubr.bf16.gmra.mxu0 %v368
      %v477 = vpop.f32.mrf.mxu0
      %v478 = vadd.f32 0.0, %v477
      %v479 = vpop.f32.mrf.mxu0
      %v480 = vpop.f32.mrf.mxu0
      %v481 = vadd.f32 0.0, %v480
      %v482 = vpop.f32.mrf.mxu0
      %483 = vmatprep.mubr.bf16.mxu0 0
      %484 = vmatmul.mubr.bf16.gmra.mxu0 %v371
      %v485 = vpop.f32.mrf.mxu0
      %v486 = vadd.f32 0.0, %v485
      %v487 = vpop.f32.mrf.mxu0
      %v488 = vpop.f32.mrf.mxu0
      %v489 = vadd.f32 0.0, %v488
      %v490 = vpop.f32.mrf.mxu0
      %491 = vmatprep.mubr.bf16.mxu0 0
      %492 = vmatmul.mubr.bf16.gmra.mxu0 %v374
      %v493 = vpop.f32.mrf.mxu0
      %v494 = vadd.f32 0.0, %v493
      %v495 = vpop.f32.mrf.mxu0
      %v496 = vpop.f32.mrf.mxu0
      %v497 = vadd.f32 0.0, %v496
      %v498 = vpop.f32.mrf.mxu0
      %499 = vmatprep.mubr.bf16.mxu0 0
      %500 = vmatmul.mubr.bf16.gmra.mxu0 %v377
      %v501 = vpop.f32.mrf.mxu0
      %v502 = vadd.f32 0.0, %v501
      %v503 = vpop.f32.mrf.mxu0
      %v504 = vpop.f32.mrf.mxu0
      %v505 = vadd.f32 0.0, %v504
      %v506 = vpop.f32.mrf.mxu0
      %507 = vmatprep.mubr.bf16.mxu0 0
      %508 = vmatmul.mubr.bf16.gmra.mxu0 %v380
      %v509 = vpop.f32.mrf.mxu0
      %v510 = vadd.f32 0.0, %v509
      %v511 = vpop.f32.mrf.mxu0
      %v512 = vpop.f32.mrf.mxu0
      %v513 = vadd.f32 0.0, %v512
      %v514 = vpop.f32.mrf.mxu0
      %515 = vmatprep.mubr.bf16.mxu0 0
      %516 = vmatmul.mubr.bf16.gmra.mxu0 %v383
      %v517 = vpop.f32.mrf.mxu0
      %v518 = vadd.f32 0.0, %v517
      %v519 = vpop.f32.mrf.mxu0
      %v520 = vpop.f32.mrf.mxu0
      %v521 = vadd.f32 0.0, %v520
      %v522 = vpop.f32.mrf.mxu0
      %523 = vmatprep.mubr.bf16.mxu0 0
      %524 = vmatmul.mubr.bf16.gmra.mxu0 %v386
      %v525 = vpop.f32.mrf.mxu0
      %v526 = vadd.f32 0.0, %v525
      %v527 = vpop.f32.mrf.mxu0
      %v528 = vpop.f32.mrf.mxu0
      %v529 = vpop.f32.mrf.mxu0
      %530 = vdwg.mxu0
      %s531 = scalar_lea.vmem %s246, 100
      %v532 = vld [vmem:[%s531] sm:$0xf]
      %v533 = vld [vmem:[%s531 + $0x4] sm:$0xf]
      %v534 = vld [vmem:[%s531 + $0x8] sm:$0xf]
      %v535 = vld [vmem:[%s531 + $0xc] sm:$0xf]
      %v536 = vld [vmem:[%s531 + $0x10] sm:$0xf]
      %v537 = vld [vmem:[%s531 + $0x14] sm:$0xf]
      %v538 = vld [vmem:[%s531 + $0x18] sm:$0xf]
      %v539 = vld [vmem:[%s531 + $0x1c] sm:$0xf]
      %v540 = vld [vmem:[%s531 + $0x20] sm:$0xf]
      %v541 = vld [vmem:[%s531 + $0x24] sm:$0xf]
      %v542 = vld [vmem:[%s531 + $0x28] sm:$0xf]
      %v543 = vld [vmem:[%s531 + $0x2c] sm:$0xf]
      %v544 = vld [vmem:[%s531 + $0x30] sm:$0xf]
      %v545 = vld [vmem:[%s531 + $0x34] sm:$0xf]
      %v546 = vld [vmem:[%s531 + $0x38] sm:$0xf]
      %v547 = vld [vmem:[%s531 + $0x3c] sm:$0xf]
      %v548 = vld [vmem:[%s531 + $0x40] sm:$0xf]
      %v549 = vld [vmem:[%s531 + $0x44] sm:$0xf]
      %v550 = vld [vmem:[%s531 + $0x48] sm:$0xf]
      %v551 = vld [vmem:[%s531 + $0x4c] sm:$0xf]
      %v552 = vld [vmem:[%s531 + $0x50] sm:$0xf]
      %v553 = vld [vmem:[%s531 + $0x54] sm:$0xf]
      %v554 = vld [vmem:[%s531 + $0x58] sm:$0xf]
      %v555 = vld [vmem:[%s531 + $0x5c] sm:$0xf]
      %v556 = vld [vmem:[%s531 + $0x60] sm:$0x3]
      %v582 = vunpack.c.l.b16 %v532
      %v583 = vunpack.c.l.b16 %v533
      %v584 = vunpack.c.l.b16 %v534
      %v585 = vunpack.c.l.b16 %v535
      %v586 = vunpack.c.l.b16 %v536
      %v587 = vunpack.c.l.b16 %v537
      %v588 = vunpack.c.l.b16 %v538
      %v589 = vunpack.c.l.b16 %v539
      %v590 = vunpack.c.l.b16 %v540
      %v591 = vunpack.c.l.b16 %v541
      %v592 = vunpack.c.l.b16 %v542
      %v593 = vunpack.c.l.b16 %v543
      %v594 = vunpack.c.l.b16 %v544
      %v595 = vunpack.c.l.b16 %v545
      %v596 = vunpack.c.l.b16 %v546
      %v597 = vunpack.c.l.b16 %v547
      %v598 = vunpack.c.l.b16 %v548
      %v599 = vunpack.c.l.b16 %v549
      %v600 = vunpack.c.l.b16 %v550
      %v601 = vunpack.c.l.b16 %v551
      %v602 = vunpack.c.l.b16 %v552
      %v603 = vunpack.c.l.b16 %v553
      %v604 = vunpack.c.l.b16 %v554
      %v605 = vunpack.c.l.b16 %v555
      %v606 = vunpack.c.l.b16 %v556
      %v607 = vpack.c.b16 %v583, %v582
      %v608 = vpack.c.b16 %v585, %v584
      %v609 = vpack.c.b16 %v587, %v586
      %v610 = vpack.c.b16 %v589, %v588
      %v611 = vpack.c.b16 %v591, %v590
      %v612 = vpack.c.b16 %v593, %v592
      %v613 = vpack.c.b16 %v595, %v594
      %v614 = vpack.c.b16 %v597, %v596
      %v615 = vpack.c.b16 %v599, %v598
      %v616 = vpack.c.b16 %v601, %v600
      %v617 = vpack.c.b16 %v603, %v602
      %v618 = vpack.c.b16 %v605, %v604
      %v619 = vpack.c.b16 %v606, %v606
      %v621 = vsel %vm348, %v607, 0
      %v624 = vsel %vm348, %v608, 0
      %v627 = vsel %vm348, %v609, 0
      %v630 = vsel %vm348, %v610, 0
      %v633 = vsel %vm348, %v611, 0
      %v636 = vsel %vm348, %v612, 0
      %v639 = vsel %vm348, %v613, 0
      %v642 = vsel %vm348, %v614, 0
      %v645 = vsel %vm348, %v615, 0
      %v648 = vsel %vm348, %v616, 0
      %v651 = vsel %vm348, %v617, 0
      %v654 = vsel %vm348, %v618, 0
      %v657 = vsel %vm348, %v619, 0
      %659 = vmatprep.subr.bf16.mxu0 0
      %660 = vmatpush1.bf16.msra.mxu0 0
      %661 = vmatprep.subr.bf16.mxu0 0
      %662 = vmatpush1.bf16.msra.mxu0 0
      %663 = vmatprep.subr.bf16.mxu0 0
      %664 = vmatpush1.bf16.msra.mxu0 0
      %665 = vmatprep.subr.bf16.mxu0 0
      %666 = vmatpush1.bf16.msra.mxu0 0
      %667 = vmatprep.subr.bf16.mxu0 0
      %668 = vmatpush1.bf16.msra.mxu0 0
      %669 = vmatprep.subr.bf16.mxu0 0
      %670 = vmatpush1.bf16.msra.mxu0 0
      %671 = vmatprep.subr.bf16.mxu0 0
      %672 = vmatpush1.bf16.msra.mxu0 0
      %673 = vmatprep.subr.bf16.mxu0 0
      %674 = vmatpush1.bf16.msra.mxu0 %v393
      %675 = vmatprep.subr.bf16.mxu0 0
      %676 = vmatpush2.bf16.msra.mxu0 0
      %677 = vmatprep.subr.bf16.mxu0 0
      %678 = vmatpush2.bf16.msra.mxu0 0
      %679 = vmatprep.subr.bf16.mxu0 0
      %680 = vmatpush2.bf16.msra.mxu0 0
      %681 = vmatprep.subr.bf16.mxu0 0
      %682 = vmatpush2.bf16.msra.mxu0 0
      %683 = vmatprep.subr.bf16.mxu0 0
      %684 = vmatpush2.bf16.msra.mxu0 0
      %685 = vmatprep.subr.bf16.mxu0 0
      %686 = vmatpush2.bf16.msra.mxu0 0
      %687 = vmatprep.subr.bf16.mxu0 0
      %688 = vmatpush2.bf16.msra.mxu0 0
      %689 = vmatprep.subr.bf16.mxu0 0
      %690 = vmatpush2.bf16.msra.mxu0 0
      %691 = vmatprep.mubr.bf16.mxu0 0
      %692 = vmatmul.mubr.bf16.gmra.mxu0 %v621
      %v693 = vpop.f32.mrf.mxu0
      %v694 = vadd.f32 0.0, %v693
      %v695 = vpop.f32.mrf.mxu0
      %v696 = vpop.f32.mrf.mxu0
      %v697 = vadd.f32 0.0, %v696
      %v698 = vpop.f32.mrf.mxu0
      %699 = vmatprep.mubr.bf16.mxu0 0
      %700 = vmatmul.mubr.bf16.gmra.mxu0 %v624
      %v701 = vpop.f32.mrf.mxu0
      %v702 = vadd.f32 0.0, %v701
      %v703 = vpop.f32.mrf.mxu0
      %v704 = vpop.f32.mrf.mxu0
      %v705 = vadd.f32 0.0, %v704
      %v706 = vpop.f32.mrf.mxu0
      %707 = vmatprep.mubr.bf16.mxu0 0
      %708 = vmatmul.mubr.bf16.gmra.mxu0 %v627
      %v709 = vpop.f32.mrf.mxu0
      %v710 = vadd.f32 0.0, %v709
      %v711 = vpop.f32.mrf.mxu0
      %v712 = vpop.f32.mrf.mxu0
      %v713 = vadd.f32 0.0, %v712
      %v714 = vpop.f32.mrf.mxu0
      %715 = vmatprep.mubr.bf16.mxu0 0
      %716 = vmatmul.mubr.bf16.gmra.mxu0 %v630
      %v717 = vpop.f32.mrf.mxu0
      %v718 = vadd.f32 0.0, %v717
      %v719 = vpop.f32.mrf.mxu0
      %v720 = vpop.f32.mrf.mxu0
      %v721 = vadd.f32 0.0, %v720
      %v722 = vpop.f32.mrf.mxu0
      %723 = vmatprep.mubr.bf16.mxu0 0
      %724 = vmatmul.mubr.bf16.gmra.mxu0 %v633
      %v725 = vpop.f32.mrf.mxu0
      %v726 = vadd.f32 0.0, %v725
      %v727 = vpop.f32.mrf.mxu0
      %v728 = vpop.f32.mrf.mxu0
      %v729 = vadd.f32 0.0, %v728
      %v730 = vpop.f32.mrf.mxu0
      %731 = vmatprep.mubr.bf16.mxu0 0
      %732 = vmatmul.mubr.bf16.gmra.mxu0 %v636
      %v733 = vpop.f32.mrf.mxu0
      %v734 = vadd.f32 0.0, %v733
      %v735 = vpop.f32.mrf.mxu0
      %v736 = vpop.f32.mrf.mxu0
      %v737 = vadd.f32 0.0, %v736
      %v738 = vpop.f32.mrf.mxu0
      %739 = vmatprep.mubr.bf16.mxu0 0
      %740 = vmatmul.mubr.bf16.gmra.mxu0 %v639
      %v741 = vpop.f32.mrf.mxu0
      %v742 = vadd.f32 0.0, %v741
      %v743 = vpop.f32.mrf.mxu0
      %v744 = vpop.f32.mrf.mxu0
      %v745 = vadd.f32 0.0, %v744
      %v746 = vpop.f32.mrf.mxu0
      %747 = vmatprep.mubr.bf16.mxu0 0
      %748 = vmatmul.mubr.bf16.gmra.mxu0 %v642
      %v749 = vpop.f32.mrf.mxu0
      %v750 = vadd.f32 0.0, %v749
      %v751 = vpop.f32.mrf.mxu0
      %v752 = vpop.f32.mrf.mxu0
      %v753 = vadd.f32 0.0, %v752
      %v754 = vpop.f32.mrf.mxu0
      %755 = vmatprep.mubr.bf16.mxu0 0
      %756 = vmatmul.mubr.bf16.gmra.mxu0 %v645
      %v757 = vpop.f32.mrf.mxu0
      %v758 = vadd.f32 0.0, %v757
      %v759 = vpop.f32.mrf.mxu0
      %v760 = vpop.f32.mrf.mxu0
      %v761 = vadd.f32 0.0, %v760
      %v762 = vpop.f32.mrf.mxu0
      %763 = vmatprep.mubr.bf16.mxu0 0
      %764 = vmatmul.mubr.bf16.gmra.mxu0 %v648
      %v765 = vpop.f32.mrf.mxu0
      %v766 = vadd.f32 0.0, %v765
      %v767 = vpop.f32.mrf.mxu0
      %v768 = vpop.f32.mrf.mxu0
      %v769 = vadd.f32 0.0, %v768
      %v770 = vpop.f32.mrf.mxu0
      %771 = vmatprep.mubr.bf16.mxu0 0
      %772 = vmatmul.mubr.bf16.gmra.mxu0 %v651
      %v773 = vpop.f32.mrf.mxu0
      %v774 = vadd.f32 0.0, %v773
      %v775 = vpop.f32.mrf.mxu0
      %v776 = vpop.f32.mrf.mxu0
      %v777 = vadd.f32 0.0, %v776
      %v778 = vpop.f32.mrf.mxu0
      %779 = vmatprep.mubr.bf16.mxu0 0
      %780 = vmatmul.mubr.bf16.gmra.mxu0 %v654
      %v781 = vpop.f32.mrf.mxu0
      %v782 = vadd.f32 0.0, %v781
      %v783 = vpop.f32.mrf.mxu0
      %v784 = vpop.f32.mrf.mxu0
      %v785 = vadd.f32 0.0, %v784
      %v786 = vpop.f32.mrf.mxu0
      %787 = vmatprep.mubr.bf16.mxu0 0
      %788 = vmatmul.mubr.bf16.gmra.mxu0 %v657
      %v789 = vpop.f32.mrf.mxu0
      %v790 = vadd.f32 0.0, %v789
      %v791 = vpop.f32.mrf.mxu0
      %v792 = vpop.f32.mrf.mxu0
      %v793 = vpop.f32.mrf.mxu0
      %794 = vdwg.mxu0
      %v795 = vmax.f32 %v430, %v694
      %v796 = vmax.f32 %v433, %v697
      %v797 = vmax.f32 %v438, %v702
      %v798 = vmax.f32 %v441, %v705
      %v799 = vmax.f32 %v446, %v710
      %v800 = vmax.f32 %v449, %v713
      %v801 = vmax.f32 %v454, %v718
      %v802 = vmax.f32 %v457, %v721
      %v803 = vmax.f32 %v462, %v726
      %v804 = vmax.f32 %v465, %v729
      %v805 = vmax.f32 %v470, %v734
      %v806 = vmax.f32 %v473, %v737
      %v807 = vmax.f32 %v478, %v742
      %v808 = vmax.f32 %v481, %v745
      %v809 = vmax.f32 %v486, %v750
      %v810 = vmax.f32 %v489, %v753
      %v811 = vmax.f32 %v494, %v758
      %v812 = vmax.f32 %v497, %v761
      %v813 = vmax.f32 %v502, %v766
      %v814 = vmax.f32 %v505, %v769
      %v815 = vmax.f32 %v510, %v774
      %v816 = vmax.f32 %v513, %v777
      %v817 = vmax.f32 %v518, %v782
      %v818 = vmax.f32 %v521, %v785
      %v819 = vmax.f32 %v526, %v790
      %s820 = scalar_lea.vmem %s246, 200
      %v821 = vld [vmem:[%s820] sm:$0xf]
      %v822 = vld [vmem:[%s820 + $0x4] sm:$0xf]
      %v823 = vld [vmem:[%s820 + $0x8] sm:$0xf]
      %v824 = vld [vmem:[%s820 + $0xc] sm:$0xf]
      %v825 = vld [vmem:[%s820 + $0x10] sm:$0xf]
      %v826 = vld [vmem:[%s820 + $0x14] sm:$0xf]
      %v827 = vld [vmem:[%s820 + $0x18] sm:$0xf]
      %v828 = vld [vmem:[%s820 + $0x1c] sm:$0xf]
      %v829 = vld [vmem:[%s820 + $0x20] sm:$0xf]
      %v830 = vld [vmem:[%s820 + $0x24] sm:$0xf]
      %v831 = vld [vmem:[%s820 + $0x28] sm:$0xf]
      %v832 = vld [vmem:[%s820 + $0x2c] sm:$0xf]
      %v833 = vld [vmem:[%s820 + $0x30] sm:$0xf]
      %v834 = vld [vmem:[%s820 + $0x34] sm:$0xf]
      %v835 = vld [vmem:[%s820 + $0x38] sm:$0xf]
      %v836 = vld [vmem:[%s820 + $0x3c] sm:$0xf]
      %v837 = vld [vmem:[%s820 + $0x40] sm:$0xf]
      %v838 = vld [vmem:[%s820 + $0x44] sm:$0xf]
      %v839 = vld [vmem:[%s820 + $0x48] sm:$0xf]
      %v840 = vld [vmem:[%s820 + $0x4c] sm:$0xf]
      %v841 = vld [vmem:[%s820 + $0x50] sm:$0xf]
      %v842 = vld [vmem:[%s820 + $0x54] sm:$0xf]
      %v843 = vld [vmem:[%s820 + $0x58] sm:$0xf]
      %v844 = vld [vmem:[%s820 + $0x5c] sm:$0xf]
      %v845 = vld [vmem:[%s820 + $0x60] sm:$0x3]
      %v871 = vunpack.c.l.b16 %v821
      %v872 = vunpack.c.l.b16 %v822
      %v873 = vunpack.c.l.b16 %v823
      %v874 = vunpack.c.l.b16 %v824
      %v875 = vunpack.c.l.b16 %v825
      %v876 = vunpack.c.l.b16 %v826
      %v877 = vunpack.c.l.b16 %v827
      %v878 = vunpack.c.l.b16 %v828
      %v879 = vunpack.c.l.b16 %v829
      %v880 = vunpack.c.l.b16 %v830
      %v881 = vunpack.c.l.b16 %v831
      %v882 = vunpack.c.l.b16 %v832
      %v883 = vunpack.c.l.b16 %v833
      %v884 = vunpack.c.l.b16 %v834
      %v885 = vunpack.c.l.b16 %v835
      %v886 = vunpack.c.l.b16 %v836
      %v887 = vunpack.c.l.b16 %v837
      %v888 = vunpack.c.l.b16 %v838
      %v889 = vunpack.c.l.b16 %v839
      %v890 = vunpack.c.l.b16 %v840
      %v891 = vunpack.c.l.b16 %v841
      %v892 = vunpack.c.l.b16 %v842
      %v893 = vunpack.c.l.b16 %v843
      %v894 = vunpack.c.l.b16 %v844
      %v895 = vunpack.c.l.b16 %v845
      %v896 = vpack.c.b16 %v872, %v871
      %v897 = vpack.c.b16 %v874, %v873
      %v898 = vpack.c.b16 %v876, %v875
      %v899 = vpack.c.b16 %v878, %v877
      %v900 = vpack.c.b16 %v880, %v879
      %v901 = vpack.c.b16 %v882, %v881
      %v902 = vpack.c.b16 %v884, %v883
      %v903 = vpack.c.b16 %v886, %v885
      %v904 = vpack.c.b16 %v888, %v887
      %v905 = vpack.c.b16 %v890, %v889
      %v906 = vpack.c.b16 %v892, %v891
      %v907 = vpack.c.b16 %v894, %v893
      %v908 = vpack.c.b16 %v895, %v895
      %v910 = vsel %vm348, %v896, 0
      %v913 = vsel %vm348, %v897, 0
      %v916 = vsel %vm348, %v898, 0
      %v919 = vsel %vm348, %v899, 0
      %v922 = vsel %vm348, %v900, 0
      %v925 = vsel %vm348, %v901, 0
      %v928 = vsel %vm348, %v902, 0
      %v931 = vsel %vm348, %v903, 0
      %v934 = vsel %vm348, %v904, 0
      %v937 = vsel %vm348, %v905, 0
      %v940 = vsel %vm348, %v906, 0
      %v943 = vsel %vm348, %v907, 0
      %v946 = vsel %vm348, %v908, 0
      %948 = vmatprep.subr.bf16.mxu0 0
      %949 = vmatpush1.bf16.msra.mxu0 0
      %950 = vmatprep.subr.bf16.mxu0 0
      %951 = vmatpush1.bf16.msra.mxu0 0
      %952 = vmatprep.subr.bf16.mxu0 0
      %953 = vmatpush1.bf16.msra.mxu0 0
      %954 = vmatprep.subr.bf16.mxu0 0
      %955 = vmatpush1.bf16.msra.mxu0 0
      %956 = vmatprep.subr.bf16.mxu0 0
      %957 = vmatpush1.bf16.msra.mxu0 0
      %958 = vmatprep.subr.bf16.mxu0 0
      %959 = vmatpush1.bf16.msra.mxu0 0
      %960 = vmatprep.subr.bf16.mxu0 0
      %961 = vmatpush1.bf16.msra.mxu0 0
      %962 = vmatprep.subr.bf16.mxu0 0
      %963 = vmatpush1.bf16.msra.mxu0 %v393
      %964 = vmatprep.subr.bf16.mxu0 0
      %965 = vmatpush2.bf16.msra.mxu0 0
      %966 = vmatprep.subr.bf16.mxu0 0
      %967 = vmatpush2.bf16.msra.mxu0 0
      %968 = vmatprep.subr.bf16.mxu0 0
      %969 = vmatpush2.bf16.msra.mxu0 0
      %970 = vmatprep.subr.bf16.mxu0 0
      %971 = vmatpush2.bf16.msra.mxu0 0
      %972 = vmatprep.subr.bf16.mxu0 0
      %973 = vmatpush2.bf16.msra.mxu0 0
      %974 = vmatprep.subr.bf16.mxu0 0
      %975 = vmatpush2.bf16.msra.mxu0 0
      %976 = vmatprep.subr.bf16.mxu0 0
      %977 = vmatpush2.bf16.msra.mxu0 0
      %978 = vmatprep.subr.bf16.mxu0 0
      %979 = vmatpush2.bf16.msra.mxu0 0
      %980 = vmatprep.mubr.bf16.mxu0 0
      %981 = vmatmul.mubr.bf16.gmra.mxu0 %v910
      %v982 = vpop.f32.mrf.mxu0
      %v983 = vadd.f32 0.0, %v982
      %v984 = vpop.f32.mrf.mxu0
      %v985 = vpop.f32.mrf.mxu0
      %v986 = vadd.f32 0.0, %v985
      %v987 = vpop.f32.mrf.mxu0
      %988 = vmatprep.mubr.bf16.mxu0 0
      %989 = vmatmul.mubr.bf16.gmra.mxu0 %v913
      %v990 = vpop.f32.mrf.mxu0
      %v991 = vadd.f32 0.0, %v990
      %v992 = vpop.f32.mrf.mxu0
      %v993 = vpop.f32.mrf.mxu0
      %v994 = vadd.f32 0.0, %v993
      %v995 = vpop.f32.mrf.mxu0
      %996 = vmatprep.mubr.bf16.mxu0 0
      %997 = vmatmul.mubr.bf16.gmra.mxu0 %v916
      %v998 = vpop.f32.mrf.mxu0
      %v999 = vadd.f32 0.0, %v998
      %v1000 = vpop.f32.mrf.mxu0
      %v1001 = vpop.f32.mrf.mxu0
      %v1002 = vadd.f32 0.0, %v1001
      %v1003 = vpop.f32.mrf.mxu0
      %1004 = vmatprep.mubr.bf16.mxu0 0
      %1005 = vmatmul.mubr.bf16.gmra.mxu0 %v919
      %v1006 = vpop.f32.mrf.mxu0
      %v1007 = vadd.f32 0.0, %v1006
      %v1008 = vpop.f32.mrf.mxu0
      %v1009 = vpop.f32.mrf.mxu0
      %v1010 = vadd.f32 0.0, %v1009
      %v1011 = vpop.f32.mrf.mxu0
      %1012 = vmatprep.mubr.bf16.mxu0 0
      %1013 = vmatmul.mubr.bf16.gmra.mxu0 %v922
      %v1014 = vpop.f32.mrf.mxu0
      %v1015 = vadd.f32 0.0, %v1014
      %v1016 = vpop.f32.mrf.mxu0
      %v1017 = vpop.f32.mrf.mxu0
      %v1018 = vadd.f32 0.0, %v1017
      %v1019 = vpop.f32.mrf.mxu0
      %1020 = vmatprep.mubr.bf16.mxu0 0
      %1021 = vmatmul.mubr.bf16.gmra.mxu0 %v925
      %v1022 = vpop.f32.mrf.mxu0
      %v1023 = vadd.f32 0.0, %v1022
      %v1024 = vpop.f32.mrf.mxu0
      %v1025 = vpop.f32.mrf.mxu0
      %v1026 = vadd.f32 0.0, %v1025
      %v1027 = vpop.f32.mrf.mxu0
      %1028 = vmatprep.mubr.bf16.mxu0 0
      %1029 = vmatmul.mubr.bf16.gmra.mxu0 %v928
      %v1030 = vpop.f32.mrf.mxu0
      %v1031 = vadd.f32 0.0, %v1030
      %v1032 = vpop.f32.mrf.mxu0
      %v1033 = vpop.f32.mrf.mxu0
      %v1034 = vadd.f32 0.0, %v1033
      %v1035 = vpop.f32.mrf.mxu0
      %1036 = vmatprep.mubr.bf16.mxu0 0
      %1037 = vmatmul.mubr.bf16.gmra.mxu0 %v931
      %v1038 = vpop.f32.mrf.mxu0
      %v1039 = vadd.f32 0.0, %v1038
      %v1040 = vpop.f32.mrf.mxu0
      %v1041 = vpop.f32.mrf.mxu0
      %v1042 = vadd.f32 0.0, %v1041
      %v1043 = vpop.f32.mrf.mxu0
      %1044 = vmatprep.mubr.bf16.mxu0 0
      %1045 = vmatmul.mubr.bf16.gmra.mxu0 %v934
      %v1046 = vpop.f32.mrf.mxu0
      %v1047 = vadd.f32 0.0, %v1046
      %v1048 = vpop.f32.mrf.mxu0
      %v1049 = vpop.f32.mrf.mxu0
      %v1050 = vadd.f32 0.0, %v1049
      %v1051 = vpop.f32.mrf.mxu0
      %1052 = vmatprep.mubr.bf16.mxu0 0
      %1053 = vmatmul.mubr.bf16.gmra.mxu0 %v937
      %v1054 = vpop.f32.mrf.mxu0
      %v1055 = vadd.f32 0.0, %v1054
      %v1056 = vpop.f32.mrf.mxu0
      %v1057 = vpop.f32.mrf.mxu0
      %v1058 = vadd.f32 0.0, %v1057
      %v1059 = vpop.f32.mrf.mxu0
      %1060 = vmatprep.mubr.bf16.mxu0 0
      %1061 = vmatmul.mubr.bf16.gmra.mxu0 %v940
      %v1062 = vpop.f32.mrf.mxu0
      %v1063 = vadd.f32 0.0, %v1062
      %v1064 = vpop.f32.mrf.mxu0
      %v1065 = vpop.f32.mrf.mxu0
      %v1066 = vadd.f32 0.0, %v1065
      %v1067 = vpop.f32.mrf.mxu0
      %1068 = vmatprep.mubr.bf16.mxu0 0
      %1069 = vmatmul.mubr.bf16.gmra.mxu0 %v943
      %v1070 = vpop.f32.mrf.mxu0
      %v1071 = vadd.f32 0.0, %v1070
      %v1072 = vpop.f32.mrf.mxu0
      %v1073 = vpop.f32.mrf.mxu0
      %v1074 = vadd.f32 0.0, %v1073
      %v1075 = vpop.f32.mrf.mxu0
      %1076 = vmatprep.mubr.bf16.mxu0 0
      %1077 = vmatmul.mubr.bf16.gmra.mxu0 %v946
      %v1078 = vpop.f32.mrf.mxu0
      %v1079 = vadd.f32 0.0, %v1078
      %v1080 = vpop.f32.mrf.mxu0
      %v1081 = vpop.f32.mrf.mxu0
      %v1082 = vpop.f32.mrf.mxu0
      %1083 = vdwg.mxu0
      %v1084 = vmax.f32 %v795, %v983
      %v1085 = vmax.f32 %v796, %v986
      %v1086 = vmax.f32 %v797, %v991
      %v1087 = vmax.f32 %v798, %v994
      %v1088 = vmax.f32 %v799, %v999
      %v1089 = vmax.f32 %v800, %v1002
      %v1090 = vmax.f32 %v801, %v1007
      %v1091 = vmax.f32 %v802, %v1010
      %v1092 = vmax.f32 %v803, %v1015
      %v1093 = vmax.f32 %v804, %v1018
      %v1094 = vmax.f32 %v805, %v1023
      %v1095 = vmax.f32 %v806, %v1026
      %v1096 = vmax.f32 %v807, %v1031
      %v1097 = vmax.f32 %v808, %v1034
      %v1098 = vmax.f32 %v809, %v1039
      %v1099 = vmax.f32 %v810, %v1042
      %v1100 = vmax.f32 %v811, %v1047
      %v1101 = vmax.f32 %v812, %v1050
      %v1102 = vmax.f32 %v813, %v1055
      %v1103 = vmax.f32 %v814, %v1058
      %v1104 = vmax.f32 %v815, %v1063
      %v1105 = vmax.f32 %v816, %v1066
      %v1106 = vmax.f32 %v817, %v1071
      %v1107 = vmax.f32 %v818, %v1074
      %v1108 = vmax.f32 %v819, %v1079
      %s1109 = scalar_lea.vmem %s246, 300
      %v1110 = vld [vmem:[%s1109] sm:$0xf]
      %v1111 = vld [vmem:[%s1109 + $0x4] sm:$0xf]
      %v1112 = vld [vmem:[%s1109 + $0x8] sm:$0xf]
      %v1113 = vld [vmem:[%s1109 + $0xc] sm:$0xf]
      %v1114 = vld [vmem:[%s1109 + $0x10] sm:$0xf]
      %v1115 = vld [vmem:[%s1109 + $0x14] sm:$0xf]
      %v1116 = vld [vmem:[%s1109 + $0x18] sm:$0xf]
      %v1117 = vld [vmem:[%s1109 + $0x1c] sm:$0xf]
      %v1118 = vld [vmem:[%s1109 + $0x20] sm:$0xf]
      %v1119 = vld [vmem:[%s1109 + $0x24] sm:$0xf]
      %v1120 = vld [vmem:[%s1109 + $0x28] sm:$0xf]
      %v1121 = vld [vmem:[%s1109 + $0x2c] sm:$0xf]
      %v1122 = vld [vmem:[%s1109 + $0x30] sm:$0xf]
      %v1123 = vld [vmem:[%s1109 + $0x34] sm:$0xf]
      %v1124 = vld [vmem:[%s1109 + $0x38] sm:$0xf]
      %v1125 = vld [vmem:[%s1109 + $0x3c] sm:$0xf]
      %v1126 = vld [vmem:[%s1109 + $0x40] sm:$0xf]
      %v1127 = vld [vmem:[%s1109 + $0x44] sm:$0xf]
      %v1128 = vld [vmem:[%s1109 + $0x48] sm:$0xf]
      %v1129 = vld [vmem:[%s1109 + $0x4c] sm:$0xf]
      %v1130 = vld [vmem:[%s1109 + $0x50] sm:$0xf]
      %v1131 = vld [vmem:[%s1109 + $0x54] sm:$0xf]
      %v1132 = vld [vmem:[%s1109 + $0x58] sm:$0xf]
      %v1133 = vld [vmem:[%s1109 + $0x5c] sm:$0xf]
      %v1134 = vld [vmem:[%s1109 + $0x60] sm:$0x3]
      %v1160 = vunpack.c.l.b16 %v1110
      %v1161 = vunpack.c.l.b16 %v1111
      %v1162 = vunpack.c.l.b16 %v1112
      %v1163 = vunpack.c.l.b16 %v1113
      %v1164 = vunpack.c.l.b16 %v1114
      %v1165 = vunpack.c.l.b16 %v1115
      %v1166 = vunpack.c.l.b16 %v1116
      %v1167 = vunpack.c.l.b16 %v1117
      %v1168 = vunpack.c.l.b16 %v1118
      %v1169 = vunpack.c.l.b16 %v1119
      %v1170 = vunpack.c.l.b16 %v1120
      %v1171 = vunpack.c.l.b16 %v1121
      %v1172 = vunpack.c.l.b16 %v1122
      %v1173 = vunpack.c.l.b16 %v1123
      %v1174 = vunpack.c.l.b16 %v1124
      %v1175 = vunpack.c.l.b16 %v1125
      %v1176 = vunpack.c.l.b16 %v1126
      %v1177 = vunpack.c.l.b16 %v1127
      %v1178 = vunpack.c.l.b16 %v1128
      %v1179 = vunpack.c.l.b16 %v1129
      %v1180 = vunpack.c.l.b16 %v1130
      %v1181 = vunpack.c.l.b16 %v1131
      %v1182 = vunpack.c.l.b16 %v1132
      %v1183 = vunpack.c.l.b16 %v1133
      %v1184 = vunpack.c.l.b16 %v1134
      %v1185 = vpack.c.b16 %v1161, %v1160
      %v1186 = vpack.c.b16 %v1163, %v1162
      %v1187 = vpack.c.b16 %v1165, %v1164
      %v1188 = vpack.c.b16 %v1167, %v1166
      %v1189 = vpack.c.b16 %v1169, %v1168
      %v1190 = vpack.c.b16 %v1171, %v1170
      %v1191 = vpack.c.b16 %v1173, %v1172
      %v1192 = vpack.c.b16 %v1175, %v1174
      %v1193 = vpack.c.b16 %v1177, %v1176
      %v1194 = vpack.c.b16 %v1179, %v1178
      %v1195 = vpack.c.b16 %v1181, %v1180
      %v1196 = vpack.c.b16 %v1183, %v1182
      %v1197 = vpack.c.b16 %v1184, %v1184
      %v1199 = vsel %vm348, %v1185, 0
      %v1202 = vsel %vm348, %v1186, 0
      %v1205 = vsel %vm348, %v1187, 0
      %v1208 = vsel %vm348, %v1188, 0
      %v1211 = vsel %vm348, %v1189, 0
      %v1214 = vsel %vm348, %v1190, 0
      %v1217 = vsel %vm348, %v1191, 0
      %v1220 = vsel %vm348, %v1192, 0
      %v1223 = vsel %vm348, %v1193, 0
      %v1226 = vsel %vm348, %v1194, 0
      %v1229 = vsel %vm348, %v1195, 0
      %v1232 = vsel %vm348, %v1196, 0
      %v1235 = vsel %vm348, %v1197, 0
      %1237 = vmatprep.subr.bf16.mxu0 0
      %1238 = vmatpush1.bf16.msra.mxu0 0
      %1239 = vmatprep.subr.bf16.mxu0 0
      %1240 = vmatpush1.bf16.msra.mxu0 0
      %1241 = vmatprep.subr.bf16.mxu0 0
      %1242 = vmatpush1.bf16.msra.mxu0 0
      %1243 = vmatprep.subr.bf16.mxu0 0
      %1244 = vmatpush1.bf16.msra.mxu0 0
      %1245 = vmatprep.subr.bf16.mxu0 0
      %1246 = vmatpush1.bf16.msra.mxu0 0
      %1247 = vmatprep.subr.bf16.mxu0 0
      %1248 = vmatpush1.bf16.msra.mxu0 0
      %1249 = vmatprep.subr.bf16.mxu0 0
      %1250 = vmatpush1.bf16.msra.mxu0 0
      %1251 = vmatprep.subr.bf16.mxu0 0
      %1252 = vmatpush1.bf16.msra.mxu0 %v393
      %1253 = vmatprep.subr.bf16.mxu0 0
      %1254 = vmatpush2.bf16.msra.mxu0 0
      %1255 = vmatprep.subr.bf16.mxu0 0
      %1256 = vmatpush2.bf16.msra.mxu0 0
      %1257 = vmatprep.subr.bf16.mxu0 0
      %1258 = vmatpush2.bf16.msra.mxu0 0
      %1259 = vmatprep.subr.bf16.mxu0 0
      %1260 = vmatpush2.bf16.msra.mxu0 0
      %1261 = vmatprep.subr.bf16.mxu0 0
      %1262 = vmatpush2.bf16.msra.mxu0 0
      %1263 = vmatprep.subr.bf16.mxu0 0
      %1264 = vmatpush2.bf16.msra.mxu0 0
      %1265 = vmatprep.subr.bf16.mxu0 0
      %1266 = vmatpush2.bf16.msra.mxu0 0
      %1267 = vmatprep.subr.bf16.mxu0 0
      %1268 = vmatpush2.bf16.msra.mxu0 0
      %1269 = vmatprep.mubr.bf16.mxu0 0
      %1270 = vmatmul.mubr.bf16.gmra.mxu0 %v1199
      %v1271 = vpop.f32.mrf.mxu0
      %v1272 = vadd.f32 0.0, %v1271
      %v1273 = vpop.f32.mrf.mxu0
      %v1274 = vpop.f32.mrf.mxu0
      %v1275 = vadd.f32 0.0, %v1274
      %v1276 = vpop.f32.mrf.mxu0
      %1277 = vmatprep.mubr.bf16.mxu0 0
      %1278 = vmatmul.mubr.bf16.gmra.mxu0 %v1202
      %v1279 = vpop.f32.mrf.mxu0
      %v1280 = vadd.f32 0.0, %v1279
      %v1281 = vpop.f32.mrf.mxu0
      %v1282 = vpop.f32.mrf.mxu0
      %v1283 = vadd.f32 0.0, %v1282
      %v1284 = vpop.f32.mrf.mxu0
      %1285 = vmatprep.mubr.bf16.mxu0 0
      %1286 = vmatmul.mubr.bf16.gmra.mxu0 %v1205
      %v1287 = vpop.f32.mrf.mxu0
      %v1288 = vadd.f32 0.0, %v1287
      %v1289 = vpop.f32.mrf.mxu0
      %v1290 = vpop.f32.mrf.mxu0
      %v1291 = vadd.f32 0.0, %v1290
      %v1292 = vpop.f32.mrf.mxu0
      %1293 = vmatprep.mubr.bf16.mxu0 0
      %1294 = vmatmul.mubr.bf16.gmra.mxu0 %v1208
      %v1295 = vpop.f32.mrf.mxu0
      %v1296 = vadd.f32 0.0, %v1295
      %v1297 = vpop.f32.mrf.mxu0
      %v1298 = vpop.f32.mrf.mxu0
      %v1299 = vadd.f32 0.0, %v1298
      %v1300 = vpop.f32.mrf.mxu0
      %1301 = vmatprep.mubr.bf16.mxu0 0
      %1302 = vmatmul.mubr.bf16.gmra.mxu0 %v1211
      %v1303 = vpop.f32.mrf.mxu0
      %v1304 = vadd.f32 0.0, %v1303
      %v1305 = vpop.f32.mrf.mxu0
      %v1306 = vpop.f32.mrf.mxu0
      %v1307 = vadd.f32 0.0, %v1306
      %v1308 = vpop.f32.mrf.mxu0
      %1309 = vmatprep.mubr.bf16.mxu0 0
      %1310 = vmatmul.mubr.bf16.gmra.mxu0 %v1214
      %v1311 = vpop.f32.mrf.mxu0
      %v1312 = vadd.f32 0.0, %v1311
      %v1313 = vpop.f32.mrf.mxu0
      %v1314 = vpop.f32.mrf.mxu0
      %v1315 = vadd.f32 0.0, %v1314
      %v1316 = vpop.f32.mrf.mxu0
      %1317 = vmatprep.mubr.bf16.mxu0 0
      %1318 = vmatmul.mubr.bf16.gmra.mxu0 %v1217
      %v1319 = vpop.f32.mrf.mxu0
      %v1320 = vadd.f32 0.0, %v1319
      %v1321 = vpop.f32.mrf.mxu0
      %v1322 = vpop.f32.mrf.mxu0
      %v1323 = vadd.f32 0.0, %v1322
      %v1324 = vpop.f32.mrf.mxu0
      %1325 = vmatprep.mubr.bf16.mxu0 0
      %1326 = vmatmul.mubr.bf16.gmra.mxu0 %v1220
      %v1327 = vpop.f32.mrf.mxu0
      %v1328 = vadd.f32 0.0, %v1327
      %v1329 = vpop.f32.mrf.mxu0
      %v1330 = vpop.f32.mrf.mxu0
      %v1331 = vadd.f32 0.0, %v1330
      %v1332 = vpop.f32.mrf.mxu0
      %1333 = vmatprep.mubr.bf16.mxu0 0
      %1334 = vmatmul.mubr.bf16.gmra.mxu0 %v1223
      %v1335 = vpop.f32.mrf.mxu0
      %v1336 = vadd.f32 0.0, %v1335
      %v1337 = vpop.f32.mrf.mxu0
      %v1338 = vpop.f32.mrf.mxu0
      %v1339 = vadd.f32 0.0, %v1338
      %v1340 = vpop.f32.mrf.mxu0
      %1341 = vmatprep.mubr.bf16.mxu0 0
      %1342 = vmatmul.mubr.bf16.gmra.mxu0 %v1226
      %v1343 = vpop.f32.mrf.mxu0
      %v1344 = vadd.f32 0.0, %v1343
      %v1345 = vpop.f32.mrf.mxu0
      %v1346 = vpop.f32.mrf.mxu0
      %v1347 = vadd.f32 0.0, %v1346
      %v1348 = vpop.f32.mrf.mxu0
      %1349 = vmatprep.mubr.bf16.mxu0 0
      %1350 = vmatmul.mubr.bf16.gmra.mxu0 %v1229
      %v1351 = vpop.f32.mrf.mxu0
      %v1352 = vadd.f32 0.0, %v1351
      %v1353 = vpop.f32.mrf.mxu0
      %v1354 = vpop.f32.mrf.mxu0
      %v1355 = vadd.f32 0.0, %v1354
      %v1356 = vpop.f32.mrf.mxu0
      %1357 = vmatprep.mubr.bf16.mxu0 0
      %1358 = vmatmul.mubr.bf16.gmra.mxu0 %v1232
      %v1359 = vpop.f32.mrf.mxu0
      %v1360 = vadd.f32 0.0, %v1359
      %v1361 = vpop.f32.mrf.mxu0
      %v1362 = vpop.f32.mrf.mxu0
      %v1363 = vadd.f32 0.0, %v1362
      %v1364 = vpop.f32.mrf.mxu0
      %1365 = vmatprep.mubr.bf16.mxu0 0
      %1366 = vmatmul.mubr.bf16.gmra.mxu0 %v1235
      %v1367 = vpop.f32.mrf.mxu0
      %v1368 = vadd.f32 0.0, %v1367
      %v1369 = vpop.f32.mrf.mxu0
      %v1370 = vpop.f32.mrf.mxu0
      %v1371 = vpop.f32.mrf.mxu0
      %1372 = vdwg.mxu0
      %v1373 = vmax.f32 %v1084, %v1272
      %v1374 = vmax.f32 %v1085, %v1275
      %v1375 = vmax.f32 %v1086, %v1280
      %v1376 = vmax.f32 %v1087, %v1283
      %v1377 = vmax.f32 %v1088, %v1288
      %v1378 = vmax.f32 %v1089, %v1291
      %v1379 = vmax.f32 %v1090, %v1296
      %v1380 = vmax.f32 %v1091, %v1299
      %v1381 = vmax.f32 %v1092, %v1304
      %v1382 = vmax.f32 %v1093, %v1307
      %v1383 = vmax.f32 %v1094, %v1312
      %v1384 = vmax.f32 %v1095, %v1315
      %v1385 = vmax.f32 %v1096, %v1320
      %v1386 = vmax.f32 %v1097, %v1323
      %v1387 = vmax.f32 %v1098, %v1328
      %v1388 = vmax.f32 %v1099, %v1331
      %v1389 = vmax.f32 %v1100, %v1336
      %v1390 = vmax.f32 %v1101, %v1339
      %v1391 = vmax.f32 %v1102, %v1344
      %v1392 = vmax.f32 %v1103, %v1347
      %v1393 = vmax.f32 %v1104, %v1352
      %v1394 = vmax.f32 %v1105, %v1355
      %v1395 = vmax.f32 %v1106, %v1360
      %v1396 = vmax.f32 %v1107, %v1363
      %v1397 = vmax.f32 %v1108, %v1368
      %v1398 = vld [vmem:[%s2] sm:$0x1]
      %v1400 = vlaneseq
      %v1401 = vshrl.u32 %v1400, 7
      %v1402 = vsub.s32 0, %v1401
      %v1403 = vrot.slane %v1398, %v1402
      %v1405 = vadd.f32 %v1373, %v1403
      %v1406 = vadd.f32 %v1374, %v1403
      %v1407 = vadd.f32 %v1375, %v1403
      %v1408 = vadd.f32 %v1376, %v1403
      %v1409 = vadd.f32 %v1377, %v1403
      %v1410 = vadd.f32 %v1378, %v1403
      %v1411 = vadd.f32 %v1379, %v1403
      %v1412 = vadd.f32 %v1380, %v1403
      %v1413 = vadd.f32 %v1381, %v1403
      %v1414 = vadd.f32 %v1382, %v1403
      %v1415 = vadd.f32 %v1383, %v1403
      %v1416 = vadd.f32 %v1384, %v1403
      %v1417 = vadd.f32 %v1385, %v1403
      %v1418 = vadd.f32 %v1386, %v1403
      %v1419 = vadd.f32 %v1387, %v1403
      %v1420 = vadd.f32 %v1388, %v1403
      %v1421 = vadd.f32 %v1389, %v1403
      %v1422 = vadd.f32 %v1390, %v1403
      %v1423 = vadd.f32 %v1391, %v1403
      %v1424 = vadd.f32 %v1392, %v1403
      %v1425 = vadd.f32 %v1393, %v1403
      %v1426 = vadd.f32 %v1394, %v1403
      %v1427 = vadd.f32 %v1395, %v1403
      %v1428 = vadd.f32 %v1396, %v1403
      %v1429 = vadd.f32 %v1397, %v1403
      %v1430 = vmax.f32 %v1405, 0.0
      %v1431 = vmax.f32 %v1406, 0.0
      %v1432 = vmax.f32 %v1407, 0.0
      %v1433 = vmax.f32 %v1408, 0.0
      %v1434 = vmax.f32 %v1409, 0.0
      %v1435 = vmax.f32 %v1410, 0.0
      %v1436 = vmax.f32 %v1411, 0.0
      %v1437 = vmax.f32 %v1412, 0.0
      %v1438 = vmax.f32 %v1413, 0.0
      %v1439 = vmax.f32 %v1414, 0.0
      %v1440 = vmax.f32 %v1415, 0.0
      %v1441 = vmax.f32 %v1416, 0.0
      %v1442 = vmax.f32 %v1417, 0.0
      %v1443 = vmax.f32 %v1418, 0.0
      %v1444 = vmax.f32 %v1419, 0.0
      %v1445 = vmax.f32 %v1420, 0.0
      %v1446 = vmax.f32 %v1421, 0.0
      %v1447 = vmax.f32 %v1422, 0.0
      %v1448 = vmax.f32 %v1423, 0.0
      %v1449 = vmax.f32 %v1424, 0.0
      %v1450 = vmax.f32 %v1425, 0.0
      %v1451 = vmax.f32 %v1426, 0.0
      %v1452 = vmax.f32 %v1427, 0.0
      %v1453 = vmax.f32 %v1428, 0.0
      %v1454 = vmax.f32 %v1429, 0.0
      %vm1455 = vcmask 261120
      %1456 = vst.msk [vmem:[#allocation2] sm:$0xff] %vm1455, %v1430
      %1457 = vst.msk [vmem:[#allocation2 + $0x8] sm:$0xff] %vm1455, %v1431
      %1458 = vst.msk [vmem:[#allocation2 + $0x10] sm:$0xff] %vm1455, %v1432
      %1459 = vst.msk [vmem:[#allocation2 + $0x18] sm:$0xff] %vm1455, %v1433
      %1460 = vst.msk [vmem:[#allocation2 + $0x20] sm:$0xff] %vm1455, %v1434
      %1461 = vst.msk [vmem:[#allocation2 + $0x28] sm:$0xff] %vm1455, %v1435
      %1462 = vst.msk [vmem:[#allocation2 + $0x30] sm:$0xff] %vm1455, %v1436
      %1463 = vst.msk [vmem:[#allocation2 + $0x38] sm:$0xff] %vm1455, %v1437
      %1464 = vst.msk [vmem:[#allocation2 + $0x40] sm:$0xff] %vm1455, %v1438
      %1465 = vst.msk [vmem:[#allocation2 + $0x48] sm:$0xff] %vm1455, %v1439
      %1466 = vst.msk [vmem:[#allocation2 + $0x50] sm:$0xff] %vm1455, %v1440
      %1467 = vst.msk [vmem:[#allocation2 + $0x58] sm:$0xff] %vm1455, %v1441
      %1468 = vst.msk [vmem:[#allocation2 + $0x60] sm:$0xff] %vm1455, %v1442
      %1469 = vst.msk [vmem:[#allocation2 + $0x68] sm:$0xff] %vm1455, %v1443
      %1470 = vst.msk [vmem:[#allocation2 + $0x70] sm:$0xff] %vm1455, %v1444
      %1471 = vst.msk [vmem:[#allocation2 + $0x78] sm:$0xff] %vm1455, %v1445
      %1472 = vst.msk [vmem:[#allocation2 + $0x80] sm:$0xff] %vm1455, %v1446
      %1473 = vst.msk [vmem:[#allocation2 + $0x88] sm:$0xff] %vm1455, %v1447
      %1474 = vst.msk [vmem:[#allocation2 + $0x90] sm:$0xff] %vm1455, %v1448
      %1475 = vst.msk [vmem:[#allocation2 + $0x98] sm:$0xff] %vm1455, %v1449
      %1476 = vst.msk [vmem:[#allocation2 + $0xa0] sm:$0xff] %vm1455, %v1450
      %1477 = vst.msk [vmem:[#allocation2 + $0xa8] sm:$0xff] %vm1455, %v1451
      %1478 = vst.msk [vmem:[#allocation2 + $0xb0] sm:$0xff] %vm1455, %v1452
      %1479 = vst.msk [vmem:[#allocation2 + $0xb8] sm:$0xff] %vm1455, %v1453
      %vm1480 = vcmask 257024
      %1481 = vst.msk [vmem:[#allocation2 + $0xc0] sm:$0xf] %vm1480, %v1454
      %1482 = vst.msk [vmem:[#allocation2 + $0xc4] sm:$0xf] %vm1480, 0.0
      %v1483 = vld [vmem:[#allocation2] sm:$0xff]
      %v1484 = vld [vmem:[#allocation2 + $0x8] sm:$0xff]
      %v1485 = vld [vmem:[#allocation2 + $0x10] sm:$0xff]
      %v1486 = vld [vmem:[#allocation2 + $0x18] sm:$0xff]
      %v1487 = vld [vmem:[#allocation2 + $0x20] sm:$0xff]
      %v1488 = vld [vmem:[#allocation2 + $0x28] sm:$0xff]
      %v1489 = vld [vmem:[#allocation2 + $0x30] sm:$0xff]
      %v1490 = vld [vmem:[#allocation2 + $0x38] sm:$0xff]
      %v1491 = vld [vmem:[#allocation2 + $0x40] sm:$0xff]
      %v1492 = vld [vmem:[#allocation2 + $0x48] sm:$0xff]
      %v1493 = vld [vmem:[#allocation2 + $0x50] sm:$0xff]
      %v1494 = vld [vmem:[#allocation2 + $0x58] sm:$0xff]
      %v1495 = vld [vmem:[#allocation2 + $0x60] sm:$0xff]
      %v1496 = vld [vmem:[#allocation2 + $0x68] sm:$0xff]
      %v1497 = vld [vmem:[#allocation2 + $0x70] sm:$0xff]
      %v1498 = vld [vmem:[#allocation2 + $0x78] sm:$0xff]
      %v1499 = vld [vmem:[#allocation2 + $0x80] sm:$0xff]
      %v1500 = vld [vmem:[#allocation2 + $0x88] sm:$0xff]
      %v1501 = vld [vmem:[#allocation2 + $0x90] sm:$0xff]
      %v1502 = vld [vmem:[#allocation2 + $0x98] sm:$0xff]
      %v1503 = vld [vmem:[#allocation2 + $0xa0] sm:$0xff]
      %v1504 = vpack.c.bf16 %v1484, %v1483
      %v1505 = vpack.c.bf16 %v1486, %v1485
      %v1506 = vpack.c.bf16 %v1488, %v1487
      %v1507 = vpack.c.bf16 %v1490, %v1489
      %v1508 = vpack.c.bf16 %v1492, %v1491
      %v1509 = vpack.c.bf16 %v1494, %v1493
      %v1510 = vpack.c.bf16 %v1496, %v1495
      %v1511 = vpack.c.bf16 %v1498, %v1497
      %v1512 = vpack.c.bf16 %v1500, %v1499
      %v1513 = vpack.c.bf16 %v1502, %v1501
      %v1514 = vpack.c.bf16 %v1503, %v1503
      %v1515 = vld [vmem:[%s3] sm:$0xf]
      %v1516 = vld [vmem:[%s3 + $0x4] sm:$0xf]
      %v1517 = vld [vmem:[%s3 + $0x8] sm:$0xf]
      %v1518 = vld [vmem:[%s3 + $0xc] sm:$0xf]
      %v1519 = vld [vmem:[#allocation2 + $0x1] sm:$0xff]
      %v1520 = vld [vmem:[#allocation2 + $0x9] sm:$0xff]
      %v1521 = vld [vmem:[#allocation2 + $0x11] sm:$0xff]
      %v1522 = vld [vmem:[#allocation2 + $0x19] sm:$0xff]
      %v1523 = vld [vmem:[#allocation2 + $0x21] sm:$0xff]
      %v1524 = vld [vmem:[#allocation2 + $0x29] sm:$0xff]
      %v1525 = vld [vmem:[#allocation2 + $0x31] sm:$0xff]
      %v1526 = vld [vmem:[#allocation2 + $0x39] sm:$0xff]
      %v1527 = vld [vmem:[#allocation2 + $0x41] sm:$0xff]
      %v1528 = vld [vmem:[#allocation2 + $0x49] sm:$0xff]
      %v1529 = vld [vmem:[#allocation2 + $0x51] sm:$0xff]
      %v1530 = vld [vmem:[#allocation2 + $0x59] sm:$0xff]
      %v1531 = vld [vmem:[#allocation2 + $0x61] sm:$0xff]
      %v1532 = vld [vmem:[#allocation2 + $0x69] sm:$0xff]
      %v1533 = vld [vmem:[#allocation2 + $0x71] sm:$0xff]
      %v1534 = vld [vmem:[#allocation2 + $0x79] sm:$0xff]
      %v1535 = vld [vmem:[#allocation2 + $0x81] sm:$0xff]
      %v1536 = vld [vmem:[#allocation2 + $0x89] sm:$0xff]
      %v1537 = vld [vmem:[#allocation2 + $0x91] sm:$0xff]
      %v1538 = vld [vmem:[#allocation2 + $0x99] sm:$0xff]
      %v1539 = vld [vmem:[#allocation2 + $0xa1] sm:$0xff]
      %v1540 = vpack.c.bf16 %v1520, %v1519
      %v1541 = vpack.c.bf16 %v1522, %v1521
      %v1542 = vpack.c.bf16 %v1524, %v1523
      %v1543 = vpack.c.bf16 %v1526, %v1525
      %v1544 = vpack.c.bf16 %v1528, %v1527
      %v1545 = vpack.c.bf16 %v1530, %v1529
      %v1546 = vpack.c.bf16 %v1532, %v1531
      %v1547 = vpack.c.bf16 %v1534, %v1533
      %v1548 = vpack.c.bf16 %v1536, %v1535
      %v1549 = vpack.c.bf16 %v1538, %v1537
      %v1550 = vpack.c.bf16 %v1539, %v1539
      %s1551 = scalar_lea.vmem %s3, 16
      %v1552 = vld [vmem:[%s1551] sm:$0xf]
      %v1553 = vld [vmem:[%s1551 + $0x4] sm:$0xf]
      %v1554 = vld [vmem:[%s1551 + $0x8] sm:$0xf]
      %v1555 = vld [vmem:[%s1551 + $0xc] sm:$0xf]
      %v1560 = vunpack.c.l.b16 %v1552
      %v1561 = vunpack.c.l.b16 %v1553
      %v1562 = vunpack.c.l.b16 %v1554
      %v1563 = vunpack.c.l.b16 %v1555
      %v1564 = vpack.c.b16 %v1561, %v1560
      %v1565 = vpack.c.b16 %v1563, %v1562
      %v1569 = vsel %vm1455, %v1540, 0
      %v1572 = vsel %vm1455, %v1541, 0
      %v1575 = vsel %vm1455, %v1542, 0
      %v1578 = vsel %vm1455, %v1543, 0
      %v1581 = vsel %vm1455, %v1544, 0
      %v1584 = vsel %vm1455, %v1545, 0
      %v1587 = vsel %vm1455, %v1546, 0
      %v1590 = vsel %vm1455, %v1547, 0
      %v1593 = vsel %vm1455, %v1548, 0
      %v1596 = vsel %vm1455, %v1549, 0
      %v1599 = vsel %vm1455, %v1550, 0
      %1601 = vmatprep.subr.bf16.mxu0 0
      %1602 = vmatpush1.bf16.msra.mxu0 0
      %1603 = vmatprep.subr.bf16.mxu0 0
      %1604 = vmatpush1.bf16.msra.mxu0 0
      %1605 = vmatprep.subr.bf16.mxu0 0
      %1606 = vmatpush1.bf16.msra.mxu0 0
      %1607 = vmatprep.subr.bf16.mxu0 0
      %1608 = vmatpush1.bf16.msra.mxu0 0
      %1609 = vmatprep.subr.bf16.mxu0 0
      %1610 = vmatpush1.bf16.msra.mxu0 0
      %1611 = vmatprep.subr.bf16.mxu0 0
      %1612 = vmatpush1.bf16.msra.mxu0 0
      %1613 = vmatprep.subr.bf16.mxu0 0
      %1614 = vmatpush1.bf16.msra.mxu0 %v1565
      %1615 = vmatprep.subr.bf16.mxu0 0
      %1616 = vmatpush1.bf16.msra.mxu0 %v1564
      %1617 = vmatprep.subr.bf16.mxu0 0
      %1618 = vmatpush2.bf16.msra.mxu0 0
      %1619 = vmatprep.subr.bf16.mxu0 0
      %1620 = vmatpush2.bf16.msra.mxu0 0
      %1621 = vmatprep.subr.bf16.mxu0 0
      %1622 = vmatpush2.bf16.msra.mxu0 0
      %1623 = vmatprep.subr.bf16.mxu0 0
      %1624 = vmatpush2.bf16.msra.mxu0 0
      %1625 = vmatprep.subr.bf16.mxu0 0
      %1626 = vmatpush2.bf16.msra.mxu0 0
      %1627 = vmatprep.subr.bf16.mxu0 0
      %1628 = vmatpush2.bf16.msra.mxu0 0
      %1629 = vmatprep.subr.bf16.mxu0 0
      %1630 = vmatpush2.bf16.msra.mxu0 0
      %1631 = vmatprep.subr.bf16.mxu0 0
      %1632 = vmatpush2.bf16.msra.mxu0 0
      %1633 = vmatprep.mubr.bf16.mxu0 0
      %1634 = vmatmul.mubr.bf16.gmra.mxu0 %v1569
      %v1635 = vpop.f32.mrf.mxu0
      %v1636 = vadd.f32 0.0, %v1635
      %v1637 = vpop.f32.mrf.mxu0
      %v1638 = vpop.f32.mrf.mxu0
      %v1639 = vadd.f32 0.0, %v1638
      %v1640 = vpop.f32.mrf.mxu0
      %1641 = vmatprep.mubr.bf16.mxu0 0
      %1642 = vmatmul.mubr.bf16.gmra.mxu0 %v1572
      %v1643 = vpop.f32.mrf.mxu0
      %v1644 = vadd.f32 0.0, %v1643
      %v1645 = vpop.f32.mrf.mxu0
      %v1646 = vpop.f32.mrf.mxu0
      %v1647 = vadd.f32 0.0, %v1646
      %v1648 = vpop.f32.mrf.mxu0
      %1649 = vmatprep.mubr.bf16.mxu0 0
      %1650 = vmatmul.mubr.bf16.gmra.mxu0 %v1575
      %v1651 = vpop.f32.mrf.mxu0
      %v1652 = vadd.f32 0.0, %v1651
      %v1653 = vpop.f32.mrf.mxu0
      %v1654 = vpop.f32.mrf.mxu0
      %v1655 = vadd.f32 0.0, %v1654
      %v1656 = vpop.f32.mrf.mxu0
      %1657 = vmatprep.mubr.bf16.mxu0 0
      %1658 = vmatmul.mubr.bf16.gmra.mxu0 %v1578
      %v1659 = vpop.f32.mrf.mxu0
      %v1660 = vadd.f32 0.0, %v1659
      %v1661 = vpop.f32.mrf.mxu0
      %v1662 = vpop.f32.mrf.mxu0
      %v1663 = vadd.f32 0.0, %v1662
      %v1664 = vpop.f32.mrf.mxu0
      %1665 = vmatprep.mubr.bf16.mxu0 0
      %1666 = vmatmul.mubr.bf16.gmra.mxu0 %v1581
      %v1667 = vpop.f32.mrf.mxu0
      %v1668 = vadd.f32 0.0, %v1667
      %v1669 = vpop.f32.mrf.mxu0
      %v1670 = vpop.f32.mrf.mxu0
      %v1671 = vadd.f32 0.0, %v1670
      %v1672 = vpop.f32.mrf.mxu0
      %1673 = vmatprep.mubr.bf16.mxu0 0
      %1674 = vmatmul.mubr.bf16.gmra.mxu0 %v1584
      %v1675 = vpop.f32.mrf.mxu0
      %v1676 = vadd.f32 0.0, %v1675
      %v1677 = vpop.f32.mrf.mxu0
      %v1678 = vpop.f32.mrf.mxu0
      %v1679 = vadd.f32 0.0, %v1678
      %v1680 = vpop.f32.mrf.mxu0
      %1681 = vmatprep.mubr.bf16.mxu0 0
      %1682 = vmatmul.mubr.bf16.gmra.mxu0 %v1587
      %v1683 = vpop.f32.mrf.mxu0
      %v1684 = vadd.f32 0.0, %v1683
      %v1685 = vpop.f32.mrf.mxu0
      %v1686 = vpop.f32.mrf.mxu0
      %v1687 = vadd.f32 0.0, %v1686
      %v1688 = vpop.f32.mrf.mxu0
      %1689 = vmatprep.mubr.bf16.mxu0 0
      %1690 = vmatmul.mubr.bf16.gmra.mxu0 %v1590
      %v1691 = vpop.f32.mrf.mxu0
      %v1692 = vadd.f32 0.0, %v1691
      %v1693 = vpop.f32.mrf.mxu0
      %v1694 = vpop.f32.mrf.mxu0
      %v1695 = vadd.f32 0.0, %v1694
      %v1696 = vpop.f32.mrf.mxu0
      %1697 = vmatprep.mubr.bf16.mxu0 0
      %1698 = vmatmul.mubr.bf16.gmra.mxu0 %v1593
      %v1699 = vpop.f32.mrf.mxu0
      %v1700 = vadd.f32 0.0, %v1699
      %v1701 = vpop.f32.mrf.mxu0
      %v1702 = vpop.f32.mrf.mxu0
      %v1703 = vadd.f32 0.0, %v1702
      %v1704 = vpop.f32.mrf.mxu0
      %1705 = vmatprep.mubr.bf16.mxu0 0
      %1706 = vmatmul.mubr.bf16.gmra.mxu0 %v1596
      %v1707 = vpop.f32.mrf.mxu0
      %v1708 = vadd.f32 0.0, %v1707
      %v1709 = vpop.f32.mrf.mxu0
      %v1710 = vpop.f32.mrf.mxu0
      %v1711 = vadd.f32 0.0, %v1710
      %v1712 = vpop.f32.mrf.mxu0
      %1713 = vmatprep.mubr.bf16.mxu0 0
      %1714 = vmatmul.mubr.bf16.gmra.mxu0 %v1599
      %v1715 = vpop.f32.mrf.mxu0
      %v1716 = vadd.f32 0.0, %v1715
      %v1717 = vpop.f32.mrf.mxu0
      %v1718 = vpop.f32.mrf.mxu0
      %v1719 = vpop.f32.mrf.mxu0
      %1720 = vdwg.mxu0
      %v1725 = vunpack.c.l.b16 %v1515
      %v1726 = vunpack.c.l.b16 %v1516
      %v1727 = vunpack.c.l.b16 %v1517
      %v1728 = vunpack.c.l.b16 %v1518
      %v1729 = vpack.c.b16 %v1726, %v1725
      %v1730 = vpack.c.b16 %v1728, %v1727
      %v1734 = vsel %vm1455, %v1504, 0
      %v1737 = vsel %vm1455, %v1505, 0
      %v1740 = vsel %vm1455, %v1506, 0
      %v1743 = vsel %vm1455, %v1507, 0
      %v1746 = vsel %vm1455, %v1508, 0
      %v1749 = vsel %vm1455, %v1509, 0
      %v1752 = vsel %vm1455, %v1510, 0
      %v1755 = vsel %vm1455, %v1511, 0
      %v1758 = vsel %vm1455, %v1512, 0
      %v1761 = vsel %vm1455, %v1513, 0
      %v1764 = vsel %vm1455, %v1514, 0
      %1766 = vmatprep.subr.bf16.mxu0 0
      %1767 = vmatpush1.bf16.msra.mxu0 0
      %1768 = vmatprep.subr.bf16.mxu0 0
      %1769 = vmatpush1.bf16.msra.mxu0 0
      %1770 = vmatprep.subr.bf16.mxu0 0
      %1771 = vmatpush1.bf16.msra.mxu0 0
      %1772 = vmatprep.subr.bf16.mxu0 0
      %1773 = vmatpush1.bf16.msra.mxu0 0
      %1774 = vmatprep.subr.bf16.mxu0 0
      %1775 = vmatpush1.bf16.msra.mxu0 0
      %1776 = vmatprep.subr.bf16.mxu0 0
      %1777 = vmatpush1.bf16.msra.mxu0 0
      %1778 = vmatprep.subr.bf16.mxu0 0
      %1779 = vmatpush1.bf16.msra.mxu0 %v1730
      %1780 = vmatprep.subr.bf16.mxu0 0
      %1781 = vmatpush1.bf16.msra.mxu0 %v1729
      %1782 = vmatprep.subr.bf16.mxu0 0
      %1783 = vmatpush2.bf16.msra.mxu0 0
      %1784 = vmatprep.subr.bf16.mxu0 0
      %1785 = vmatpush2.bf16.msra.mxu0 0
      %1786 = vmatprep.subr.bf16.mxu0 0
      %1787 = vmatpush2.bf16.msra.mxu0 0
      %1788 = vmatprep.subr.bf16.mxu0 0
      %1789 = vmatpush2.bf16.msra.mxu0 0
      %1790 = vmatprep.subr.bf16.mxu0 0
      %1791 = vmatpush2.bf16.msra.mxu0 0
      %1792 = vmatprep.subr.bf16.mxu0 0
      %1793 = vmatpush2.bf16.msra.mxu0 0
      %1794 = vmatprep.subr.bf16.mxu0 0
      %1795 = vmatpush2.bf16.msra.mxu0 0
      %1796 = vmatprep.subr.bf16.mxu0 0
      %1797 = vmatpush2.bf16.msra.mxu0 0
      %1798 = vmatprep.mubr.bf16.mxu0 0
      %1799 = vmatmul.mubr.bf16.gmra.mxu0 %v1734
      %v1800 = vpop.f32.mrf.mxu0
      %v1801 = vadd.f32 %v1636, %v1800
      %v1802 = vpop.f32.mrf.mxu0
      %v1803 = vpop.f32.mrf.mxu0
      %v1804 = vadd.f32 %v1639, %v1803
      %v1805 = vpop.f32.mrf.mxu0
      %1806 = vmatprep.mubr.bf16.mxu0 0
      %1807 = vmatmul.mubr.bf16.gmra.mxu0 %v1737
      %v1808 = vpop.f32.mrf.mxu0
      %v1809 = vadd.f32 %v1644, %v1808
      %v1810 = vpop.f32.mrf.mxu0
      %v1811 = vpop.f32.mrf.mxu0
      %v1812 = vadd.f32 %v1647, %v1811
      %v1813 = vpop.f32.mrf.mxu0
      %1814 = vmatprep.mubr.bf16.mxu0 0
      %1815 = vmatmul.mubr.bf16.gmra.mxu0 %v1740
      %v1816 = vpop.f32.mrf.mxu0
      %v1817 = vadd.f32 %v1652, %v1816
      %v1818 = vpop.f32.mrf.mxu0
      %v1819 = vpop.f32.mrf.mxu0
      %v1820 = vadd.f32 %v1655, %v1819
      %v1821 = vpop.f32.mrf.mxu0
      %1822 = vmatprep.mubr.bf16.mxu0 0
      %1823 = vmatmul.mubr.bf16.gmra.mxu0 %v1743
      %v1824 = vpop.f32.mrf.mxu0
      %v1825 = vadd.f32 %v1660, %v1824
      %v1826 = vpop.f32.mrf.mxu0
      %v1827 = vpop.f32.mrf.mxu0
      %v1828 = vadd.f32 %v1663, %v1827
      %v1829 = vpop.f32.mrf.mxu0
      %1830 = vmatprep.mubr.bf16.mxu0 0
      %1831 = vmatmul.mubr.bf16.gmra.mxu0 %v1746
      %v1832 = vpop.f32.mrf.mxu0
      %v1833 = vadd.f32 %v1668, %v1832
      %v1834 = vpop.f32.mrf.mxu0
      %v1835 = vpop.f32.mrf.mxu0
      %v1836 = vadd.f32 %v1671, %v1835
      %v1837 = vpop.f32.mrf.mxu0
      %1838 = vmatprep.mubr.bf16.mxu0 0
      %1839 = vmatmul.mubr.bf16.gmra.mxu0 %v1749
      %v1840 = vpop.f32.mrf.mxu0
      %v1841 = vadd.f32 %v1676, %v1840
      %v1842 = vpop.f32.mrf.mxu0
      %v1843 = vpop.f32.mrf.mxu0
      %v1844 = vadd.f32 %v1679, %v1843
      %v1845 = vpop.f32.mrf.mxu0
      %1846 = vmatprep.mubr.bf16.mxu0 0
      %1847 = vmatmul.mubr.bf16.gmra.mxu0 %v1752
      %v1848 = vpop.f32.mrf.mxu0
      %v1849 = vadd.f32 %v1684, %v1848
      %v1850 = vpop.f32.mrf.mxu0
      %v1851 = vpop.f32.mrf.mxu0
      %v1852 = vadd.f32 %v1687, %v1851
      %v1853 = vpop.f32.mrf.mxu0
      %1854 = vmatprep.mubr.bf16.mxu0 0
      %1855 = vmatmul.mubr.bf16.gmra.mxu0 %v1755
      %v1856 = vpop.f32.mrf.mxu0
      %v1857 = vadd.f32 %v1692, %v1856
      %v1858 = vpop.f32.mrf.mxu0
      %v1859 = vpop.f32.mrf.mxu0
      %v1860 = vadd.f32 %v1695, %v1859
      %v1861 = vpop.f32.mrf.mxu0
      %1862 = vmatprep.mubr.bf16.mxu0 0
      %1863 = vmatmul.mubr.bf16.gmra.mxu0 %v1758
      %v1864 = vpop.f32.mrf.mxu0
      %v1865 = vadd.f32 %v1700, %v1864
      %v1866 = vpop.f32.mrf.mxu0
      %v1867 = vpop.f32.mrf.mxu0
      %v1868 = vadd.f32 %v1703, %v1867
      %v1869 = vpop.f32.mrf.mxu0
      %1870 = vmatprep.mubr.bf16.mxu0 0
      %1871 = vmatmul.mubr.bf16.gmra.mxu0 %v1761
      %v1872 = vpop.f32.mrf.mxu0
      %v1873 = vadd.f32 %v1708, %v1872
      %v1874 = vpop.f32.mrf.mxu0
      %v1875 = vpop.f32.mrf.mxu0
      %v1876 = vadd.f32 %v1711, %v1875
      %v1877 = vpop.f32.mrf.mxu0
      %1878 = vmatprep.mubr.bf16.mxu0 0
      %1879 = vmatmul.mubr.bf16.gmra.mxu0 %v1764
      %v1880 = vpop.f32.mrf.mxu0
      %v1881 = vadd.f32 %v1716, %v1880
      %v1882 = vpop.f32.mrf.mxu0
      %v1883 = vpop.f32.mrf.mxu0
      %v1884 = vpop.f32.mrf.mxu0
      %1885 = vdwg.mxu0
      %v1886 = vld [vmem:[#allocation2 + $0x2] sm:$0xff]
      %v1887 = vld [vmem:[#allocation2 + $0xa] sm:$0xff]
      %v1888 = vld [vmem:[#allocation2 + $0x12] sm:$0xff]
      %v1889 = vld [vmem:[#allocation2 + $0x1a] sm:$0xff]
      %v1890 = vld [vmem:[#allocation2 + $0x22] sm:$0xff]
      %v1891 = vld [vmem:[#allocation2 + $0x2a] sm:$0xff]
      %v1892 = vld [vmem:[#allocation2 + $0x32] sm:$0xff]
      %v1893 = vld [vmem:[#allocation2 + $0x3a] sm:$0xff]
      %v1894 = vld [vmem:[#allocation2 + $0x42] sm:$0xff]
      %v1895 = vld [vmem:[#allocation2 + $0x4a] sm:$0xff]
      %v1896 = vld [vmem:[#allocation2 + $0x52] sm:$0xff]
      %v1897 = vld [vmem:[#allocation2 + $0x5a] sm:$0xff]
      %v1898 = vld [vmem:[#allocation2 + $0x62] sm:$0xff]
      %v1899 = vld [vmem:[#allocation2 + $0x6a] sm:$0xff]
      %v1900 = vld [vmem:[#allocation2 + $0x72] sm:$0xff]
      %v1901 = vld [vmem:[#allocation2 + $0x7a] sm:$0xff]
      %v1902 = vld [vmem:[#allocation2 + $0x82] sm:$0xff]
      %v1903 = vld [vmem:[#allocation2 + $0x8a] sm:$0xff]
      %v1904 = vld [vmem:[#allocation2 + $0x92] sm:$0xff]
      %v1905 = vld [vmem:[#allocation2 + $0x9a] sm:$0xff]
      %v1906 = vld [vmem:[#allocation2 + $0xa2] sm:$0xff]
      %v1907 = vpack.c.bf16 %v1887, %v1886
      %v1908 = vpack.c.bf16 %v1889, %v1888
      %v1909 = vpack.c.bf16 %v1891, %v1890
      %v1910 = vpack.c.bf16 %v1893, %v1892
      %v1911 = vpack.c.bf16 %v1895, %v1894
      %v1912 = vpack.c.bf16 %v1897, %v1896
      %v1913 = vpack.c.bf16 %v1899, %v1898
      %v1914 = vpack.c.bf16 %v1901, %v1900
      %v1915 = vpack.c.bf16 %v1903, %v1902
      %v1916 = vpack.c.bf16 %v1905, %v1904
      %v1917 = vpack.c.bf16 %v1906, %v1906
      %s1918 = scalar_lea.vmem %s3, 32
      %v1919 = vld [vmem:[%s1918] sm:$0xf]
      %v1920 = vld [vmem:[%s1918 + $0x4] sm:$0xf]
      %v1921 = vld [vmem:[%s1918 + $0x8] sm:$0xf]
      %v1922 = vld [vmem:[%s1918 + $0xc] sm:$0xf]
      %v1927 = vunpack.c.l.b16 %v1919
      %v1928 = vunpack.c.l.b16 %v1920
      %v1929 = vunpack.c.l.b16 %v1921
      %v1930 = vunpack.c.l.b16 %v1922
      %v1931 = vpack.c.b16 %v1928, %v1927
      %v1932 = vpack.c.b16 %v1930, %v1929
      %v1936 = vsel %vm1455, %v1907, 0
      %v1939 = vsel %vm1455, %v1908, 0
      %v1942 = vsel %vm1455, %v1909, 0
      %v1945 = vsel %vm1455, %v1910, 0
      %v1948 = vsel %vm1455, %v1911, 0
      %v1951 = vsel %vm1455, %v1912, 0
      %v1954 = vsel %vm1455, %v1913, 0
      %v1957 = vsel %vm1455, %v1914, 0
      %v1960 = vsel %vm1455, %v1915, 0
      %v1963 = vsel %vm1455, %v1916, 0
      %v1966 = vsel %vm1455, %v1917, 0
      %1968 = vmatprep.subr.bf16.mxu0 0
      %1969 = vmatpush1.bf16.msra.mxu0 0
      %1970 = vmatprep.subr.bf16.mxu0 0
      %1971 = vmatpush1.bf16.msra.mxu0 0
      %1972 = vmatprep.subr.bf16.mxu0 0
      %1973 = vmatpush1.bf16.msra.mxu0 0
      %1974 = vmatprep.subr.bf16.mxu0 0
      %1975 = vmatpush1.bf16.msra.mxu0 0
      %1976 = vmatprep.subr.bf16.mxu0 0
      %1977 = vmatpush1.bf16.msra.mxu0 0
      %1978 = vmatprep.subr.bf16.mxu0 0
      %1979 = vmatpush1.bf16.msra.mxu0 0
      %1980 = vmatprep.subr.bf16.mxu0 0
      %1981 = vmatpush1.bf16.msra.mxu0 %v1932
      %1982 = vmatprep.subr.bf16.mxu0 0
      %1983 = vmatpush1.bf16.msra.mxu0 %v1931
      %1984 = vmatprep.subr.bf16.mxu0 0
      %1985 = vmatpush2.bf16.msra.mxu0 0
      %1986 = vmatprep.subr.bf16.mxu0 0
      %1987 = vmatpush2.bf16.msra.mxu0 0
      %1988 = vmatprep.subr.bf16.mxu0 0
      %1989 = vmatpush2.bf16.msra.mxu0 0
      %1990 = vmatprep.subr.bf16.mxu0 0
      %1991 = vmatpush2.bf16.msra.mxu0 0
      %1992 = vmatprep.subr.bf16.mxu0 0
      %1993 = vmatpush2.bf16.msra.mxu0 0
      %1994 = vmatprep.subr.bf16.mxu0 0
      %1995 = vmatpush2.bf16.msra.mxu0 0
      %1996 = vmatprep.subr.bf16.mxu0 0
      %1997 = vmatpush2.bf16.msra.mxu0 0
      %1998 = vmatprep.subr.bf16.mxu0 0
      %1999 = vmatpush2.bf16.msra.mxu0 0
      %2000 = vmatprep.mubr.bf16.mxu0 0
      %2001 = vmatmul.mubr.bf16.gmra.mxu0 %v1936
      %v2002 = vpop.f32.mrf.mxu0
      %v2003 = vadd.f32 0.0, %v2002
      %v2004 = vpop.f32.mrf.mxu0
      %v2005 = vpop.f32.mrf.mxu0
      %v2006 = vadd.f32 0.0, %v2005
      %v2007 = vpop.f32.mrf.mxu0
      %2008 = vmatprep.mubr.bf16.mxu0 0
      %2009 = vmatmul.mubr.bf16.gmra.mxu0 %v1939
      %v2010 = vpop.f32.mrf.mxu0
      %v2011 = vadd.f32 0.0, %v2010
      %v2012 = vpop.f32.mrf.mxu0
      %v2013 = vpop.f32.mrf.mxu0
      %v2014 = vadd.f32 0.0, %v2013
      %v2015 = vpop.f32.mrf.mxu0
      %2016 = vmatprep.mubr.bf16.mxu0 0
      %2017 = vmatmul.mubr.bf16.gmra.mxu0 %v1942
      %v2018 = vpop.f32.mrf.mxu0
      %v2019 = vadd.f32 0.0, %v2018
      %v2020 = vpop.f32.mrf.mxu0
      %v2021 = vpop.f32.mrf.mxu0
      %v2022 = vadd.f32 0.0, %v2021
      %v2023 = vpop.f32.mrf.mxu0
      %2024 = vmatprep.mubr.bf16.mxu0 0
      %2025 = vmatmul.mubr.bf16.gmra.mxu0 %v1945
      %v2026 = vpop.f32.mrf.mxu0
      %v2027 = vadd.f32 0.0, %v2026
      %v2028 = vpop.f32.mrf.mxu0
      %v2029 = vpop.f32.mrf.mxu0
      %v2030 = vadd.f32 0.0, %v2029
      %v2031 = vpop.f32.mrf.mxu0
      %2032 = vmatprep.mubr.bf16.mxu0 0
      %2033 = vmatmul.mubr.bf16.gmra.mxu0 %v1948
      %v2034 = vpop.f32.mrf.mxu0
      %v2035 = vadd.f32 0.0, %v2034
      %v2036 = vpop.f32.mrf.mxu0
      %v2037 = vpop.f32.mrf.mxu0
      %v2038 = vadd.f32 0.0, %v2037
      %v2039 = vpop.f32.mrf.mxu0
      %2040 = vmatprep.mubr.bf16.mxu0 0
      %2041 = vmatmul.mubr.bf16.gmra.mxu0 %v1951
      %v2042 = vpop.f32.mrf.mxu0
      %v2043 = vadd.f32 0.0, %v2042
      %v2044 = vpop.f32.mrf.mxu0
      %v2045 = vpop.f32.mrf.mxu0
      %v2046 = vadd.f32 0.0, %v2045
      %v2047 = vpop.f32.mrf.mxu0
      %2048 = vmatprep.mubr.bf16.mxu0 0
      %2049 = vmatmul.mubr.bf16.gmra.mxu0 %v1954
      %v2050 = vpop.f32.mrf.mxu0
      %v2051 = vadd.f32 0.0, %v2050
      %v2052 = vpop.f32.mrf.mxu0
      %v2053 = vpop.f32.mrf.mxu0
      %v2054 = vadd.f32 0.0, %v2053
      %v2055 = vpop.f32.mrf.mxu0
      %2056 = vmatprep.mubr.bf16.mxu0 0
      %2057 = vmatmul.mubr.bf16.gmra.mxu0 %v1957
      %v2058 = vpop.f32.mrf.mxu0
      %v2059 = vadd.f32 0.0, %v2058
      %v2060 = vpop.f32.mrf.mxu0
      %v2061 = vpop.f32.mrf.mxu0
      %v2062 = vadd.f32 0.0, %v2061
      %v2063 = vpop.f32.mrf.mxu0
      %2064 = vmatprep.mubr.bf16.mxu0 0
      %2065 = vmatmul.mubr.bf16.gmra.mxu0 %v1960
      %v2066 = vpop.f32.mrf.mxu0
      %v2067 = vadd.f32 0.0, %v2066
      %v2068 = vpop.f32.mrf.mxu0
      %v2069 = vpop.f32.mrf.mxu0
      %v2070 = vadd.f32 0.0, %v2069
      %v2071 = vpop.f32.mrf.mxu0
      %2072 = vmatprep.mubr.bf16.mxu0 0
      %2073 = vmatmul.mubr.bf16.gmra.mxu0 %v1963
      %v2074 = vpop.f32.mrf.mxu0
      %v2075 = vadd.f32 0.0, %v2074
      %v2076 = vpop.f32.mrf.mxu0
      %v2077 = vpop.f32.mrf.mxu0
      %v2078 = vadd.f32 0.0, %v2077
      %v2079 = vpop.f32.mrf.mxu0
      %2080 = vmatprep.mubr.bf16.mxu0 0
      %2081 = vmatmul.mubr.bf16.gmra.mxu0 %v1966
      %v2082 = vpop.f32.mrf.mxu0
      %v2083 = vadd.f32 0.0, %v2082
      %v2084 = vpop.f32.mrf.mxu0
      %v2085 = vpop.f32.mrf.mxu0
      %v2086 = vpop.f32.mrf.mxu0
      %2087 = vdwg.mxu0
      %v2088 = vadd.f32 %v1801, %v2003
      %v2089 = vadd.f32 %v1804, %v2006
      %v2090 = vadd.f32 %v1809, %v2011
      %v2091 = vadd.f32 %v1812, %v2014
      %v2092 = vadd.f32 %v1817, %v2019
      %v2093 = vadd.f32 %v1820, %v2022
      %v2094 = vadd.f32 %v1825, %v2027
      %v2095 = vadd.f32 %v1828, %v2030
      %v2096 = vadd.f32 %v1833, %v2035
      %v2097 = vadd.f32 %v1836, %v2038
      %v2098 = vadd.f32 %v1841, %v2043
      %v2099 = vadd.f32 %v1844, %v2046
      %v2100 = vadd.f32 %v1849, %v2051
      %v2101 = vadd.f32 %v1852, %v2054
      %v2102 = vadd.f32 %v1857, %v2059
      %v2103 = vadd.f32 %v1860, %v2062
      %v2104 = vadd.f32 %v1865, %v2067
      %v2105 = vadd.f32 %v1868, %v2070
      %v2106 = vadd.f32 %v1873, %v2075
      %v2107 = vadd.f32 %v1876, %v2078
      %v2108 = vadd.f32 %v1881, %v2083
      %v2109 = vld [vmem:[#allocation2 + $0xe] sm:$0xff]
      %v2110 = vld [vmem:[#allocation2 + $0x16] sm:$0xff]
      %v2111 = vld [vmem:[#allocation2 + $0x1e] sm:$0xff]
      %v2112 = vld [vmem:[#allocation2 + $0x26] sm:$0xff]
      %v2113 = vld [vmem:[#allocation2 + $0x2e] sm:$0xff]
      %v2114 = vld [vmem:[#allocation2 + $0x36] sm:$0xff]
      %v2115 = vld [vmem:[#allocation2 + $0x3e] sm:$0xff]
      %v2116 = vld [vmem:[#allocation2 + $0x46] sm:$0xff]
      %v2117 = vld [vmem:[#allocation2 + $0x4e] sm:$0xff]
      %v2118 = vld [vmem:[#allocation2 + $0x56] sm:$0xff]
      %v2119 = vld [vmem:[#allocation2 + $0x5e] sm:$0xff]
      %v2120 = vld [vmem:[#allocation2 + $0x66] sm:$0xff]
      %v2121 = vld [vmem:[#allocation2 + $0x6e] sm:$0xff]
      %v2122 = vld [vmem:[#allocation2 + $0x76] sm:$0xff]
      %v2123 = vld [vmem:[#allocation2 + $0x7e] sm:$0xff]
      %v2124 = vld [vmem:[#allocation2 + $0x86] sm:$0xff]
      %v2125 = vld [vmem:[#allocation2 + $0x8e] sm:$0xff]
      %v2126 = vld [vmem:[#allocation2 + $0x96] sm:$0xff]
      %v2127 = vld [vmem:[#allocation2 + $0x9e] sm:$0xff]
      %v2128 = vld [vmem:[#allocation2 + $0xa6] sm:$0xff]
      %v2129 = vld [vmem:[#allocation2 + $0xae] sm:$0xff]
      %v2130 = vpack.c.bf16 %v2110, %v2109
      %v2131 = vpack.c.bf16 %v2112, %v2111
      %v2132 = vpack.c.bf16 %v2114, %v2113
      %v2133 = vpack.c.bf16 %v2116, %v2115
      %v2134 = vpack.c.bf16 %v2118, %v2117
      %v2135 = vpack.c.bf16 %v2120, %v2119
      %v2136 = vpack.c.bf16 %v2122, %v2121
      %v2137 = vpack.c.bf16 %v2124, %v2123
      %v2138 = vpack.c.bf16 %v2126, %v2125
      %v2139 = vpack.c.bf16 %v2128, %v2127
      %v2140 = vpack.c.bf16 %v2129, %v2129
      %s2141 = scalar_lea.vmem %s3, 48
      %v2142 = vld [vmem:[%s2141] sm:$0xf]
      %v2143 = vld [vmem:[%s2141 + $0x4] sm:$0xf]
      %v2144 = vld [vmem:[%s2141 + $0x8] sm:$0xf]
      %v2145 = vld [vmem:[%s2141 + $0xc] sm:$0xf]
      %v2150 = vunpack.c.l.b16 %v2142
      %v2151 = vunpack.c.l.b16 %v2143
      %v2152 = vunpack.c.l.b16 %v2144
      %v2153 = vunpack.c.l.b16 %v2145
      %v2154 = vpack.c.b16 %v2151, %v2150
      %v2155 = vpack.c.b16 %v2153, %v2152
      %v2159 = vsel %vm1455, %v2130, 0
      %v2162 = vsel %vm1455, %v2131, 0
      %v2165 = vsel %vm1455, %v2132, 0
      %v2168 = vsel %vm1455, %v2133, 0
      %v2171 = vsel %vm1455, %v2134, 0
      %v2174 = vsel %vm1455, %v2135, 0
      %v2177 = vsel %vm1455, %v2136, 0
      %v2180 = vsel %vm1455, %v2137, 0
      %v2183 = vsel %vm1455, %v2138, 0
      %v2186 = vsel %vm1455, %v2139, 0
      %v2189 = vsel %vm1455, %v2140, 0
      %2191 = vmatprep.subr.bf16.mxu0 0
      %2192 = vmatpush1.bf16.msra.mxu0 0
      %2193 = vmatprep.subr.bf16.mxu0 0
      %2194 = vmatpush1.bf16.msra.mxu0 0
      %2195 = vmatprep.subr.bf16.mxu0 0
      %2196 = vmatpush1.bf16.msra.mxu0 0
      %2197 = vmatprep.subr.bf16.mxu0 0
      %2198 = vmatpush1.bf16.msra.mxu0 0
      %2199 = vmatprep.subr.bf16.mxu0 0
      %2200 = vmatpush1.bf16.msra.mxu0 0
      %2201 = vmatprep.subr.bf16.mxu0 0
      %2202 = vmatpush1.bf16.msra.mxu0 0
      %2203 = vmatprep.subr.bf16.mxu0 0
      %2204 = vmatpush1.bf16.msra.mxu0 %v2155
      %2205 = vmatprep.subr.bf16.mxu0 0
      %2206 = vmatpush1.bf16.msra.mxu0 %v2154
      %2207 = vmatprep.subr.bf16.mxu0 0
      %2208 = vmatpush2.bf16.msra.mxu0 0
      %2209 = vmatprep.subr.bf16.mxu0 0
      %2210 = vmatpush2.bf16.msra.mxu0 0
      %2211 = vmatprep.subr.bf16.mxu0 0
      %2212 = vmatpush2.bf16.msra.mxu0 0
      %2213 = vmatprep.subr.bf16.mxu0 0
      %2214 = vmatpush2.bf16.msra.mxu0 0
      %2215 = vmatprep.subr.bf16.mxu0 0
      %2216 = vmatpush2.bf16.msra.mxu0 0
      %2217 = vmatprep.subr.bf16.mxu0 0
      %2218 = vmatpush2.bf16.msra.mxu0 0
      %2219 = vmatprep.subr.bf16.mxu0 0
      %2220 = vmatpush2.bf16.msra.mxu0 0
      %2221 = vmatprep.subr.bf16.mxu0 0
      %2222 = vmatpush2.bf16.msra.mxu0 0
      %2223 = vmatprep.mubr.bf16.mxu0 0
      %2224 = vmatmul.mubr.bf16.gmra.mxu0 %v2159
      %v2225 = vpop.f32.mrf.mxu0
      %v2226 = vadd.f32 0.0, %v2225
      %v2227 = vpop.f32.mrf.mxu0
      %v2228 = vpop.f32.mrf.mxu0
      %v2229 = vadd.f32 0.0, %v2228
      %v2230 = vpop.f32.mrf.mxu0
      %2231 = vmatprep.mubr.bf16.mxu0 0
      %2232 = vmatmul.mubr.bf16.gmra.mxu0 %v2162
      %v2233 = vpop.f32.mrf.mxu0
      %v2234 = vadd.f32 0.0, %v2233
      %v2235 = vpop.f32.mrf.mxu0
      %v2236 = vpop.f32.mrf.mxu0
      %v2237 = vadd.f32 0.0, %v2236
      %v2238 = vpop.f32.mrf.mxu0
      %2239 = vmatprep.mubr.bf16.mxu0 0
      %2240 = vmatmul.mubr.bf16.gmra.mxu0 %v2165
      %v2241 = vpop.f32.mrf.mxu0
      %v2242 = vadd.f32 0.0, %v2241
      %v2243 = vpop.f32.mrf.mxu0
      %v2244 = vpop.f32.mrf.mxu0
      %v2245 = vadd.f32 0.0, %v2244
      %v2246 = vpop.f32.mrf.mxu0
      %2247 = vmatprep.mubr.bf16.mxu0 0
      %2248 = vmatmul.mubr.bf16.gmra.mxu0 %v2168
      %v2249 = vpop.f32.mrf.mxu0
      %v2250 = vadd.f32 0.0, %v2249
      %v2251 = vpop.f32.mrf.mxu0
      %v2252 = vpop.f32.mrf.mxu0
      %v2253 = vadd.f32 0.0, %v2252
      %v2254 = vpop.f32.mrf.mxu0
      %2255 = vmatprep.mubr.bf16.mxu0 0
      %2256 = vmatmul.mubr.bf16.gmra.mxu0 %v2171
      %v2257 = vpop.f32.mrf.mxu0
      %v2258 = vadd.f32 0.0, %v2257
      %v2259 = vpop.f32.mrf.mxu0
      %v2260 = vpop.f32.mrf.mxu0
      %v2261 = vadd.f32 0.0, %v2260
      %v2262 = vpop.f32.mrf.mxu0
      %2263 = vmatprep.mubr.bf16.mxu0 0
      %2264 = vmatmul.mubr.bf16.gmra.mxu0 %v2174
      %v2265 = vpop.f32.mrf.mxu0
      %v2266 = vadd.f32 0.0, %v2265
      %v2267 = vpop.f32.mrf.mxu0
      %v2268 = vpop.f32.mrf.mxu0
      %v2269 = vadd.f32 0.0, %v2268
      %v2270 = vpop.f32.mrf.mxu0
      %2271 = vmatprep.mubr.bf16.mxu0 0
      %2272 = vmatmul.mubr.bf16.gmra.mxu0 %v2177
      %v2273 = vpop.f32.mrf.mxu0
      %v2274 = vadd.f32 0.0, %v2273
      %v2275 = vpop.f32.mrf.mxu0
      %v2276 = vpop.f32.mrf.mxu0
      %v2277 = vadd.f32 0.0, %v2276
      %v2278 = vpop.f32.mrf.mxu0
      %2279 = vmatprep.mubr.bf16.mxu0 0
      %2280 = vmatmul.mubr.bf16.gmra.mxu0 %v2180
      %v2281 = vpop.f32.mrf.mxu0
      %v2282 = vadd.f32 0.0, %v2281
      %v2283 = vpop.f32.mrf.mxu0
      %v2284 = vpop.f32.mrf.mxu0
      %v2285 = vadd.f32 0.0, %v2284
      %v2286 = vpop.f32.mrf.mxu0
      %2287 = vmatprep.mubr.bf16.mxu0 0
      %2288 = vmatmul.mubr.bf16.gmra.mxu0 %v2183
      %v2289 = vpop.f32.mrf.mxu0
      %v2290 = vadd.f32 0.0, %v2289
      %v2291 = vpop.f32.mrf.mxu0
      %v2292 = vpop.f32.mrf.mxu0
      %v2293 = vadd.f32 0.0, %v2292
      %v2294 = vpop.f32.mrf.mxu0
      %2295 = vmatprep.mubr.bf16.mxu0 0
      %2296 = vmatmul.mubr.bf16.gmra.mxu0 %v2186
      %v2297 = vpop.f32.mrf.mxu0
      %v2298 = vadd.f32 0.0, %v2297
      %v2299 = vpop.f32.mrf.mxu0
      %v2300 = vpop.f32.mrf.mxu0
      %v2301 = vadd.f32 0.0, %v2300
      %v2302 = vpop.f32.mrf.mxu0
      %2303 = vmatprep.mubr.bf16.mxu0 0
      %2304 = vmatmul.mubr.bf16.gmra.mxu0 %v2189
      %v2305 = vpop.f32.mrf.mxu0
      %v2306 = vadd.f32 0.0, %v2305
      %v2307 = vpop.f32.mrf.mxu0
      %v2308 = vpop.f32.mrf.mxu0
      %v2309 = vpop.f32.mrf.mxu0
      %2310 = vdwg.mxu0
      %v2311 = vadd.f32 %v2088, %v2226
      %v2312 = vadd.f32 %v2089, %v2229
      %v2313 = vadd.f32 %v2090, %v2234
      %v2314 = vadd.f32 %v2091, %v2237
      %v2315 = vadd.f32 %v2092, %v2242
      %v2316 = vadd.f32 %v2093, %v2245
      %v2317 = vadd.f32 %v2094, %v2250
      %v2318 = vadd.f32 %v2095, %v2253
      %v2319 = vadd.f32 %v2096, %v2258
      %v2320 = vadd.f32 %v2097, %v2261
      %v2321 = vadd.f32 %v2098, %v2266
      %v2322 = vadd.f32 %v2099, %v2269
      %v2323 = vadd.f32 %v2100, %v2274
      %v2324 = vadd.f32 %v2101, %v2277
      %v2325 = vadd.f32 %v2102, %v2282
      %v2326 = vadd.f32 %v2103, %v2285
      %v2327 = vadd.f32 %v2104, %v2290
      %v2328 = vadd.f32 %v2105, %v2293
      %v2329 = vadd.f32 %v2106, %v2298
      %v2330 = vadd.f32 %v2107, %v2301
      %v2331 = vadd.f32 %v2108, %v2306
      %v2332 = vld [vmem:[#allocation2 + $0xf] sm:$0xff]
      %v2333 = vld [vmem:[#allocation2 + $0x17] sm:$0xff]
      %v2334 = vld [vmem:[#allocation2 + $0x1f] sm:$0xff]
      %v2335 = vld [vmem:[#allocation2 + $0x27] sm:$0xff]
      %v2336 = vld [vmem:[#allocation2 + $0x2f] sm:$0xff]
      %v2337 = vld [vmem:[#allocation2 + $0x37] sm:$0xff]
      %v2338 = vld [vmem:[#allocation2 + $0x3f] sm:$0xff]
      %v2339 = vld [vmem:[#allocation2 + $0x47] sm:$0xff]
      %v2340 = vld [vmem:[#allocation2 + $0x4f] sm:$0xff]
      %v2341 = vld [vmem:[#allocation2 + $0x57] sm:$0xff]
      %v2342 = vld [vmem:[#allocation2 + $0x5f] sm:$0xff]
      %v2343 = vld [vmem:[#allocation2 + $0x67] sm:$0xff]
      %v2344 = vld [vmem:[#allocation2 + $0x6f] sm:$0xff]
      %v2345 = vld [vmem:[#allocation2 + $0x77] sm:$0xff]
      %v2346 = vld [vmem:[#allocation2 + $0x7f] sm:$0xff]
      %v2347 = vld [vmem:[#allocation2 + $0x87] sm:$0xff]
      %v2348 = vld [vmem:[#allocation2 + $0x8f] sm:$0xff]
      %v2349 = vld [vmem:[#allocation2 + $0x97] sm:$0xff]
      %v2350 = vld [vmem:[#allocation2 + $0x9f] sm:$0xff]
      %v2351 = vld [vmem:[#allocation2 + $0xa7] sm:$0xff]
      %v2352 = vld [vmem:[#allocation2 + $0xaf] sm:$0xff]
      %v2353 = vpack.c.bf16 %v2333, %v2332
      %v2354 = vpack.c.bf16 %v2335, %v2334
      %v2355 = vpack.c.bf16 %v2337, %v2336
      %v2356 = vpack.c.bf16 %v2339, %v2338
      %v2357 = vpack.c.bf16 %v2341, %v2340
      %v2358 = vpack.c.bf16 %v2343, %v2342
      %v2359 = vpack.c.bf16 %v2345, %v2344
      %v2360 = vpack.c.bf16 %v2347, %v2346
      %v2361 = vpack.c.bf16 %v2349, %v2348
      %v2362 = vpack.c.bf16 %v2351, %v2350
      %v2363 = vpack.c.bf16 %v2352, %v2352
      %s2364 = scalar_lea.vmem %s3, 64
      %v2365 = vld [vmem:[%s2364] sm:$0xf]
      %v2366 = vld [vmem:[%s2364 + $0x4] sm:$0xf]
      %v2367 = vld [vmem:[%s2364 + $0x8] sm:$0xf]
      %v2368 = vld [vmem:[%s2364 + $0xc] sm:$0xf]
      %v2373 = vunpack.c.l.b16 %v2365
      %v2374 = vunpack.c.l.b16 %v2366
      %v2375 = vunpack.c.l.b16 %v2367
      %v2376 = vunpack.c.l.b16 %v2368
      %v2377 = vpack.c.b16 %v2374, %v2373
      %v2378 = vpack.c.b16 %v2376, %v2375
      %v2382 = vsel %vm1455, %v2353, 0
      %v2385 = vsel %vm1455, %v2354, 0
      %v2388 = vsel %vm1455, %v2355, 0
      %v2391 = vsel %vm1455, %v2356, 0
      %v2394 = vsel %vm1455, %v2357, 0
      %v2397 = vsel %vm1455, %v2358, 0
      %v2400 = vsel %vm1455, %v2359, 0
      %v2403 = vsel %vm1455, %v2360, 0
      %v2406 = vsel %vm1455, %v2361, 0
      %v2409 = vsel %vm1455, %v2362, 0
      %v2412 = vsel %vm1455, %v2363, 0
      %2414 = vmatprep.subr.bf16.mxu0 0
      %2415 = vmatpush1.bf16.msra.mxu0 0
      %2416 = vmatprep.subr.bf16.mxu0 0
      %2417 = vmatpush1.bf16.msra.mxu0 0
      %2418 = vmatprep.subr.bf16.mxu0 0
      %2419 = vmatpush1.bf16.msra.mxu0 0
      %2420 = vmatprep.subr.bf16.mxu0 0
      %2421 = vmatpush1.bf16.msra.mxu0 0
      %2422 = vmatprep.subr.bf16.mxu0 0
      %2423 = vmatpush1.bf16.msra.mxu0 0
      %2424 = vmatprep.subr.bf16.mxu0 0
      %2425 = vmatpush1.bf16.msra.mxu0 0
      %2426 = vmatprep.subr.bf16.mxu0 0
      %2427 = vmatpush1.bf16.msra.mxu0 %v2378
      %2428 = vmatprep.subr.bf16.mxu0 0
      %2429 = vmatpush1.bf16.msra.mxu0 %v2377
      %2430 = vmatprep.subr.bf16.mxu0 0
      %2431 = vmatpush2.bf16.msra.mxu0 0
      %2432 = vmatprep.subr.bf16.mxu0 0
      %2433 = vmatpush2.bf16.msra.mxu0 0
      %2434 = vmatprep.subr.bf16.mxu0 0
      %2435 = vmatpush2.bf16.msra.mxu0 0
      %2436 = vmatprep.subr.bf16.mxu0 0
      %2437 = vmatpush2.bf16.msra.mxu0 0
      %2438 = vmatprep.subr.bf16.mxu0 0
      %2439 = vmatpush2.bf16.msra.mxu0 0
      %2440 = vmatprep.subr.bf16.mxu0 0
      %2441 = vmatpush2.bf16.msra.mxu0 0
      %2442 = vmatprep.subr.bf16.mxu0 0
      %2443 = vmatpush2.bf16.msra.mxu0 0
      %2444 = vmatprep.subr.bf16.mxu0 0
      %2445 = vmatpush2.bf16.msra.mxu0 0
      %2446 = vmatprep.mubr.bf16.mxu0 0
      %2447 = vmatmul.mubr.bf16.gmra.mxu0 %v2382
      %v2448 = vpop.f32.mrf.mxu0
      %v2449 = vadd.f32 0.0, %v2448
      %v2450 = vpop.f32.mrf.mxu0
      %v2451 = vpop.f32.mrf.mxu0
      %v2452 = vadd.f32 0.0, %v2451
      %v2453 = vpop.f32.mrf.mxu0
      %2454 = vmatprep.mubr.bf16.mxu0 0
      %2455 = vmatmul.mubr.bf16.gmra.mxu0 %v2385
      %v2456 = vpop.f32.mrf.mxu0
      %v2457 = vadd.f32 0.0, %v2456
      %v2458 = vpop.f32.mrf.mxu0
      %v2459 = vpop.f32.mrf.mxu0
      %v2460 = vadd.f32 0.0, %v2459
      %v2461 = vpop.f32.mrf.mxu0
      %2462 = vmatprep.mubr.bf16.mxu0 0
      %2463 = vmatmul.mubr.bf16.gmra.mxu0 %v2388
      %v2464 = vpop.f32.mrf.mxu0
      %v2465 = vadd.f32 0.0, %v2464
      %v2466 = vpop.f32.mrf.mxu0
      %v2467 = vpop.f32.mrf.mxu0
      %v2468 = vadd.f32 0.0, %v2467
      %v2469 = vpop.f32.mrf.mxu0
      %2470 = vmatprep.mubr.bf16.mxu0 0
      %2471 = vmatmul.mubr.bf16.gmra.mxu0 %v2391
      %v2472 = vpop.f32.mrf.mxu0
      %v2473 = vadd.f32 0.0, %v2472
      %v2474 = vpop.f32.mrf.mxu0
      %v2475 = vpop.f32.mrf.mxu0
      %v2476 = vadd.f32 0.0, %v2475
      %v2477 = vpop.f32.mrf.mxu0
      %2478 = vmatprep.mubr.bf16.mxu0 0
      %2479 = vmatmul.mubr.bf16.gmra.mxu0 %v2394
      %v2480 = vpop.f32.mrf.mxu0
      %v2481 = vadd.f32 0.0, %v2480
      %v2482 = vpop.f32.mrf.mxu0
      %v2483 = vpop.f32.mrf.mxu0
      %v2484 = vadd.f32 0.0, %v2483
      %v2485 = vpop.f32.mrf.mxu0
      %2486 = vmatprep.mubr.bf16.mxu0 0
      %2487 = vmatmul.mubr.bf16.gmra.mxu0 %v2397
      %v2488 = vpop.f32.mrf.mxu0
      %v2489 = vadd.f32 0.0, %v2488
      %v2490 = vpop.f32.mrf.mxu0
      %v2491 = vpop.f32.mrf.mxu0
      %v2492 = vadd.f32 0.0, %v2491
      %v2493 = vpop.f32.mrf.mxu0
      %2494 = vmatprep.mubr.bf16.mxu0 0
      %2495 = vmatmul.mubr.bf16.gmra.mxu0 %v2400
      %v2496 = vpop.f32.mrf.mxu0
      %v2497 = vadd.f32 0.0, %v2496
      %v2498 = vpop.f32.mrf.mxu0
      %v2499 = vpop.f32.mrf.mxu0
      %v2500 = vadd.f32 0.0, %v2499
      %v2501 = vpop.f32.mrf.mxu0
      %2502 = vmatprep.mubr.bf16.mxu0 0
      %2503 = vmatmul.mubr.bf16.gmra.mxu0 %v2403
      %v2504 = vpop.f32.mrf.mxu0
      %v2505 = vadd.f32 0.0, %v2504
      %v2506 = vpop.f32.mrf.mxu0
      %v2507 = vpop.f32.mrf.mxu0
      %v2508 = vadd.f32 0.0, %v2507
      %v2509 = vpop.f32.mrf.mxu0
      %2510 = vmatprep.mubr.bf16.mxu0 0
      %2511 = vmatmul.mubr.bf16.gmra.mxu0 %v2406
      %v2512 = vpop.f32.mrf.mxu0
      %v2513 = vadd.f32 0.0, %v2512
      %v2514 = vpop.f32.mrf.mxu0
      %v2515 = vpop.f32.mrf.mxu0
      %v2516 = vadd.f32 0.0, %v2515
      %v2517 = vpop.f32.mrf.mxu0
      %2518 = vmatprep.mubr.bf16.mxu0 0
      %2519 = vmatmul.mubr.bf16.gmra.mxu0 %v2409
      %v2520 = vpop.f32.mrf.mxu0
      %v2521 = vadd.f32 0.0, %v2520
      %v2522 = vpop.f32.mrf.mxu0
      %v2523 = vpop.f32.mrf.mxu0
      %v2524 = vadd.f32 0.0, %v2523
      %v2525 = vpop.f32.mrf.mxu0
      %2526 = vmatprep.mubr.bf16.mxu0 0
      %2527 = vmatmul.mubr.bf16.gmra.mxu0 %v2412
      %v2528 = vpop.f32.mrf.mxu0
      %v2529 = vadd.f32 0.0, %v2528
      %v2530 = vpop.f32.mrf.mxu0
      %v2531 = vpop.f32.mrf.mxu0
      %v2532 = vpop.f32.mrf.mxu0
      %2533 = vdwg.mxu0
      %v2534 = vadd.f32 %v2311, %v2449
      %v2535 = vadd.f32 %v2312, %v2452
      %v2536 = vadd.f32 %v2313, %v2457
      %v2537 = vadd.f32 %v2314, %v2460
      %v2538 = vadd.f32 %v2315, %v2465
      %v2539 = vadd.f32 %v2316, %v2468
      %v2540 = vadd.f32 %v2317, %v2473
      %v2541 = vadd.f32 %v2318, %v2476
      %v2542 = vadd.f32 %v2319, %v2481
      %v2543 = vadd.f32 %v2320, %v2484
      %v2544 = vadd.f32 %v2321, %v2489
      %v2545 = vadd.f32 %v2322, %v2492
      %v2546 = vadd.f32 %v2323, %v2497
      %v2547 = vadd.f32 %v2324, %v2500
      %v2548 = vadd.f32 %v2325, %v2505
      %v2549 = vadd.f32 %v2326, %v2508
      %v2550 = vadd.f32 %v2327, %v2513
      %v2551 = vadd.f32 %v2328, %v2516
      %v2552 = vadd.f32 %v2329, %v2521
      %v2553 = vadd.f32 %v2330, %v2524
      %v2554 = vadd.f32 %v2331, %v2529
      %v2555 = vld [vmem:[#allocation2 + $0x10] sm:$0xff]
      %v2556 = vld [vmem:[#allocation2 + $0x18] sm:$0xff]
      %v2557 = vld [vmem:[#allocation2 + $0x20] sm:$0xff]
      %v2558 = vld [vmem:[#allocation2 + $0x28] sm:$0xff]
      %v2559 = vld [vmem:[#allocation2 + $0x30] sm:$0xff]
      %v2560 = vld [vmem:[#allocation2 + $0x38] sm:$0xff]
      %v2561 = vld [vmem:[#allocation2 + $0x40] sm:$0xff]
      %v2562 = vld [vmem:[#allocation2 + $0x48] sm:$0xff]
      %v2563 = vld [vmem:[#allocation2 + $0x50] sm:$0xff]
      %v2564 = vld [vmem:[#allocation2 + $0x58] sm:$0xff]
      %v2565 = vld [vmem:[#allocation2 + $0x60] sm:$0xff]
      %v2566 = vld [vmem:[#allocation2 + $0x68] sm:$0xff]
      %v2567 = vld [vmem:[#allocation2 + $0x70] sm:$0xff]
      %v2568 = vld [vmem:[#allocation2 + $0x78] sm:$0xff]
      %v2569 = vld [vmem:[#allocation2 + $0x80] sm:$0xff]
      %v2570 = vld [vmem:[#allocation2 + $0x88] sm:$0xff]
      %v2571 = vld [vmem:[#allocation2 + $0x90] sm:$0xff]
      %v2572 = vld [vmem:[#allocation2 + $0x98] sm:$0xff]
      %v2573 = vld [vmem:[#allocation2 + $0xa0] sm:$0xff]
      %v2574 = vld [vmem:[#allocation2 + $0xa8] sm:$0xff]
      %v2575 = vld [vmem:[#allocation2 + $0xb0] sm:$0xff]
      %v2576 = vpack.c.bf16 %v2556, %v2555
      %v2577 = vpack.c.bf16 %v2558, %v2557
      %v2578 = vpack.c.bf16 %v2560, %v2559
      %v2579 = vpack.c.bf16 %v2562, %v2561
      %v2580 = vpack.c.bf16 %v2564, %v2563
      %v2581 = vpack.c.bf16 %v2566, %v2565
      %v2582 = vpack.c.bf16 %v2568, %v2567
      %v2583 = vpack.c.bf16 %v2570, %v2569
      %v2584 = vpack.c.bf16 %v2572, %v2571
      %v2585 = vpack.c.bf16 %v2574, %v2573
      %v2586 = vpack.c.bf16 %v2575, %v2575
      %s2587 = scalar_lea.vmem %s3, 80
      %v2588 = vld [vmem:[%s2587] sm:$0xf]
      %v2589 = vld [vmem:[%s2587 + $0x4] sm:$0xf]
      %v2590 = vld [vmem:[%s2587 + $0x8] sm:$0xf]
      %v2591 = vld [vmem:[%s2587 + $0xc] sm:$0xf]
      %v2596 = vunpack.c.l.b16 %v2588
      %v2597 = vunpack.c.l.b16 %v2589
      %v2598 = vunpack.c.l.b16 %v2590
      %v2599 = vunpack.c.l.b16 %v2591
      %v2600 = vpack.c.b16 %v2597, %v2596
      %v2601 = vpack.c.b16 %v2599, %v2598
      %v2605 = vsel %vm1455, %v2576, 0
      %v2608 = vsel %vm1455, %v2577, 0
      %v2611 = vsel %vm1455, %v2578, 0
      %v2614 = vsel %vm1455, %v2579, 0
      %v2617 = vsel %vm1455, %v2580, 0
      %v2620 = vsel %vm1455, %v2581, 0
      %v2623 = vsel %vm1455, %v2582, 0
      %v2626 = vsel %vm1455, %v2583, 0
      %v2629 = vsel %vm1455, %v2584, 0
      %v2632 = vsel %vm1455, %v2585, 0
      %v2635 = vsel %vm1455, %v2586, 0
      %2637 = vmatprep.subr.bf16.mxu0 0
      %2638 = vmatpush1.bf16.msra.mxu0 0
      %2639 = vmatprep.subr.bf16.mxu0 0
      %2640 = vmatpush1.bf16.msra.mxu0 0
      %2641 = vmatprep.subr.bf16.mxu0 0
      %2642 = vmatpush1.bf16.msra.mxu0 0
      %2643 = vmatprep.subr.bf16.mxu0 0
      %2644 = vmatpush1.bf16.msra.mxu0 0
      %2645 = vmatprep.subr.bf16.mxu0 0
      %2646 = vmatpush1.bf16.msra.mxu0 0
      %2647 = vmatprep.subr.bf16.mxu0 0
      %2648 = vmatpush1.bf16.msra.mxu0 0
      %2649 = vmatprep.subr.bf16.mxu0 0
      %2650 = vmatpush1.bf16.msra.mxu0 %v2601
      %2651 = vmatprep.subr.bf16.mxu0 0
      %2652 = vmatpush1.bf16.msra.mxu0 %v2600
      %2653 = vmatprep.subr.bf16.mxu0 0
      %2654 = vmatpush2.bf16.msra.mxu0 0
      %2655 = vmatprep.subr.bf16.mxu0 0
      %2656 = vmatpush2.bf16.msra.mxu0 0
      %2657 = vmatprep.subr.bf16.mxu0 0
      %2658 = vmatpush2.bf16.msra.mxu0 0
      %2659 = vmatprep.subr.bf16.mxu0 0
      %2660 = vmatpush2.bf16.msra.mxu0 0
      %2661 = vmatprep.subr.bf16.mxu0 0
      %2662 = vmatpush2.bf16.msra.mxu0 0
      %2663 = vmatprep.subr.bf16.mxu0 0
      %2664 = vmatpush2.bf16.msra.mxu0 0
      %2665 = vmatprep.subr.bf16.mxu0 0
      %2666 = vmatpush2.bf16.msra.mxu0 0
      %2667 = vmatprep.subr.bf16.mxu0 0
      %2668 = vmatpush2.bf16.msra.mxu0 0
      %2669 = vmatprep.mubr.bf16.mxu0 0
      %2670 = vmatmul.mubr.bf16.gmra.mxu0 %v2605
      %v2671 = vpop.f32.mrf.mxu0
      %v2672 = vadd.f32 0.0, %v2671
      %v2673 = vpop.f32.mrf.mxu0
      %v2674 = vpop.f32.mrf.mxu0
      %v2675 = vadd.f32 0.0, %v2674
      %v2676 = vpop.f32.mrf.mxu0
      %2677 = vmatprep.mubr.bf16.mxu0 0
      %2678 = vmatmul.mubr.bf16.gmra.mxu0 %v2608
      %v2679 = vpop.f32.mrf.mxu0
      %v2680 = vadd.f32 0.0, %v2679
      %v2681 = vpop.f32.mrf.mxu0
      %v2682 = vpop.f32.mrf.mxu0
      %v2683 = vadd.f32 0.0, %v2682
      %v2684 = vpop.f32.mrf.mxu0
      %2685 = vmatprep.mubr.bf16.mxu0 0
      %2686 = vmatmul.mubr.bf16.gmra.mxu0 %v2611
      %v2687 = vpop.f32.mrf.mxu0
      %v2688 = vadd.f32 0.0, %v2687
      %v2689 = vpop.f32.mrf.mxu0
      %v2690 = vpop.f32.mrf.mxu0
      %v2691 = vadd.f32 0.0, %v2690
      %v2692 = vpop.f32.mrf.mxu0
      %2693 = vmatprep.mubr.bf16.mxu0 0
      %2694 = vmatmul.mubr.bf16.gmra.mxu0 %v2614
      %v2695 = vpop.f32.mrf.mxu0
      %v2696 = vadd.f32 0.0, %v2695
      %v2697 = vpop.f32.mrf.mxu0
      %v2698 = vpop.f32.mrf.mxu0
      %v2699 = vadd.f32 0.0, %v2698
      %v2700 = vpop.f32.mrf.mxu0
      %2701 = vmatprep.mubr.bf16.mxu0 0
      %2702 = vmatmul.mubr.bf16.gmra.mxu0 %v2617
      %v2703 = vpop.f32.mrf.mxu0
      %v2704 = vadd.f32 0.0, %v2703
      %v2705 = vpop.f32.mrf.mxu0
      %v2706 = vpop.f32.mrf.mxu0
      %v2707 = vadd.f32 0.0, %v2706
      %v2708 = vpop.f32.mrf.mxu0
      %2709 = vmatprep.mubr.bf16.mxu0 0
      %2710 = vmatmul.mubr.bf16.gmra.mxu0 %v2620
      %v2711 = vpop.f32.mrf.mxu0
      %v2712 = vadd.f32 0.0, %v2711
      %v2713 = vpop.f32.mrf.mxu0
      %v2714 = vpop.f32.mrf.mxu0
      %v2715 = vadd.f32 0.0, %v2714
      %v2716 = vpop.f32.mrf.mxu0
      %2717 = vmatprep.mubr.bf16.mxu0 0
      %2718 = vmatmul.mubr.bf16.gmra.mxu0 %v2623
      %v2719 = vpop.f32.mrf.mxu0
      %v2720 = vadd.f32 0.0, %v2719
      %v2721 = vpop.f32.mrf.mxu0
      %v2722 = vpop.f32.mrf.mxu0
      %v2723 = vadd.f32 0.0, %v2722
      %v2724 = vpop.f32.mrf.mxu0
      %2725 = vmatprep.mubr.bf16.mxu0 0
      %2726 = vmatmul.mubr.bf16.gmra.mxu0 %v2626
      %v2727 = vpop.f32.mrf.mxu0
      %v2728 = vadd.f32 0.0, %v2727
      %v2729 = vpop.f32.mrf.mxu0
      %v2730 = vpop.f32.mrf.mxu0
      %v2731 = vadd.f32 0.0, %v2730
      %v2732 = vpop.f32.mrf.mxu0
      %2733 = vmatprep.mubr.bf16.mxu0 0
      %2734 = vmatmul.mubr.bf16.gmra.mxu0 %v2629
      %v2735 = vpop.f32.mrf.mxu0
      %v2736 = vadd.f32 0.0, %v2735
      %v2737 = vpop.f32.mrf.mxu0
      %v2738 = vpop.f32.mrf.mxu0
      %v2739 = vadd.f32 0.0, %v2738
      %v2740 = vpop.f32.mrf.mxu0
      %2741 = vmatprep.mubr.bf16.mxu0 0
      %2742 = vmatmul.mubr.bf16.gmra.mxu0 %v2632
      %v2743 = vpop.f32.mrf.mxu0
      %v2744 = vadd.f32 0.0, %v2743
      %v2745 = vpop.f32.mrf.mxu0
      %v2746 = vpop.f32.mrf.mxu0
      %v2747 = vadd.f32 0.0, %v2746
      %v2748 = vpop.f32.mrf.mxu0
      %2749 = vmatprep.mubr.bf16.mxu0 0
      %2750 = vmatmul.mubr.bf16.gmra.mxu0 %v2635
      %v2751 = vpop.f32.mrf.mxu0
      %v2752 = vadd.f32 0.0, %v2751
      %v2753 = vpop.f32.mrf.mxu0
      %v2754 = vpop.f32.mrf.mxu0
      %v2755 = vpop.f32.mrf.mxu0
      %2756 = vdwg.mxu0
      %v2757 = vadd.f32 %v2534, %v2672
      %v2758 = vadd.f32 %v2535, %v2675
      %v2759 = vadd.f32 %v2536, %v2680
      %v2760 = vadd.f32 %v2537, %v2683
      %v2761 = vadd.f32 %v2538, %v2688
      %v2762 = vadd.f32 %v2539, %v2691
      %v2763 = vadd.f32 %v2540, %v2696
      %v2764 = vadd.f32 %v2541, %v2699
      %v2765 = vadd.f32 %v2542, %v2704
      %v2766 = vadd.f32 %v2543, %v2707
      %v2767 = vadd.f32 %v2544, %v2712
      %v2768 = vadd.f32 %v2545, %v2715
      %v2769 = vadd.f32 %v2546, %v2720
      %v2770 = vadd.f32 %v2547, %v2723
      %v2771 = vadd.f32 %v2548, %v2728
      %v2772 = vadd.f32 %v2549, %v2731
      %v2773 = vadd.f32 %v2550, %v2736
      %v2774 = vadd.f32 %v2551, %v2739
      %v2775 = vadd.f32 %v2552, %v2744
      %v2776 = vadd.f32 %v2553, %v2747
      %v2777 = vadd.f32 %v2554, %v2752
      %v2778 = vld [vmem:[#allocation2 + $0x1c] sm:$0xff]
      %v2779 = vld [vmem:[#allocation2 + $0x24] sm:$0xff]
      %v2780 = vld [vmem:[#allocation2 + $0x2c] sm:$0xff]
      %v2781 = vld [vmem:[#allocation2 + $0x34] sm:$0xff]
      %v2782 = vld [vmem:[#allocation2 + $0x3c] sm:$0xff]
      %v2783 = vld [vmem:[#allocation2 + $0x44] sm:$0xff]
      %v2784 = vld [vmem:[#allocation2 + $0x4c] sm:$0xff]
      %v2785 = vld [vmem:[#allocation2 + $0x54] sm:$0xff]
      %v2786 = vld [vmem:[#allocation2 + $0x5c] sm:$0xff]
      %v2787 = vld [vmem:[#allocation2 + $0x64] sm:$0xff]
      %v2788 = vld [vmem:[#allocation2 + $0x6c] sm:$0xff]
      %v2789 = vld [vmem:[#allocation2 + $0x74] sm:$0xff]
      %v2790 = vld [vmem:[#allocation2 + $0x7c] sm:$0xff]
      %v2791 = vld [vmem:[#allocation2 + $0x84] sm:$0xff]
      %v2792 = vld [vmem:[#allocation2 + $0x8c] sm:$0xff]
      %v2793 = vld [vmem:[#allocation2 + $0x94] sm:$0xff]
      %v2794 = vld [vmem:[#allocation2 + $0x9c] sm:$0xff]
      %v2795 = vld [vmem:[#allocation2 + $0xa4] sm:$0xff]
      %v2796 = vld [vmem:[#allocation2 + $0xac] sm:$0xff]
      %v2797 = vld [vmem:[#allocation2 + $0xb4] sm:$0xff]
      %v2798 = vld [vmem:[#allocation2 + $0xbc] sm:$0xff]
      %v2799 = vpack.c.bf16 %v2779, %v2778
      %v2800 = vpack.c.bf16 %v2781, %v2780
      %v2801 = vpack.c.bf16 %v2783, %v2782
      %v2802 = vpack.c.bf16 %v2785, %v2784
      %v2803 = vpack.c.bf16 %v2787, %v2786
      %v2804 = vpack.c.bf16 %v2789, %v2788
      %v2805 = vpack.c.bf16 %v2791, %v2790
      %v2806 = vpack.c.bf16 %v2793, %v2792
      %v2807 = vpack.c.bf16 %v2795, %v2794
      %v2808 = vpack.c.bf16 %v2797, %v2796
      %v2809 = vpack.c.bf16 %v2798, %v2798
      %s2810 = scalar_lea.vmem %s3, 96
      %v2811 = vld [vmem:[%s2810] sm:$0xf]
      %v2812 = vld [vmem:[%s2810 + $0x4] sm:$0xf]
      %v2813 = vld [vmem:[%s2810 + $0x8] sm:$0xf]
      %v2814 = vld [vmem:[%s2810 + $0xc] sm:$0xf]
      %v2819 = vunpack.c.l.b16 %v2811
      %v2820 = vunpack.c.l.b16 %v2812
      %v2821 = vunpack.c.l.b16 %v2813
      %v2822 = vunpack.c.l.b16 %v2814
      %v2823 = vpack.c.b16 %v2820, %v2819
      %v2824 = vpack.c.b16 %v2822, %v2821
      %v2828 = vsel %vm1455, %v2799, 0
      %v2831 = vsel %vm1455, %v2800, 0
      %v2834 = vsel %vm1455, %v2801, 0
      %v2837 = vsel %vm1455, %v2802, 0
      %v2840 = vsel %vm1455, %v2803, 0
      %v2843 = vsel %vm1455, %v2804, 0
      %v2846 = vsel %vm1455, %v2805, 0
      %v2849 = vsel %vm1455, %v2806, 0
      %v2852 = vsel %vm1455, %v2807, 0
      %v2855 = vsel %vm1455, %v2808, 0
      %v2858 = vsel %vm1455, %v2809, 0
      %2860 = vmatprep.subr.bf16.mxu0 0
      %2861 = vmatpush1.bf16.msra.mxu0 0
      %2862 = vmatprep.subr.bf16.mxu0 0
      %2863 = vmatpush1.bf16.msra.mxu0 0
      %2864 = vmatprep.subr.bf16.mxu0 0
      %2865 = vmatpush1.bf16.msra.mxu0 0
      %2866 = vmatprep.subr.bf16.mxu0 0
      %2867 = vmatpush1.bf16.msra.mxu0 0
      %2868 = vmatprep.subr.bf16.mxu0 0
      %2869 = vmatpush1.bf16.msra.mxu0 0
      %2870 = vmatprep.subr.bf16.mxu0 0
      %2871 = vmatpush1.bf16.msra.mxu0 0
      %2872 = vmatprep.subr.bf16.mxu0 0
      %2873 = vmatpush1.bf16.msra.mxu0 %v2824
      %2874 = vmatprep.subr.bf16.mxu0 0
      %2875 = vmatpush1.bf16.msra.mxu0 %v2823
      %2876 = vmatprep.subr.bf16.mxu0 0
      %2877 = vmatpush2.bf16.msra.mxu0 0
      %2878 = vmatprep.subr.bf16.mxu0 0
      %2879 = vmatpush2.bf16.msra.mxu0 0
      %2880 = vmatprep.subr.bf16.mxu0 0
      %2881 = vmatpush2.bf16.msra.mxu0 0
      %2882 = vmatprep.subr.bf16.mxu0 0
      %2883 = vmatpush2.bf16.msra.mxu0 0
      %2884 = vmatprep.subr.bf16.mxu0 0
      %2885 = vmatpush2.bf16.msra.mxu0 0
      %2886 = vmatprep.subr.bf16.mxu0 0
      %2887 = vmatpush2.bf16.msra.mxu0 0
      %2888 = vmatprep.subr.bf16.mxu0 0
      %2889 = vmatpush2.bf16.msra.mxu0 0
      %2890 = vmatprep.subr.bf16.mxu0 0
      %2891 = vmatpush2.bf16.msra.mxu0 0
      %2892 = vmatprep.mubr.bf16.mxu0 0
      %2893 = vmatmul.mubr.bf16.gmra.mxu0 %v2828
      %v2894 = vpop.f32.mrf.mxu0
      %v2895 = vadd.f32 0.0, %v2894
      %v2896 = vpop.f32.mrf.mxu0
      %v2897 = vpop.f32.mrf.mxu0
      %v2898 = vadd.f32 0.0, %v2897
      %v2899 = vpop.f32.mrf.mxu0
      %2900 = vmatprep.mubr.bf16.mxu0 0
      %2901 = vmatmul.mubr.bf16.gmra.mxu0 %v2831
      %v2902 = vpop.f32.mrf.mxu0
      %v2903 = vadd.f32 0.0, %v2902
      %v2904 = vpop.f32.mrf.mxu0
      %v2905 = vpop.f32.mrf.mxu0
      %v2906 = vadd.f32 0.0, %v2905
      %v2907 = vpop.f32.mrf.mxu0
      %2908 = vmatprep.mubr.bf16.mxu0 0
      %2909 = vmatmul.mubr.bf16.gmra.mxu0 %v2834
      %v2910 = vpop.f32.mrf.mxu0
      %v2911 = vadd.f32 0.0, %v2910
      %v2912 = vpop.f32.mrf.mxu0
      %v2913 = vpop.f32.mrf.mxu0
      %v2914 = vadd.f32 0.0, %v2913
      %v2915 = vpop.f32.mrf.mxu0
      %2916 = vmatprep.mubr.bf16.mxu0 0
      %2917 = vmatmul.mubr.bf16.gmra.mxu0 %v2837
      %v2918 = vpop.f32.mrf.mxu0
      %v2919 = vadd.f32 0.0, %v2918
      %v2920 = vpop.f32.mrf.mxu0
      %v2921 = vpop.f32.mrf.mxu0
      %v2922 = vadd.f32 0.0, %v2921
      %v2923 = vpop.f32.mrf.mxu0
      %2924 = vmatprep.mubr.bf16.mxu0 0
      %2925 = vmatmul.mubr.bf16.gmra.mxu0 %v2840
      %v2926 = vpop.f32.mrf.mxu0
      %v2927 = vadd.f32 0.0, %v2926
      %v2928 = vpop.f32.mrf.mxu0
      %v2929 = vpop.f32.mrf.mxu0
      %v2930 = vadd.f32 0.0, %v2929
      %v2931 = vpop.f32.mrf.mxu0
      %2932 = vmatprep.mubr.bf16.mxu0 0
      %2933 = vmatmul.mubr.bf16.gmra.mxu0 %v2843
      %v2934 = vpop.f32.mrf.mxu0
      %v2935 = vadd.f32 0.0, %v2934
      %v2936 = vpop.f32.mrf.mxu0
      %v2937 = vpop.f32.mrf.mxu0
      %v2938 = vadd.f32 0.0, %v2937
      %v2939 = vpop.f32.mrf.mxu0
      %2940 = vmatprep.mubr.bf16.mxu0 0
      %2941 = vmatmul.mubr.bf16.gmra.mxu0 %v2846
      %v2942 = vpop.f32.mrf.mxu0
      %v2943 = vadd.f32 0.0, %v2942
      %v2944 = vpop.f32.mrf.mxu0
      %v2945 = vpop.f32.mrf.mxu0
      %v2946 = vadd.f32 0.0, %v2945
      %v2947 = vpop.f32.mrf.mxu0
      %2948 = vmatprep.mubr.bf16.mxu0 0
      %2949 = vmatmul.mubr.bf16.gmra.mxu0 %v2849
      %v2950 = vpop.f32.mrf.mxu0
      %v2951 = vadd.f32 0.0, %v2950
      %v2952 = vpop.f32.mrf.mxu0
      %v2953 = vpop.f32.mrf.mxu0
      %v2954 = vadd.f32 0.0, %v2953
      %v2955 = vpop.f32.mrf.mxu0
      %2956 = vmatprep.mubr.bf16.mxu0 0
      %2957 = vmatmul.mubr.bf16.gmra.mxu0 %v2852
      %v2958 = vpop.f32.mrf.mxu0
      %v2959 = vadd.f32 0.0, %v2958
      %v2960 = vpop.f32.mrf.mxu0
      %v2961 = vpop.f32.mrf.mxu0
      %v2962 = vadd.f32 0.0, %v2961
      %v2963 = vpop.f32.mrf.mxu0
      %2964 = vmatprep.mubr.bf16.mxu0 0
      %2965 = vmatmul.mubr.bf16.gmra.mxu0 %v2855
      %v2966 = vpop.f32.mrf.mxu0
      %v2967 = vadd.f32 0.0, %v2966
      %v2968 = vpop.f32.mrf.mxu0
      %v2969 = vpop.f32.mrf.mxu0
      %v2970 = vadd.f32 0.0, %v2969
      %v2971 = vpop.f32.mrf.mxu0
      %2972 = vmatprep.mubr.bf16.mxu0 0
      %2973 = vmatmul.mubr.bf16.gmra.mxu0 %v2858
      %v2974 = vpop.f32.mrf.mxu0
      %v2975 = vadd.f32 0.0, %v2974
      %v2976 = vpop.f32.mrf.mxu0
      %v2977 = vpop.f32.mrf.mxu0
      %v2978 = vpop.f32.mrf.mxu0
      %2979 = vdwg.mxu0
      %v2980 = vadd.f32 %v2757, %v2895
      %v2981 = vadd.f32 %v2758, %v2898
      %v2982 = vadd.f32 %v2759, %v2903
      %v2983 = vadd.f32 %v2760, %v2906
      %v2984 = vadd.f32 %v2761, %v2911
      %v2985 = vadd.f32 %v2762, %v2914
      %v2986 = vadd.f32 %v2763, %v2919
      %v2987 = vadd.f32 %v2764, %v2922
      %v2988 = vadd.f32 %v2765, %v2927
      %v2989 = vadd.f32 %v2766, %v2930
      %v2990 = vadd.f32 %v2767, %v2935
      %v2991 = vadd.f32 %v2768, %v2938
      %v2992 = vadd.f32 %v2769, %v2943
      %v2993 = vadd.f32 %v2770, %v2946
      %v2994 = vadd.f32 %v2771, %v2951
      %v2995 = vadd.f32 %v2772, %v2954
      %v2996 = vadd.f32 %v2773, %v2959
      %v2997 = vadd.f32 %v2774, %v2962
      %v2998 = vadd.f32 %v2775, %v2967
      %v2999 = vadd.f32 %v2776, %v2970
      %v3000 = vadd.f32 %v2777, %v2975
      %v3001 = vld [vmem:[#allocation2 + $0x1d] sm:$0xff]
      %v3002 = vld [vmem:[#allocation2 + $0x25] sm:$0xff]
      %v3003 = vld [vmem:[#allocation2 + $0x2d] sm:$0xff]
      %v3004 = vld [vmem:[#allocation2 + $0x35] sm:$0xff]
      %v3005 = vld [vmem:[#allocation2 + $0x3d] sm:$0xff]
      %v3006 = vld [vmem:[#allocation2 + $0x45] sm:$0xff]
      %v3007 = vld [vmem:[#allocation2 + $0x4d] sm:$0xff]
      %v3008 = vld [vmem:[#allocation2 + $0x55] sm:$0xff]
      %v3009 = vld [vmem:[#allocation2 + $0x5d] sm:$0xff]
      %v3010 = vld [vmem:[#allocation2 + $0x65] sm:$0xff]
      %v3011 = vld [vmem:[#allocation2 + $0x6d] sm:$0xff]
      %v3012 = vld [vmem:[#allocation2 + $0x75] sm:$0xff]
      %v3013 = vld [vmem:[#allocation2 + $0x7d] sm:$0xff]
      %v3014 = vld [vmem:[#allocation2 + $0x85] sm:$0xff]
      %v3015 = vld [vmem:[#allocation2 + $0x8d] sm:$0xff]
      %v3016 = vld [vmem:[#allocation2 + $0x95] sm:$0xff]
      %v3017 = vld [vmem:[#allocation2 + $0x9d] sm:$0xff]
      %v3018 = vld [vmem:[#allocation2 + $0xa5] sm:$0xff]
      %v3019 = vld [vmem:[#allocation2 + $0xad] sm:$0xff]
      %v3020 = vld [vmem:[#allocation2 + $0xb5] sm:$0xff]
      %v3021 = vld [vmem:[#allocation2 + $0xbd] sm:$0xff]
      %v3022 = vpack.c.bf16 %v3002, %v3001
      %v3023 = vpack.c.bf16 %v3004, %v3003
      %v3024 = vpack.c.bf16 %v3006, %v3005
      %v3025 = vpack.c.bf16 %v3008, %v3007
      %v3026 = vpack.c.bf16 %v3010, %v3009
      %v3027 = vpack.c.bf16 %v3012, %v3011
      %v3028 = vpack.c.bf16 %v3014, %v3013
      %v3029 = vpack.c.bf16 %v3016, %v3015
      %v3030 = vpack.c.bf16 %v3018, %v3017
      %v3031 = vpack.c.bf16 %v3020, %v3019
      %v3032 = vpack.c.bf16 %v3021, %v3021
      %s3033 = scalar_lea.vmem %s3, 112
      %v3034 = vld [vmem:[%s3033] sm:$0xf]
      %v3035 = vld [vmem:[%s3033 + $0x4] sm:$0xf]
      %v3036 = vld [vmem:[%s3033 + $0x8] sm:$0xf]
      %v3037 = vld [vmem:[%s3033 + $0xc] sm:$0xf]
      %v3042 = vunpack.c.l.b16 %v3034
      %v3043 = vunpack.c.l.b16 %v3035
      %v3044 = vunpack.c.l.b16 %v3036
      %v3045 = vunpack.c.l.b16 %v3037
      %v3046 = vpack.c.b16 %v3043, %v3042
      %v3047 = vpack.c.b16 %v3045, %v3044
      %v3051 = vsel %vm1455, %v3022, 0
      %v3054 = vsel %vm1455, %v3023, 0
      %v3057 = vsel %vm1455, %v3024, 0
      %v3060 = vsel %vm1455, %v3025, 0
      %v3063 = vsel %vm1455, %v3026, 0
      %v3066 = vsel %vm1455, %v3027, 0
      %v3069 = vsel %vm1455, %v3028, 0
      %v3072 = vsel %vm1455, %v3029, 0
      %v3075 = vsel %vm1455, %v3030, 0
      %v3078 = vsel %vm1455, %v3031, 0
      %v3081 = vsel %vm1455, %v3032, 0
      %3083 = vmatprep.subr.bf16.mxu0 0
      %3084 = vmatpush1.bf16.msra.mxu0 0
      %3085 = vmatprep.subr.bf16.mxu0 0
      %3086 = vmatpush1.bf16.msra.mxu0 0
      %3087 = vmatprep.subr.bf16.mxu0 0
      %3088 = vmatpush1.bf16.msra.mxu0 0
      %3089 = vmatprep.subr.bf16.mxu0 0
      %3090 = vmatpush1.bf16.msra.mxu0 0
      %3091 = vmatprep.subr.bf16.mxu0 0
      %3092 = vmatpush1.bf16.msra.mxu0 0
      %3093 = vmatprep.subr.bf16.mxu0 0
      %3094 = vmatpush1.bf16.msra.mxu0 0
      %3095 = vmatprep.subr.bf16.mxu0 0
      %3096 = vmatpush1.bf16.msra.mxu0 %v3047
      %3097 = vmatprep.subr.bf16.mxu0 0
      %3098 = vmatpush1.bf16.msra.mxu0 %v3046
      %3099 = vmatprep.subr.bf16.mxu0 0
      %3100 = vmatpush2.bf16.msra.mxu0 0
      %3101 = vmatprep.subr.bf16.mxu0 0
      %3102 = vmatpush2.bf16.msra.mxu0 0
      %3103 = vmatprep.subr.bf16.mxu0 0
      %3104 = vmatpush2.bf16.msra.mxu0 0
      %3105 = vmatprep.subr.bf16.mxu0 0
      %3106 = vmatpush2.bf16.msra.mxu0 0
      %3107 = vmatprep.subr.bf16.mxu0 0
      %3108 = vmatpush2.bf16.msra.mxu0 0
      %3109 = vmatprep.subr.bf16.mxu0 0
      %3110 = vmatpush2.bf16.msra.mxu0 0
      %3111 = vmatprep.subr.bf16.mxu0 0
      %3112 = vmatpush2.bf16.msra.mxu0 0
      %3113 = vmatprep.subr.bf16.mxu0 0
      %3114 = vmatpush2.bf16.msra.mxu0 0
      %3115 = vmatprep.mubr.bf16.mxu0 0
      %3116 = vmatmul.mubr.bf16.gmra.mxu0 %v3051
      %v3117 = vpop.f32.mrf.mxu0
      %v3118 = vadd.f32 0.0, %v3117
      %v3119 = vpop.f32.mrf.mxu0
      %v3120 = vpop.f32.mrf.mxu0
      %v3121 = vadd.f32 0.0, %v3120
      %v3122 = vpop.f32.mrf.mxu0
      %3123 = vmatprep.mubr.bf16.mxu0 0
      %3124 = vmatmul.mubr.bf16.gmra.mxu0 %v3054
      %v3125 = vpop.f32.mrf.mxu0
      %v3126 = vadd.f32 0.0, %v3125
      %v3127 = vpop.f32.mrf.mxu0
      %v3128 = vpop.f32.mrf.mxu0
      %v3129 = vadd.f32 0.0, %v3128
      %v3130 = vpop.f32.mrf.mxu0
      %3131 = vmatprep.mubr.bf16.mxu0 0
      %3132 = vmatmul.mubr.bf16.gmra.mxu0 %v3057
      %v3133 = vpop.f32.mrf.mxu0
      %v3134 = vadd.f32 0.0, %v3133
      %v3135 = vpop.f32.mrf.mxu0
      %v3136 = vpop.f32.mrf.mxu0
      %v3137 = vadd.f32 0.0, %v3136
      %v3138 = vpop.f32.mrf.mxu0
      %3139 = vmatprep.mubr.bf16.mxu0 0
      %3140 = vmatmul.mubr.bf16.gmra.mxu0 %v3060
      %v3141 = vpop.f32.mrf.mxu0
      %v3142 = vadd.f32 0.0, %v3141
      %v3143 = vpop.f32.mrf.mxu0
      %v3144 = vpop.f32.mrf.mxu0
      %v3145 = vadd.f32 0.0, %v3144
      %v3146 = vpop.f32.mrf.mxu0
      %3147 = vmatprep.mubr.bf16.mxu0 0
      %3148 = vmatmul.mubr.bf16.gmra.mxu0 %v3063
      %v3149 = vpop.f32.mrf.mxu0
      %v3150 = vadd.f32 0.0, %v3149
      %v3151 = vpop.f32.mrf.mxu0
      %v3152 = vpop.f32.mrf.mxu0
      %v3153 = vadd.f32 0.0, %v3152
      %v3154 = vpop.f32.mrf.mxu0
      %3155 = vmatprep.mubr.bf16.mxu0 0
      %3156 = vmatmul.mubr.bf16.gmra.mxu0 %v3066
      %v3157 = vpop.f32.mrf.mxu0
      %v3158 = vadd.f32 0.0, %v3157
      %v3159 = vpop.f32.mrf.mxu0
      %v3160 = vpop.f32.mrf.mxu0
      %v3161 = vadd.f32 0.0, %v3160
      %v3162 = vpop.f32.mrf.mxu0
      %3163 = vmatprep.mubr.bf16.mxu0 0
      %3164 = vmatmul.mubr.bf16.gmra.mxu0 %v3069
      %v3165 = vpop.f32.mrf.mxu0
      %v3166 = vadd.f32 0.0, %v3165
      %v3167 = vpop.f32.mrf.mxu0
      %v3168 = vpop.f32.mrf.mxu0
      %v3169 = vadd.f32 0.0, %v3168
      %v3170 = vpop.f32.mrf.mxu0
      %3171 = vmatprep.mubr.bf16.mxu0 0
      %3172 = vmatmul.mubr.bf16.gmra.mxu0 %v3072
      %v3173 = vpop.f32.mrf.mxu0
      %v3174 = vadd.f32 0.0, %v3173
      %v3175 = vpop.f32.mrf.mxu0
      %v3176 = vpop.f32.mrf.mxu0
      %v3177 = vadd.f32 0.0, %v3176
      %v3178 = vpop.f32.mrf.mxu0
      %3179 = vmatprep.mubr.bf16.mxu0 0
      %3180 = vmatmul.mubr.bf16.gmra.mxu0 %v3075
      %v3181 = vpop.f32.mrf.mxu0
      %v3182 = vadd.f32 0.0, %v3181
      %v3183 = vpop.f32.mrf.mxu0
      %v3184 = vpop.f32.mrf.mxu0
      %v3185 = vadd.f32 0.0, %v3184
      %v3186 = vpop.f32.mrf.mxu0
      %3187 = vmatprep.mubr.bf16.mxu0 0
      %3188 = vmatmul.mubr.bf16.gmra.mxu0 %v3078
      %v3189 = vpop.f32.mrf.mxu0
      %v3190 = vadd.f32 0.0, %v3189
      %v3191 = vpop.f32.mrf.mxu0
      %v3192 = vpop.f32.mrf.mxu0
      %v3193 = vadd.f32 0.0, %v3192
      %v3194 = vpop.f32.mrf.mxu0
      %3195 = vmatprep.mubr.bf16.mxu0 0
      %3196 = vmatmul.mubr.bf16.gmra.mxu0 %v3081
      %v3197 = vpop.f32.mrf.mxu0
      %v3198 = vadd.f32 0.0, %v3197
      %v3199 = vpop.f32.mrf.mxu0
      %v3200 = vpop.f32.mrf.mxu0
      %v3201 = vpop.f32.mrf.mxu0
      %3202 = vdwg.mxu0
      %v3203 = vadd.f32 %v2980, %v3118
      %v3204 = vadd.f32 %v2981, %v3121
      %v3205 = vadd.f32 %v2982, %v3126
      %v3206 = vadd.f32 %v2983, %v3129
      %v3207 = vadd.f32 %v2984, %v3134
      %v3208 = vadd.f32 %v2985, %v3137
      %v3209 = vadd.f32 %v2986, %v3142
      %v3210 = vadd.f32 %v2987, %v3145
      %v3211 = vadd.f32 %v2988, %v3150
      %v3212 = vadd.f32 %v2989, %v3153
      %v3213 = vadd.f32 %v2990, %v3158
      %v3214 = vadd.f32 %v2991, %v3161
      %v3215 = vadd.f32 %v2992, %v3166
      %v3216 = vadd.f32 %v2993, %v3169
      %v3217 = vadd.f32 %v2994, %v3174
      %v3218 = vadd.f32 %v2995, %v3177
      %v3219 = vadd.f32 %v2996, %v3182
      %v3220 = vadd.f32 %v2997, %v3185
      %v3221 = vadd.f32 %v2998, %v3190
      %v3222 = vadd.f32 %v2999, %v3193
      %v3223 = vadd.f32 %v3000, %v3198
      %v3224 = vld [vmem:[#allocation2 + $0x1e] sm:$0xff]
      %v3225 = vld [vmem:[#allocation2 + $0x26] sm:$0xff]
      %v3226 = vld [vmem:[#allocation2 + $0x2e] sm:$0xff]
      %v3227 = vld [vmem:[#allocation2 + $0x36] sm:$0xff]
      %v3228 = vld [vmem:[#allocation2 + $0x3e] sm:$0xff]
      %v3229 = vld [vmem:[#allocation2 + $0x46] sm:$0xff]
      %v3230 = vld [vmem:[#allocation2 + $0x4e] sm:$0xff]
      %v3231 = vld [vmem:[#allocation2 + $0x56] sm:$0xff]
      %v3232 = vld [vmem:[#allocation2 + $0x5e] sm:$0xff]
      %v3233 = vld [vmem:[#allocation2 + $0x66] sm:$0xff]
      %v3234 = vld [vmem:[#allocation2 + $0x6e] sm:$0xff]
      %v3235 = vld [vmem:[#allocation2 + $0x76] sm:$0xff]
      %v3236 = vld [vmem:[#allocation2 + $0x7e] sm:$0xff]
      %v3237 = vld [vmem:[#allocation2 + $0x86] sm:$0xff]
      %v3238 = vld [vmem:[#allocation2 + $0x8e] sm:$0xff]
      %v3239 = vld [vmem:[#allocation2 + $0x96] sm:$0xff]
      %v3240 = vld [vmem:[#allocation2 + $0x9e] sm:$0xff]
      %v3241 = vld [vmem:[#allocation2 + $0xa6] sm:$0xff]
      %v3242 = vld [vmem:[#allocation2 + $0xae] sm:$0xff]
      %v3243 = vld [vmem:[#allocation2 + $0xb6] sm:$0xff]
      %v3244 = vld [vmem:[#allocation2 + $0xbe] sm:$0xff]
      %v3245 = vpack.c.bf16 %v3225, %v3224
      %v3246 = vpack.c.bf16 %v3227, %v3226
      %v3247 = vpack.c.bf16 %v3229, %v3228
      %v3248 = vpack.c.bf16 %v3231, %v3230
      %v3249 = vpack.c.bf16 %v3233, %v3232
      %v3250 = vpack.c.bf16 %v3235, %v3234
      %v3251 = vpack.c.bf16 %v3237, %v3236
      %v3252 = vpack.c.bf16 %v3239, %v3238
      %v3253 = vpack.c.bf16 %v3241, %v3240
      %v3254 = vpack.c.bf16 %v3243, %v3242
      %v3255 = vpack.c.bf16 %v3244, %v3244
      %s3256 = scalar_lea.vmem %s3, 128
      %v3257 = vld [vmem:[%s3256] sm:$0xf]
      %v3258 = vld [vmem:[%s3256 + $0x4] sm:$0xf]
      %v3259 = vld [vmem:[%s3256 + $0x8] sm:$0xf]
      %v3260 = vld [vmem:[%s3256 + $0xc] sm:$0xf]
      %v3265 = vunpack.c.l.b16 %v3257
      %v3266 = vunpack.c.l.b16 %v3258
      %v3267 = vunpack.c.l.b16 %v3259
      %v3268 = vunpack.c.l.b16 %v3260
      %v3269 = vpack.c.b16 %v3266, %v3265
      %v3270 = vpack.c.b16 %v3268, %v3267
      %v3274 = vsel %vm1455, %v3245, 0
      %v3277 = vsel %vm1455, %v3246, 0
      %v3280 = vsel %vm1455, %v3247, 0
      %v3283 = vsel %vm1455, %v3248, 0
      %v3286 = vsel %vm1455, %v3249, 0
      %v3289 = vsel %vm1455, %v3250, 0
      %v3292 = vsel %vm1455, %v3251, 0
      %v3295 = vsel %vm1455, %v3252, 0
      %v3298 = vsel %vm1455, %v3253, 0
      %v3301 = vsel %vm1455, %v3254, 0
      %v3304 = vsel %vm1455, %v3255, 0
      %3306 = vmatprep.subr.bf16.mxu0 0
      %3307 = vmatpush1.bf16.msra.mxu0 0
      %3308 = vmatprep.subr.bf16.mxu0 0
      %3309 = vmatpush1.bf16.msra.mxu0 0
      %3310 = vmatprep.subr.bf16.mxu0 0
      %3311 = vmatpush1.bf16.msra.mxu0 0
      %3312 = vmatprep.subr.bf16.mxu0 0
      %3313 = vmatpush1.bf16.msra.mxu0 0
      %3314 = vmatprep.subr.bf16.mxu0 0
      %3315 = vmatpush1.bf16.msra.mxu0 0
      %3316 = vmatprep.subr.bf16.mxu0 0
      %3317 = vmatpush1.bf16.msra.mxu0 0
      %3318 = vmatprep.subr.bf16.mxu0 0
      %3319 = vmatpush1.bf16.msra.mxu0 %v3270
      %3320 = vmatprep.subr.bf16.mxu0 0
      %3321 = vmatpush1.bf16.msra.mxu0 %v3269
      %3322 = vmatprep.subr.bf16.mxu0 0
      %3323 = vmatpush2.bf16.msra.mxu0 0
      %3324 = vmatprep.subr.bf16.mxu0 0
      %3325 = vmatpush2.bf16.msra.mxu0 0
      %3326 = vmatprep.subr.bf16.mxu0 0
      %3327 = vmatpush2.bf16.msra.mxu0 0
      %3328 = vmatprep.subr.bf16.mxu0 0
      %3329 = vmatpush2.bf16.msra.mxu0 0
      %3330 = vmatprep.subr.bf16.mxu0 0
      %3331 = vmatpush2.bf16.msra.mxu0 0
      %3332 = vmatprep.subr.bf16.mxu0 0
      %3333 = vmatpush2.bf16.msra.mxu0 0
      %3334 = vmatprep.subr.bf16.mxu0 0
      %3335 = vmatpush2.bf16.msra.mxu0 0
      %3336 = vmatprep.subr.bf16.mxu0 0
      %3337 = vmatpush2.bf16.msra.mxu0 0
      %3338 = vmatprep.mubr.bf16.mxu0 0
      %3339 = vmatmul.mubr.bf16.gmra.mxu0 %v3274
      %v3340 = vpop.f32.mrf.mxu0
      %v3341 = vadd.f32 0.0, %v3340
      %v3342 = vpop.f32.mrf.mxu0
      %v3343 = vpop.f32.mrf.mxu0
      %v3344 = vadd.f32 0.0, %v3343
      %v3345 = vpop.f32.mrf.mxu0
      %3346 = vmatprep.mubr.bf16.mxu0 0
      %3347 = vmatmul.mubr.bf16.gmra.mxu0 %v3277
      %v3348 = vpop.f32.mrf.mxu0
      %v3349 = vadd.f32 0.0, %v3348
      %v3350 = vpop.f32.mrf.mxu0
      %v3351 = vpop.f32.mrf.mxu0
      %v3352 = vadd.f32 0.0, %v3351
      %v3353 = vpop.f32.mrf.mxu0
      %3354 = vmatprep.mubr.bf16.mxu0 0
      %3355 = vmatmul.mubr.bf16.gmra.mxu0 %v3280
      %v3356 = vpop.f32.mrf.mxu0
      %v3357 = vadd.f32 0.0, %v3356
      %v3358 = vpop.f32.mrf.mxu0
      %v3359 = vpop.f32.mrf.mxu0
      %v3360 = vadd.f32 0.0, %v3359
      %v3361 = vpop.f32.mrf.mxu0
      %3362 = vmatprep.mubr.bf16.mxu0 0
      %3363 = vmatmul.mubr.bf16.gmra.mxu0 %v3283
      %v3364 = vpop.f32.mrf.mxu0
      %v3365 = vadd.f32 0.0, %v3364
      %v3366 = vpop.f32.mrf.mxu0
      %v3367 = vpop.f32.mrf.mxu0
      %v3368 = vadd.f32 0.0, %v3367
      %v3369 = vpop.f32.mrf.mxu0
      %3370 = vmatprep.mubr.bf16.mxu0 0
      %3371 = vmatmul.mubr.bf16.gmra.mxu0 %v3286
      %v3372 = vpop.f32.mrf.mxu0
      %v3373 = vadd.f32 0.0, %v3372
      %v3374 = vpop.f32.mrf.mxu0
      %v3375 = vpop.f32.mrf.mxu0
      %v3376 = vadd.f32 0.0, %v3375
      %v3377 = vpop.f32.mrf.mxu0
      %3378 = vmatprep.mubr.bf16.mxu0 0
      %3379 = vmatmul.mubr.bf16.gmra.mxu0 %v3289
      %v3380 = vpop.f32.mrf.mxu0
      %v3381 = vadd.f32 0.0, %v3380
      %v3382 = vpop.f32.mrf.mxu0
      %v3383 = vpop.f32.mrf.mxu0
      %v3384 = vadd.f32 0.0, %v3383
      %v3385 = vpop.f32.mrf.mxu0
      %3386 = vmatprep.mubr.bf16.mxu0 0
      %3387 = vmatmul.mubr.bf16.gmra.mxu0 %v3292
      %v3388 = vpop.f32.mrf.mxu0
      %v3389 = vadd.f32 0.0, %v3388
      %v3390 = vpop.f32.mrf.mxu0
      %v3391 = vpop.f32.mrf.mxu0
      %v3392 = vadd.f32 0.0, %v3391
      %v3393 = vpop.f32.mrf.mxu0
      %3394 = vmatprep.mubr.bf16.mxu0 0
      %3395 = vmatmul.mubr.bf16.gmra.mxu0 %v3295
      %v3396 = vpop.f32.mrf.mxu0
      %v3397 = vadd.f32 0.0, %v3396
      %v3398 = vpop.f32.mrf.mxu0
      %v3399 = vpop.f32.mrf.mxu0
      %v3400 = vadd.f32 0.0, %v3399
      %v3401 = vpop.f32.mrf.mxu0
      %3402 = vmatprep.mubr.bf16.mxu0 0
      %3403 = vmatmul.mubr.bf16.gmra.mxu0 %v3298
      %v3404 = vpop.f32.mrf.mxu0
      %v3405 = vadd.f32 0.0, %v3404
      %v3406 = vpop.f32.mrf.mxu0
      %v3407 = vpop.f32.mrf.mxu0
      %v3408 = vadd.f32 0.0, %v3407
      %v3409 = vpop.f32.mrf.mxu0
      %3410 = vmatprep.mubr.bf16.mxu0 0
      %3411 = vmatmul.mubr.bf16.gmra.mxu0 %v3301
      %v3412 = vpop.f32.mrf.mxu0
      %v3413 = vadd.f32 0.0, %v3412
      %v3414 = vpop.f32.mrf.mxu0
      %v3415 = vpop.f32.mrf.mxu0
      %v3416 = vadd.f32 0.0, %v3415
      %v3417 = vpop.f32.mrf.mxu0
      %3418 = vmatprep.mubr.bf16.mxu0 0
      %3419 = vmatmul.mubr.bf16.gmra.mxu0 %v3304
      %v3420 = vpop.f32.mrf.mxu0
      %v3421 = vadd.f32 0.0, %v3420
      %v3422 = vpop.f32.mrf.mxu0
      %v3423 = vpop.f32.mrf.mxu0
      %v3424 = vpop.f32.mrf.mxu0
      %3425 = vdwg.mxu0
      %v3426 = vadd.f32 %v3203, %v3341
      %v3427 = vadd.f32 %v3204, %v3344
      %v3428 = vadd.f32 %v3205, %v3349
      %v3429 = vadd.f32 %v3206, %v3352
      %v3430 = vadd.f32 %v3207, %v3357
      %v3431 = vadd.f32 %v3208, %v3360
      %v3432 = vadd.f32 %v3209, %v3365
      %v3433 = vadd.f32 %v3210, %v3368
      %v3434 = vadd.f32 %v3211, %v3373
      %v3435 = vadd.f32 %v3212, %v3376
      %v3436 = vadd.f32 %v3213, %v3381
      %v3437 = vadd.f32 %v3214, %v3384
      %v3438 = vadd.f32 %v3215, %v3389
      %v3439 = vadd.f32 %v3216, %v3392
      %v3440 = vadd.f32 %v3217, %v3397
      %v3441 = vadd.f32 %v3218, %v3400
      %v3442 = vadd.f32 %v3219, %v3405
      %v3443 = vadd.f32 %v3220, %v3408
      %v3444 = vadd.f32 %v3221, %v3413
      %v3445 = vadd.f32 %v3222, %v3416
      %v3446 = vadd.f32 %v3223, %v3421
      %vm3447 = vcmask 523264
      %3448 = vst.msk [vmem:[#allocation3] sm:$0xff] %vm3447, %v3426
      %3449 = vst.msk [vmem:[#allocation3 + $0x8] sm:$0xff] %vm3447, %v3427
      %3450 = vst.msk [vmem:[#allocation3 + $0x10] sm:$0xff] %vm3447, %v3428
      %3451 = vst.msk [vmem:[#allocation3 + $0x18] sm:$0xff] %vm3447, %v3429
      %3452 = vst.msk [vmem:[#allocation3 + $0x20] sm:$0xff] %vm3447, %v3430
      %3453 = vst.msk [vmem:[#allocation3 + $0x28] sm:$0xff] %vm3447, %v3431
      %3454 = vst.msk [vmem:[#allocation3 + $0x30] sm:$0xff] %vm3447, %v3432
      %3455 = vst.msk [vmem:[#allocation3 + $0x38] sm:$0xff] %vm3447, %v3433
      %3456 = vst.msk [vmem:[#allocation3 + $0x40] sm:$0xff] %vm3447, %v3434
      %3457 = vst.msk [vmem:[#allocation3 + $0x48] sm:$0xff] %vm3447, %v3435
      %3458 = vst.msk [vmem:[#allocation3 + $0x50] sm:$0xff] %vm3447, %v3436
      %3459 = vst.msk [vmem:[#allocation3 + $0x58] sm:$0xff] %vm3447, %v3437
      %3460 = vst.msk [vmem:[#allocation3 + $0x60] sm:$0xff] %vm3447, %v3438
      %3461 = vst.msk [vmem:[#allocation3 + $0x68] sm:$0xff] %vm3447, %v3439
      %3462 = vst.msk [vmem:[#allocation3 + $0x70] sm:$0xff] %vm3447, %v3440
      %3463 = vst.msk [vmem:[#allocation3 + $0x78] sm:$0xff] %vm3447, %v3441
      %3464 = vst.msk [vmem:[#allocation3 + $0x80] sm:$0xff] %vm3447, %v3442
      %3465 = vst.msk [vmem:[#allocation3 + $0x88] sm:$0xff] %vm3447, %v3443
      %3466 = vst.msk [vmem:[#allocation3 + $0x90] sm:$0xff] %vm3447, %v3444
      %3467 = vst.msk [vmem:[#allocation3 + $0x98] sm:$0xff] %vm3447, %v3445
      %3468 = vst.msk [vmem:[#allocation3 + $0xa0] sm:$0xff] %vm3447, %v3446
      %v3469 = vld [vmem:[#allocation3] sm:$0xff]
      %v3470 = vld [vmem:[#allocation3 + $0x8] sm:$0xff]
      %v3471 = vld [vmem:[#allocation3 + $0x10] sm:$0xff]
      %v3472 = vld [vmem:[#allocation3 + $0x18] sm:$0xff]
      %v3473 = vld [vmem:[#allocation3 + $0x20] sm:$0xff]
      %v3474 = vld [vmem:[#allocation3 + $0x28] sm:$0xff]
      %v3475 = vld [vmem:[#allocation3 + $0x30] sm:$0xff]
      %v3476 = vld [vmem:[#allocation3 + $0x38] sm:$0xff]
      %v3477 = vld [vmem:[#allocation3 + $0x40] sm:$0xff]
      %v3478 = vld [vmem:[#allocation3 + $0x48] sm:$0xff]
      %v3479 = vld [vmem:[#allocation3 + $0x50] sm:$0xff]
      %v3480 = vld [vmem:[#allocation3 + $0x58] sm:$0xff]
      %v3481 = vld [vmem:[#allocation3 + $0x60] sm:$0xff]
      %v3482 = vld [vmem:[#allocation3 + $0x68] sm:$0xff]
      %v3483 = vld [vmem:[#allocation3 + $0x70] sm:$0xff]
      %v3484 = vld [vmem:[#allocation3 + $0x78] sm:$0xff]
      %v3485 = vld [vmem:[#allocation3 + $0x80] sm:$0xff]
      %v3486 = vld [vmem:[#allocation3 + $0x88] sm:$0xff]
      %v3487 = vld [vmem:[#allocation3 + $0x90] sm:$0x7f]
      %v3488 = vld [vmem:[#allocation3 + $0x1] sm:$0xff]
      %v3489 = vld [vmem:[#allocation3 + $0x9] sm:$0xff]
      %v3490 = vld [vmem:[#allocation3 + $0x11] sm:$0xff]
      %v3491 = vld [vmem:[#allocation3 + $0x19] sm:$0xff]
      %v3492 = vld [vmem:[#allocation3 + $0x21] sm:$0xff]
      %v3493 = vld [vmem:[#allocation3 + $0x29] sm:$0xff]
      %v3494 = vld [vmem:[#allocation3 + $0x31] sm:$0xff]
      %v3495 = vld [vmem:[#allocation3 + $0x39] sm:$0xff]
      %v3496 = vld [vmem:[#allocation3 + $0x41] sm:$0xff]
      %v3497 = vld [vmem:[#allocation3 + $0x49] sm:$0xff]
      %v3498 = vld [vmem:[#allocation3 + $0x51] sm:$0xff]
      %v3499 = vld [vmem:[#allocation3 + $0x59] sm:$0xff]
      %v3500 = vld [vmem:[#allocation3 + $0x61] sm:$0xff]
      %v3501 = vld [vmem:[#allocation3 + $0x69] sm:$0xff]
      %v3502 = vld [vmem:[#allocation3 + $0x71] sm:$0xff]
      %v3503 = vld [vmem:[#allocation3 + $0x79] sm:$0xff]
      %v3504 = vld [vmem:[#allocation3 + $0x81] sm:$0xff]
      %v3505 = vld [vmem:[#allocation3 + $0x89] sm:$0xff]
      %v3506 = vld [vmem:[#allocation3 + $0x91] sm:$0x7f]
      %v3507 = vmax.f32 %v3469, %v3488
      %v3508 = vmax.f32 %v3470, %v3489
      %v3509 = vmax.f32 %v3471, %v3490
      %v3510 = vmax.f32 %v3472, %v3491
      %v3511 = vmax.f32 %v3473, %v3492
      %v3512 = vmax.f32 %v3474, %v3493
      %v3513 = vmax.f32 %v3475, %v3494
      %v3514 = vmax.f32 %v3476, %v3495
      %v3515 = vmax.f32 %v3477, %v3496
      %v3516 = vmax.f32 %v3478, %v3497
      %v3517 = vmax.f32 %v3479, %v3498
      %v3518 = vmax.f32 %v3480, %v3499
      %v3519 = vmax.f32 %v3481, %v3500
      %v3520 = vmax.f32 %v3482, %v3501
      %v3521 = vmax.f32 %v3483, %v3502
      %v3522 = vmax.f32 %v3484, %v3503
      %v3523 = vmax.f32 %v3485, %v3504
      %v3524 = vmax.f32 %v3486, %v3505
      %v3525 = vmax.f32 %v3487, %v3506
      %v3526 = vld [vmem:[#allocation3 + $0xe] sm:$0xff]
      %v3527 = vld [vmem:[#allocation3 + $0x16] sm:$0xff]
      %v3528 = vld [vmem:[#allocation3 + $0x1e] sm:$0xff]
      %v3529 = vld [vmem:[#allocation3 + $0x26] sm:$0xff]
      %v3530 = vld [vmem:[#allocation3 + $0x2e] sm:$0xff]
      %v3531 = vld [vmem:[#allocation3 + $0x36] sm:$0xff]
      %v3532 = vld [vmem:[#allocation3 + $0x3e] sm:$0xff]
      %v3533 = vld [vmem:[#allocation3 + $0x46] sm:$0xff]
      %v3534 = vld [vmem:[#allocation3 + $0x4e] sm:$0xff]
      %v3535 = vld [vmem:[#allocation3 + $0x56] sm:$0xff]
      %v3536 = vld [vmem:[#allocation3 + $0x5e] sm:$0xff]
      %v3537 = vld [vmem:[#allocation3 + $0x66] sm:$0xff]
      %v3538 = vld [vmem:[#allocation3 + $0x6e] sm:$0xff]
      %v3539 = vld [vmem:[#allocation3 + $0x76] sm:$0xff]
      %v3540 = vld [vmem:[#allocation3 + $0x7e] sm:$0xff]
      %v3541 = vld [vmem:[#allocation3 + $0x86] sm:$0xff]
      %v3542 = vld [vmem:[#allocation3 + $0x8e] sm:$0xff]
      %v3543 = vld [vmem:[#allocation3 + $0x96] sm:$0xff]
      %v3544 = vld [vmem:[#allocation3 + $0x9e] sm:$0x7f]
      %v3545 = vld [vmem:[#allocation3 + $0xf] sm:$0xff]
      %v3546 = vld [vmem:[#allocation3 + $0x17] sm:$0xff]
      %v3547 = vld [vmem:[#allocation3 + $0x1f] sm:$0xff]
      %v3548 = vld [vmem:[#allocation3 + $0x27] sm:$0xff]
      %v3549 = vld [vmem:[#allocation3 + $0x2f] sm:$0xff]
      %v3550 = vld [vmem:[#allocation3 + $0x37] sm:$0xff]
      %v3551 = vld [vmem:[#allocation3 + $0x3f] sm:$0xff]
      %v3552 = vld [vmem:[#allocation3 + $0x47] sm:$0xff]
      %v3553 = vld [vmem:[#allocation3 + $0x4f] sm:$0xff]
      %v3554 = vld [vmem:[#allocation3 + $0x57] sm:$0xff]
      %v3555 = vld [vmem:[#allocation3 + $0x5f] sm:$0xff]
      %v3556 = vld [vmem:[#allocation3 + $0x67] sm:$0xff]
      %v3557 = vld [vmem:[#allocation3 + $0x6f] sm:$0xff]
      %v3558 = vld [vmem:[#allocation3 + $0x77] sm:$0xff]
      %v3559 = vld [vmem:[#allocation3 + $0x7f] sm:$0xff]
      %v3560 = vld [vmem:[#allocation3 + $0x87] sm:$0xff]
      %v3561 = vld [vmem:[#allocation3 + $0x8f] sm:$0xff]
      %v3562 = vld [vmem:[#allocation3 + $0x97] sm:$0xff]
      %v3563 = vld [vmem:[#allocation3 + $0x9f] sm:$0x7f]
      %v3564 = vmax.f32 %v3526, %v3545
      %v3565 = vmax.f32 %v3527, %v3546
      %v3566 = vmax.f32 %v3528, %v3547
      %v3567 = vmax.f32 %v3529, %v3548
      %v3568 = vmax.f32 %v3530, %v3549
      %v3569 = vmax.f32 %v3531, %v3550
      %v3570 = vmax.f32 %v3532, %v3551
      %v3571 = vmax.f32 %v3533, %v3552
      %v3572 = vmax.f32 %v3534, %v3553
      %v3573 = vmax.f32 %v3535, %v3554
      %v3574 = vmax.f32 %v3536, %v3555
      %v3575 = vmax.f32 %v3537, %v3556
      %v3576 = vmax.f32 %v3538, %v3557
      %v3577 = vmax.f32 %v3539, %v3558
      %v3578 = vmax.f32 %v3540, %v3559
      %v3579 = vmax.f32 %v3541, %v3560
      %v3580 = vmax.f32 %v3542, %v3561
      %v3581 = vmax.f32 %v3543, %v3562
      %v3582 = vmax.f32 %v3544, %v3563
      %v3583 = vmax.f32 %v3507, %v3564
      %v3584 = vmax.f32 %v3508, %v3565
      %v3585 = vmax.f32 %v3509, %v3566
      %v3586 = vmax.f32 %v3510, %v3567
      %v3587 = vmax.f32 %v3511, %v3568
      %v3588 = vmax.f32 %v3512, %v3569
      %v3589 = vmax.f32 %v3513, %v3570
      %v3590 = vmax.f32 %v3514, %v3571
      %v3591 = vmax.f32 %v3515, %v3572
      %v3592 = vmax.f32 %v3516, %v3573
      %v3593 = vmax.f32 %v3517, %v3574
      %v3594 = vmax.f32 %v3518, %v3575
      %v3595 = vmax.f32 %v3519, %v3576
      %v3596 = vmax.f32 %v3520, %v3577
      %v3597 = vmax.f32 %v3521, %v3578
      %v3598 = vmax.f32 %v3522, %v3579
      %v3599 = vmax.f32 %v3523, %v3580
      %v3600 = vmax.f32 %v3524, %v3581
      %v3601 = vmax.f32 %v3525, %v3582
      %v3602 = vld [vmem:[%s5] sm:$0xff]
      %v3603 = vld [vmem:[%s5 + $0x8] sm:$0xff]
      %v3604 = vld [vmem:[%s5 + $0x10] sm:$0xff]
      %v3605 = vld [vmem:[%s5 + $0x18] sm:$0xff]
      %v3606 = vld [vmem:[%s5 + $0x20] sm:$0xff]
      %v3607 = vld [vmem:[%s5 + $0x28] sm:$0xff]
      %v3608 = vld [vmem:[%s5 + $0x30] sm:$0xff]
      %v3609 = vld [vmem:[%s5 + $0x38] sm:$0xff]
      %v3610 = vld [vmem:[%s5 + $0x40] sm:$0xf]
      %v3611 = vld [vmem:[%s5 + $0x48] sm:$0xf]
      %v3612 = vld [vmem:[%s4] sm:$0x1]
      %v3614 = vlaneseq
      %v3615 = vshrl.u32 %v3614, 7
      %v3616 = vsub.s32 0, %v3615
      %v3617 = vrot.slane %v3612, %v3616
      %vm3619 = vcmask 187392
      %v3621 = vsel %vm3619, %v3603, 0
      %v3624 = vsel %vm3619, %v3605, 0
      %v3627 = vsel %vm3619, %v3607, 0
      %v3630 = vsel %vm3619, %v3609, 0
      %v3633 = vsel %vm3619, %v3611, 0
      %vm3635 = vcmask 1046528
      %v3637 = vsel %vm3635, %v3601, 0
      %3639 = vmatprep.subr.mxu0 0.0
      %3640 = vmatpush1.msra.mxu0 %v3598
      %3641 = vmatprep.subr.mxu0 0.0
      %3642 = vmatpush1.msra.mxu0 %v3597
      %3643 = vmatprep.subr.mxu0 0.0
      %3644 = vmatpush1.msra.mxu0 %v3596
      %3645 = vmatprep.subr.mxu0 0.0
      %3646 = vmatpush1.msra.mxu0 %v3595
      %3647 = vmatprep.subr.mxu0 0.0
      %3648 = vmatpush1.msra.mxu0 %v3594
      %3649 = vmatprep.subr.mxu0 0.0
      %3650 = vmatpush1.msra.mxu0 %v3593
      %3651 = vmatprep.subr.mxu0 0.0
      %3652 = vmatpush1.msra.mxu0 %v3592
      %3653 = vmatprep.subr.mxu0 0.0
      %3654 = vmatpush1.msra.mxu0 %v3591
      %3655 = vmatprep.subr.mxu0 0.0
      %3656 = vmatpush1.msra.mxu0 %v3590
      %3657 = vmatprep.subr.mxu0 0.0
      %3658 = vmatpush1.msra.mxu0 %v3589
      %3659 = vmatprep.subr.mxu0 0.0
      %3660 = vmatpush1.msra.mxu0 %v3588
      %3661 = vmatprep.subr.mxu0 0.0
      %3662 = vmatpush1.msra.mxu0 %v3587
      %3663 = vmatprep.subr.mxu0 0.0
      %3664 = vmatpush1.msra.mxu0 %v3586
      %3665 = vmatprep.subr.mxu0 0.0
      %3666 = vmatpush1.msra.mxu0 %v3585
      %3667 = vmatprep.subr.mxu0 0.0
      %3668 = vmatpush1.msra.mxu0 %v3584
      %3669 = vmatprep.subr.mxu0 0.0
      %3670 = vmatpush1.msra.mxu0 %v3583
      %3671 = vmatprep.subr.mxu0 0.0
      %3672 = vmatpush2.msra.mxu0 0.0
      %3673 = vmatprep.subr.mxu0 0.0
      %3674 = vmatpush2.msra.mxu0 0.0
      %3675 = vmatprep.subr.mxu0 0.0
      %3676 = vmatpush2.msra.mxu0 0.0
      %3677 = vmatprep.subr.mxu0 0.0
      %3678 = vmatpush2.msra.mxu0 0.0
      %3679 = vmatprep.subr.mxu0 0.0
      %3680 = vmatpush2.msra.mxu0 0.0
      %3681 = vmatprep.subr.mxu0 0.0
      %3682 = vmatpush2.msra.mxu0 0.0
      %3683 = vmatprep.subr.mxu0 0.0
      %3684 = vmatpush2.msra.mxu0 0.0
      %3685 = vmatprep.subr.mxu0 0.0
      %3686 = vmatpush2.msra.mxu0 0.0
      %3687 = vmatprep.subr.mxu0 0.0
      %3688 = vmatpush2.msra.mxu0 0.0
      %3689 = vmatprep.subr.mxu0 0.0
      %3690 = vmatpush2.msra.mxu0 0.0
      %3691 = vmatprep.subr.mxu0 0.0
      %3692 = vmatpush2.msra.mxu0 0.0
      %3693 = vmatprep.subr.mxu0 0.0
      %3694 = vmatpush2.msra.mxu0 0.0
      %3695 = vmatprep.subr.mxu0 0.0
      %3696 = vmatpush2.msra.mxu0 0.0
      %3697 = vmatprep.subr.mxu0 0.0
      %3698 = vmatpush2.msra.mxu0 %v3637
      %3699 = vmatprep.subr.mxu0 0.0
      %3700 = vmatpush2.msra.mxu0 %v3600
      %3701 = vmatprep.subr.mxu0 0.0
      %3702 = vmatpush2.msra.mxu0 %v3599
      %3703 = vmatprep.mubr.f32.mxu0 %v3621
      %3704 = vmatmul.mubr.f32.gmra.mxu0 %v3602
      %v3705 = vpop.f32.mrf.mxu0
      %v3706 = vadd.f32 %v3617, %v3705
      %v3707 = vpop.f32.mrf.mxu0
      %3708 = vmatprep.mubr.f32.mxu0 %v3624
      %3709 = vmatmul.mubr.f32.gmra.mxu0 %v3604
      %v3710 = vpop.f32.mrf.mxu0
      %v3711 = vadd.f32 %v3617, %v3710
      %v3712 = vpop.f32.mrf.mxu0
      %3713 = vmatprep.mubr.f32.mxu0 %v3627
      %3714 = vmatmul.mubr.f32.gmra.mxu0 %v3606
      %v3715 = vpop.f32.mrf.mxu0
      %v3716 = vadd.f32 %v3617, %v3715
      %v3717 = vpop.f32.mrf.mxu0
      %3718 = vmatprep.mubr.f32.mxu0 %v3630
      %3719 = vmatmul.mubr.f32.gmra.mxu0 %v3608
      %v3720 = vpop.f32.mrf.mxu0
      %v3721 = vadd.f32 %v3617, %v3720
      %v3722 = vpop.f32.mrf.mxu0
      %3723 = vmatprep.mubr.f32.mxu0 %v3633
      %3724 = vmatmul.mubr.f32.gmra.mxu0 %v3610
      %v3725 = vpop.f32.mrf.mxu0
      %v3726 = vadd.f32 %v3617, %v3725
      %v3727 = vpop.f32.mrf.mxu0
      %3728 = vdwg.mxu0
      %v3729 = vmax.f32 %v3706, 0.0
      %v3730 = vmax.f32 %v3711, 0.0
      %v3731 = vmax.f32 %v3716, 0.0
      %v3732 = vmax.f32 %v3721, 0.0
      %v3733 = vmax.f32 %v3726, 0.0
      %3734 = vst.msk [vmem:[%s251] sm:$0xff] %vm3447, %v3729
      %3735 = vst.msk [vmem:[%s251 + $0x8] sm:$0xff] %vm3447, %v3730
      %3736 = vst.msk [vmem:[%s251 + $0x10] sm:$0xff] %vm3447, %v3731
      %3737 = vst.msk [vmem:[%s251 + $0x18] sm:$0xff] %vm3447, %v3732
      %vm3738 = vcmask 519168
      %3739 = vst.msk [vmem:[%s251 + $0x20] sm:$0xf] %vm3738, %v3733
      %p3740 = scmp.lt.s32.totalorder %s17, 1
      %s3741 = scalar_select %p3740, %s17, 1
      %s3742 = smul.addr %s3741, 5
      %s3743 = smul.addr %s3742, 8
      %s3744 = scalar_lea.vmem %s6, %s3743
      // Predicated region
      $region45: #{fashion_cnn_forward.2} parent=43 // pred_check
        %p3745 = pneg %p166
      $region46: #{fashion_cnn_forward.2} parent=43 // pred_check_branch
        %3747 = sbr.rel (%p3745) target = $region48
      $region47: #{fashion_cnn_forward.2} parent=43 // pred_region
        _
      $region48: #{fashion_cnn_forward.2} parent=43 // pred_fallthru
        _
    $region44: #{fashion_cnn_forward.2} parent=5 // pred_fallthru
      _
    %p3748 = scmp.le.s32.totalorder 2, %s12
    // Predicated region
    $region49: #{fashion_cnn_forward.2} parent=5 // pred_check
      %p3749 = pneg %p3748
    $region50: #{fashion_cnn_forward.2} parent=5 // pred_check_branch
      %3751 = sbr.rel (%p3749) target = $region52
    $region51: #{fashion_cnn_forward.2} parent=5 // pred_region
      %s3752 = ssub.s32 %s12, 2
      // Predicated region
      $region53: #{fashion_cnn_forward.2} parent=51 // pred_check
        %p3753 = pneg %p172
      $region54: #{fashion_cnn_forward.2} parent=51 // pred_check_branch
        %3755 = sbr.rel (%p3753) target = $region56
      $region55: #{fashion_cnn_forward.2} parent=51 // pred_region
        %p3756 = scmp.lt.s32.totalorder %s18, 1
        %s3757 = scalar_select %p3756, %s18, 1
        %s3758 = smul.addr %s3757, 5
        %s3759 = smul.addr %s3758, 8
        %s3760 = scalar_lea.vmem %s6, %s3759
      $region56: #{fashion_cnn_forward.2} parent=51 // pred_fallthru
        _
    $region52: #{fashion_cnn_forward.2} parent=5 // pred_fallthru
      _
  $region6: #{fashion_cnn_forward.2} parent=0 // loop_footer
    %s16 = sadd.s32 1, %s12
  $region7: #{fashion_cnn_forward.2} parent=0 // loop_footer_branch
    %11 = sbr.rel target = $region3
  $region8: #{fashion_cnn_forward.2} parent=0 // loop_exit
    _

</llo_original>
